<compile_context>
chip_gen: v7x
topology: tpu7x:2x2x1
jax: 0.10.0
libtpu: 0.0.40
codegen_flags: <defaults>
</compile_context>

<pallas_src>
import jax
import jax.numpy as jnp
from jax.experimental import pallas as pl
from jax.experimental.pallas import tpu as pltpu


# ------------------------------ fused kernel --------------------------------


def _lenet5_kernel(x_ref,
                   w1_ref, b1_ref, w2_ref, b2_ref, w3_ref, b3_ref,
                   p1re_ref, p1ro_ref, p1ce_ref, p1co_ref,
                   p2re_ref, p2ro_ref, p2ce_ref, p2co_ref,
                   fc1w_ref, fc1b_ref, fc2w_ref, fc2b_ref,
                   out_ref):
    """Whole LeNet-5 forward for a block of TB images; all on-chip."""
    f32 = jnp.float32
    tb = x_ref.shape[0]

    def conv_relu(a, w_ref, b_ref, ho):
        # a: (Hin, Win*Cin); w_ref: (k, Win*Cin, Wo*Cout) block-Toeplitz weights.
        acc = jnp.dot(a[0:ho, :], w_ref[0], preferred_element_type=f32)
        for di in range(1, w_ref.shape[0]):
            acc = acc + jnp.dot(a[di:di + ho, :], w_ref[di],
                                preferred_element_type=f32)
        return jnp.maximum(acc + b_ref[...], 0.0)

    def maxpool2x2(a, re_ref, ro_ref, ce_ref, co_ref):
        # Row / channel-blocked-column selection via 0/1 matmuls on the MXU.
        rows = jnp.maximum(
            jnp.dot(re_ref[...], a, preferred_element_type=f32),
            jnp.dot(ro_ref[...], a, preferred_element_type=f32))
        return jnp.maximum(
            jnp.dot(rows, ce_ref[...], preferred_element_type=f32),
            jnp.dot(rows, co_ref[...], preferred_element_type=f32))

    # Unrolled over the image block: the per-image chains are independent, so
    # the scheduler interleaves their matmuls to hide MXU latency.
    for i in range(tb):
        x = x_ref[i]                                                 # (32, 32)
        a = conv_relu(x, w1_ref, b1_ref, 28)                         # (28, 168)
        a = maxpool2x2(a, p1re_ref, p1ro_ref, p1ce_ref, p1co_ref)    # (14, 84)
        a = conv_relu(a, w2_ref, b2_ref, 10)                         # (10, 160)
        a = maxpool2x2(a, p2re_ref, p2ro_ref, p2ce_ref, p2co_ref)    # (5, 80)
        a = conv_relu(a, w3_ref, b3_ref, 1)                          # (1, 120)
        h = jnp.maximum(
            jnp.dot(a, fc1w_ref[...], preferred_element_type=f32)
            + fc1b_ref[...], 0.0)                                    # (1, 84)
        logits = (jnp.dot(h, fc2w_ref[...], preferred_element_type=f32)
                  + fc2b_ref[...])                                   # (1, 128)
        out_ref[i] = logits


# --------------------------- parameter repacking -----------------------------


def _conv_toeplitz_weights(w, win):
    """PyTorch conv weight (Cout, Cin, k, k) -> (k, Win*Cin, Wo*Cout).

    For input laid out as (Hin, Win*Cin) (lane = w*Cin + ci), the conv output
    (Ho, Wo*Cout) (lane = w'*Cout + co) equals  sum_di A[di:di+Ho, :] @ out[di].
    """
    cout, cin, k, _ = w.shape
    wo = win - k + 1
    wv = jnp.arange(win)[:, None]                     # input column position
    wp = jnp.arange(wo)[None, :]                      # output column position
    dj = wv - wp                                      # (win, wo)
    valid = ((dj >= 0) & (dj < k)).astype(w.dtype)
    dj_clipped = jnp.clip(dj, 0, k - 1)
    w_perm = jnp.transpose(w, (2, 3, 1, 0))           # (k, k, cin, cout)
    big = w_perm[:, dj_clipped, :, :]                 # (k, win, wo, cin, cout)
    big = big * valid[None, :, :, None, None]
    big = jnp.transpose(big, (0, 1, 3, 2, 4))         # (k, win, cin, wo, cout)
    return big.reshape(k, win * cin, wo * cout)


def _pool_selectors(h, w, c, dtype=jnp.float32):
    """0/1 matrices implementing 2x2/stride-2 max pool on an (H, W*C) layout."""
    hp, wp = h // 2, w // 2
    re = (jnp.arange(h)[None, :] == 2 * jnp.arange(hp)[:, None]).astype(dtype)
    ro = (jnp.arange(h)[None, :] == 2 * jnp.arange(hp)[:, None] + 1).astype(dtype)
    cols_e = (jnp.arange(w)[:, None] == 2 * jnp.arange(wp)[None, :]).astype(dtype)
    cols_o = (jnp.arange(w)[:, None] == 2 * jnp.arange(wp)[None, :] + 1).astype(dtype)
    eye_c = jnp.eye(c, dtype=dtype)
    ce = jnp.kron(cols_e, eye_c)                      # (w*c, wp*c)
    co = jnp.kron(cols_o, eye_c)
    return re, ro, ce, co


def prepare_params(params):
    """One-time repack of PyTorch-layout params into the kernel's layouts."""
    f32 = jnp.float32
    fc2_w = jnp.zeros((84, 128), f32).at[:, :10].set(params["fc2_w"].T)
    fc2_b = jnp.zeros((1, 128), f32).at[0, :10].set(params["fc2_b"])
    return {
        "w1": _conv_toeplitz_weights(params["conv1_w"], 32),    # (5, 32, 168)
        "b1": jnp.tile(params["conv1_b"], 28).reshape(1, 168),
        "w2": _conv_toeplitz_weights(params["conv2_w"], 14),    # (5, 84, 160)
        "b2": jnp.tile(params["conv2_b"], 10).reshape(1, 160),
        "w3": _conv_toeplitz_weights(params["conv3_w"], 5),     # (5, 80, 120)
        "b3": params["conv3_b"].reshape(1, 120),
        "p1": _pool_selectors(28, 28, 6),
        "p2": _pool_selectors(10, 10, 16),
        "fc1w": params["fc1_w"].T,                              # (120, 84)
        "fc1b": params["fc1_b"].reshape(1, 84),
        "fc2w": fc2_w,                                          # (84, 128) padded
        "fc2b": fc2_b,                                          # (1, 128) padded
    }


# --------------------------------- forward ----------------------------------


def _whole_array_spec(arr):
    ndim = arr.ndim

    def index_map(b):
        return (0,) * ndim   # constant block index -> DMA'd once, stays in VMEM

    return pl.BlockSpec(arr.shape, index_map)


@jax.jit
def lenet5_forward(packed, img):
    n = img.shape[0]
    x = img.astype(jnp.float32).reshape(n, 28, 28)
    x = jnp.pad(x, ((0, 0), (2, 2), (2, 2)))          # conv1 padding=2 (zeros)

    # Process TB images per grid step (amortizes per-step overhead, overlaps
    # the independent per-image matmul chains inside one step).
    tb = min(8, n)
    n_pad = ((n + tb - 1) // tb) * tb
    if n_pad != n:
        x = jnp.pad(x, ((0, n_pad - n), (0, 0), (0, 0)))

    weights = (
        packed["w1"], packed["b1"], packed["w2"], packed["b2"],
        packed["w3"], packed["b3"],
        *packed["p1"], *packed["p2"],
        packed["fc1w"], packed["fc1b"], packed["fc2w"], packed["fc2b"],
    )

    out = pl.pallas_call(
        _lenet5_kernel,
        out_shape=jax.ShapeDtypeStruct((n_pad, 1, 128), jnp.float32),
        grid=(n_pad // tb,),
        in_specs=[pl.BlockSpec((tb, 32, 32), lambda b: (b, 0, 0))]
                 + [_whole_array_spec(a) for a in weights],
        out_specs=pl.BlockSpec((tb, 1, 128), lambda b: (b, 0, 0)),
        compiler_params=pltpu.CompilerParams(
            dimension_semantics=("parallel",)),
    )(x, *weights)
    return out[:n, 0, :10]


# --------------------------- init + pure-JAX reference -----------------------


def init_params(key):
    """Deterministic PyTorch-style uniform(-1/sqrt(fan_in), 1/sqrt(fan_in)) init."""
    def uni(k, shape, fan_in):
        bound = 1.0 / jnp.sqrt(float(fan_in))
        return jax.random.uniform(k, shape, jnp.float32, -bound, bound)

    ks = jax.random.split(key, 10)
    return {
        "conv1_w": uni(ks[0], (6, 1, 5, 5), 1 * 5 * 5),
        "conv1_b": uni(ks[1], (6,), 1 * 5 * 5),
        "conv2_w": uni(ks[2], (16, 6, 5, 5), 6 * 5 * 5),
        "conv2_b": uni(ks[3], (16,), 6 * 5 * 5),
        "conv3_w": uni(ks[4], (120, 16, 5, 5), 16 * 5 * 5),
        "conv3_b": uni(ks[5], (120,), 16 * 5 * 5),
        "fc1_w": uni(ks[6], (84, 120), 120),
        "fc1_b": uni(ks[7], (84,), 120),
        "fc2_w": uni(ks[8], (10, 84), 84),
        "fc2_b": uni(ks[9], (10,), 84),
    }


def _reference_forward(params, img):
    x = img.astype(jnp.float32)

    def conv(x, w, b, pad):
        y = jax.lax.conv_general_dilated(
            x, w, window_strides=(1, 1),
            padding=[(pad, pad), (pad, pad)],
            dimension_numbers=("NCHW", "OIHW", "NCHW"))
        return jax.nn.relu(y + b[None, :, None, None])

    def pool(x):
        return jax.lax.reduce_window(x, -jnp.inf, jax.lax.max,
                                     (1, 1, 2, 2), (1, 1, 2, 2), "VALID")

    x = pool(conv(x, params["conv1_w"], params["conv1_b"], 2))
    x = pool(conv(x, params["conv2_w"], params["conv2_b"], 0))
    x = conv(x, params["conv3_w"], params["conv3_b"], 0)
    x = x.reshape(x.shape[0], -1)
    x = jax.nn.relu(x @ params["fc1_w"].T + params["fc1_b"])
    return x @ params["fc2_w"].T + params["fc2_b"]


if __name__ == "__main__":
    key = jax.random.PRNGKey(0)
    pkey, xkey = jax.random.split(key)
    params = init_params(pkey)
    packed = prepare_params(params)

    # LeNet-5 expects 28x28 single-channel images (NCHW). Small batch = 2.
    img = jax.random.normal(xkey, (2, 1, 28, 28), jnp.float32)
    logits = lenet5_forward(packed, img)
    jax.block_until_ready(logits)

    assert logits.shape == (2, 10) and logits.dtype == jnp.float32
    ref = _reference_forward(params, img)
    max_err = float(jnp.max(jnp.abs(logits - ref)))
    assert max_err < 5e-2, f"kernel vs reference max abs err = {max_err}"
    print("KERNEL_OK")
</pallas_src>

<mosaic_0001>
module attributes {stable_mosaic.version = 11 : i64} {
  func.func @_lenet5_kernel(%arg0: i32, %arg1: memref<2x32x32xf32, #tpu.memory_space<vmem>>, %arg2: memref<5x32x168xf32, #tpu.memory_space<vmem>>, %arg3: memref<1x168xf32, #tpu.memory_space<vmem>>, %arg4: memref<5x84x160xf32, #tpu.memory_space<vmem>>, %arg5: memref<1x160xf32, #tpu.memory_space<vmem>>, %arg6: memref<5x80x120xf32, #tpu.memory_space<vmem>>, %arg7: memref<1x120xf32, #tpu.memory_space<vmem>>, %arg8: memref<14x28xf32, #tpu.memory_space<vmem>>, %arg9: memref<14x28xf32, #tpu.memory_space<vmem>>, %arg10: memref<168x84xf32, #tpu.memory_space<vmem>>, %arg11: memref<168x84xf32, #tpu.memory_space<vmem>>, %arg12: memref<5x10xf32, #tpu.memory_space<vmem>>, %arg13: memref<5x10xf32, #tpu.memory_space<vmem>>, %arg14: memref<160x80xf32, #tpu.memory_space<vmem>>, %arg15: memref<160x80xf32, #tpu.memory_space<vmem>>, %arg16: memref<120x84xf32, #tpu.memory_space<vmem>>, %arg17: memref<1x84xf32, #tpu.memory_space<vmem>>, %arg18: memref<84x128xf32, #tpu.memory_space<vmem>>, %arg19: memref<1x128xf32, #tpu.memory_space<vmem>>, %arg20: memref<2x1x128xf32, #tpu.memory_space<vmem>>) attributes {dimension_semantics = [#tpu.dimension_semantics<parallel>], iteration_bounds = array<i64: 1>, scalar_prefetch = 0 : i64, scratch_operands = 0 : i64, tpu.core_type = #tpu.core_type<tc>, window_params = [{transform_indices = @transform_0, window_bounds = array<i64: 2, 32, 32>}, {pipeline_mode = #tpu.pipeline_mode<synchronous>, transform_indices = @transform_1, window_bounds = array<i64: 5, 32, 168>}, {pipeline_mode = #tpu.pipeline_mode<synchronous>, transform_indices = @transform_2, window_bounds = array<i64: 1, 168>}, {pipeline_mode = #tpu.pipeline_mode<synchronous>, transform_indices = @transform_3, window_bounds = array<i64: 5, 84, 160>}, {pipeline_mode = #tpu.pipeline_mode<synchronous>, transform_indices = @transform_4, window_bounds = array<i64: 1, 160>}, {pipeline_mode = #tpu.pipeline_mode<synchronous>, transform_indices = @transform_5, window_bounds = array<i64: 5, 80, 120>}, {pipeline_mode = #tpu.pipeline_mode<synchronous>, transform_indices = @transform_6, window_bounds = array<i64: 1, 120>}, {pipeline_mode = #tpu.pipeline_mode<synchronous>, transform_indices = @transform_7, window_bounds = array<i64: 14, 28>}, {pipeline_mode = #tpu.pipeline_mode<synchronous>, transform_indices = @transform_8, window_bounds = array<i64: 14, 28>}, {pipeline_mode = #tpu.pipeline_mode<synchronous>, transform_indices = @transform_9, window_bounds = array<i64: 168, 84>}, {pipeline_mode = #tpu.pipeline_mode<synchronous>, transform_indices = @transform_10, window_bounds = array<i64: 168, 84>}, {pipeline_mode = #tpu.pipeline_mode<synchronous>, transform_indices = @transform_11, window_bounds = array<i64: 5, 10>}, {pipeline_mode = #tpu.pipeline_mode<synchronous>, transform_indices = @transform_12, window_bounds = array<i64: 5, 10>}, {pipeline_mode = #tpu.pipeline_mode<synchronous>, transform_indices = @transform_13, window_bounds = array<i64: 160, 80>}, {pipeline_mode = #tpu.pipeline_mode<synchronous>, transform_indices = @transform_14, window_bounds = array<i64: 160, 80>}, {pipeline_mode = #tpu.pipeline_mode<synchronous>, transform_indices = @transform_15, window_bounds = array<i64: 120, 84>}, {pipeline_mode = #tpu.pipeline_mode<synchronous>, transform_indices = @transform_16, window_bounds = array<i64: 1, 84>}, {pipeline_mode = #tpu.pipeline_mode<synchronous>, transform_indices = @transform_17, window_bounds = array<i64: 84, 128>}, {pipeline_mode = #tpu.pipeline_mode<synchronous>, transform_indices = @transform_18, window_bounds = array<i64: 1, 128>}, {transform_indices = @transform_19, window_bounds = array<i64: 2, 1, 128>}]} {
    %c0 = arith.constant 0 : index
    %c0_0 = arith.constant 0 : index
    %c0_1 = arith.constant 0 : index
    %0 = vector.load %arg1[%c0, %c0_0, %c0_1] : memref<2x32x32xf32, #tpu.memory_space<vmem>>, vector<1x32x32xf32>
    %1 = vector.shape_cast %0 : vector<1x32x32xf32> to vector<32x32xf32>
    %2 = vector.extract_strided_slice %1 {offsets = [0, 0], sizes = [28, 32], strides = [1, 1]} : vector<32x32xf32> to vector<28x32xf32>
    %c0_2 = arith.constant 0 : index
    %c0_3 = arith.constant 0 : index
    %c0_4 = arith.constant 0 : index
    %3 = vector.load %arg2[%c0_2, %c0_3, %c0_4] : memref<5x32x168xf32, #tpu.memory_space<vmem>>, vector<1x32x168xf32>
    %4 = vector.shape_cast %3 : vector<1x32x168xf32> to vector<32x168xf32>
    %cst = arith.constant dense<0.000000e+00> : vector<28x168xf32>
    %5 = tpu.matmul %2, %4, %cst {dimension_numbers = #tpu.dot_dimension_numbers<[1], [0], [0], [1], [0, 0, 1, 1], [], []>} : vector<28x32xf32>, vector<32x168xf32>, vector<28x168xf32> -> vector<28x168xf32>
    %6 = vector.extract_strided_slice %1 {offsets = [1, 0], sizes = [28, 32], strides = [1, 1]} : vector<32x32xf32> to vector<28x32xf32>
    %c1 = arith.constant 1 : index
    %c0_5 = arith.constant 0 : index
    %c0_6 = arith.constant 0 : index
    %7 = vector.load %arg2[%c1, %c0_5, %c0_6] : memref<5x32x168xf32, #tpu.memory_space<vmem>>, vector<1x32x168xf32>
    %8 = vector.shape_cast %7 : vector<1x32x168xf32> to vector<32x168xf32>
    %cst_7 = arith.constant dense<0.000000e+00> : vector<28x168xf32>
    %9 = tpu.matmul %6, %8, %cst_7 {dimension_numbers = #tpu.dot_dimension_numbers<[1], [0], [0], [1], [0, 0, 1, 1], [], []>} : vector<28x32xf32>, vector<32x168xf32>, vector<28x168xf32> -> vector<28x168xf32>
    %10 = arith.addf %5, %9 : vector<28x168xf32>
    %11 = vector.extract_strided_slice %1 {offsets = [2, 0], sizes = [28, 32], strides = [1, 1]} : vector<32x32xf32> to vector<28x32xf32>
    %c2 = arith.constant 2 : index
    %c0_8 = arith.constant 0 : index
    %c0_9 = arith.constant 0 : index
    %12 = vector.load %arg2[%c2, %c0_8, %c0_9] : memref<5x32x168xf32, #tpu.memory_space<vmem>>, vector<1x32x168xf32>
    %13 = vector.shape_cast %12 : vector<1x32x168xf32> to vector<32x168xf32>
    %cst_10 = arith.constant dense<0.000000e+00> : vector<28x168xf32>
    %14 = tpu.matmul %11, %13, %cst_10 {dimension_numbers = #tpu.dot_dimension_numbers<[1], [0], [0], [1], [0, 0, 1, 1], [], []>} : vector<28x32xf32>, vector<32x168xf32>, vector<28x168xf32> -> vector<28x168xf32>
    %15 = arith.addf %10, %14 : vector<28x168xf32>
    %16 = vector.extract_strided_slice %1 {offsets = [3, 0], sizes = [28, 32], strides = [1, 1]} : vector<32x32xf32> to vector<28x32xf32>
    %c3 = arith.constant 3 : index
    %c0_11 = arith.constant 0 : index
    %c0_12 = arith.constant 0 : index
    %17 = vector.load %arg2[%c3, %c0_11, %c0_12] : memref<5x32x168xf32, #tpu.memory_space<vmem>>, vector<1x32x168xf32>
    %18 = vector.shape_cast %17 : vector<1x32x168xf32> to vector<32x168xf32>
    %cst_13 = arith.constant dense<0.000000e+00> : vector<28x168xf32>
    %19 = tpu.matmul %16, %18, %cst_13 {dimension_numbers = #tpu.dot_dimension_numbers<[1], [0], [0], [1], [0, 0, 1, 1], [], []>} : vector<28x32xf32>, vector<32x168xf32>, vector<28x168xf32> -> vector<28x168xf32>
    %20 = arith.addf %15, %19 : vector<28x168xf32>
    %21 = vector.extract_strided_slice %1 {offsets = [4, 0], sizes = [28, 32], strides = [1, 1]} : vector<32x32xf32> to vector<28x32xf32>
    %c4 = arith.constant 4 : index
    %c0_14 = arith.constant 0 : index
    %c0_15 = arith.constant 0 : index
    %22 = vector.load %arg2[%c4, %c0_14, %c0_15] : memref<5x32x168xf32, #tpu.memory_space<vmem>>, vector<1x32x168xf32>
    %23 = vector.shape_cast %22 : vector<1x32x168xf32> to vector<32x168xf32>
    %cst_16 = arith.constant dense<0.000000e+00> : vector<28x168xf32>
    %24 = tpu.matmul %21, %23, %cst_16 {dimension_numbers = #tpu.dot_dimension_numbers<[1], [0], [0], [1], [0, 0, 1, 1], [], []>} : vector<28x32xf32>, vector<32x168xf32>, vector<28x168xf32> -> vector<28x168xf32>
    %25 = arith.addf %20, %24 : vector<28x168xf32>
    %c0_17 = arith.constant 0 : index
    %c0_18 = arith.constant 0 : index
    %26 = vector.load %arg3[%c0_17, %c0_18] : memref<1x168xf32, #tpu.memory_space<vmem>>, vector<1x168xf32>
    %27 = vector.broadcast %26 : vector<1x168xf32> to vector<28x168xf32>
    %28 = arith.addf %25, %27 : vector<28x168xf32>
    %cst_19 = arith.constant 0.000000e+00 : f32
    %29 = vector.broadcast %cst_19 : f32 to vector<28x168xf32>
    %30 = arith.maximumf %28, %29 : vector<28x168xf32>
    %c0_20 = arith.constant 0 : index
    %c0_21 = arith.constant 0 : index
    %31 = vector.load %arg8[%c0_20, %c0_21] : memref<14x28xf32, #tpu.memory_space<vmem>>, vector<14x28xf32>
    %cst_22 = arith.constant dense<0.000000e+00> : vector<14x168xf32>
    %32 = tpu.matmul %31, %30, %cst_22 {dimension_numbers = #tpu.dot_dimension_numbers<[1], [0], [0], [1], [0, 0, 1, 1], [], []>} : vector<14x28xf32>, vector<28x168xf32>, vector<14x168xf32> -> vector<14x168xf32>
    %c0_23 = arith.constant 0 : index
    %c0_24 = arith.constant 0 : index
    %33 = vector.load %arg9[%c0_23, %c0_24] : memref<14x28xf32, #tpu.memory_space<vmem>>, vector<14x28xf32>
    %cst_25 = arith.constant dense<0.000000e+00> : vector<14x168xf32>
    %34 = tpu.matmul %33, %30, %cst_25 {dimension_numbers = #tpu.dot_dimension_numbers<[1], [0], [0], [1], [0, 0, 1, 1], [], []>} : vector<14x28xf32>, vector<28x168xf32>, vector<14x168xf32> -> vector<14x168xf32>
    %35 = arith.maximumf %32, %34 : vector<14x168xf32>
    %c0_26 = arith.constant 0 : index
    %c0_27 = arith.constant 0 : index
    %36 = vector.load %arg10[%c0_26, %c0_27] : memref<168x84xf32, #tpu.memory_space<vmem>>, vector<168x84xf32>
    %cst_28 = arith.constant dense<0.000000e+00> : vector<14x84xf32>
    %37 = tpu.matmul %35, %36, %cst_28 {dimension_numbers = #tpu.dot_dimension_numbers<[1], [0], [0], [1], [0, 0, 1, 1], [], []>} : vector<14x168xf32>, vector<168x84xf32>, vector<14x84xf32> -> vector<14x84xf32>
    %c0_29 = arith.constant 0 : index
    %c0_30 = arith.constant 0 : index
    %38 = vector.load %arg11[%c0_29, %c0_30] : memref<168x84xf32, #tpu.memory_space<vmem>>, vector<168x84xf32>
    %cst_31 = arith.constant dense<0.000000e+00> : vector<14x84xf32>
    %39 = tpu.matmul %35, %38, %cst_31 {dimension_numbers = #tpu.dot_dimension_numbers<[1], [0], [0], [1], [0, 0, 1, 1], [], []>} : vector<14x168xf32>, vector<168x84xf32>, vector<14x84xf32> -> vector<14x84xf32>
    %40 = arith.maximumf %37, %39 : vector<14x84xf32>
    %41 = vector.extract_strided_slice %40 {offsets = [0, 0], sizes = [10, 84], strides = [1, 1]} : vector<14x84xf32> to vector<10x84xf32>
    %c0_32 = arith.constant 0 : index
    %c0_33 = arith.constant 0 : index
    %c0_34 = arith.constant 0 : index
    %42 = vector.load %arg4[%c0_32, %c0_33, %c0_34] : memref<5x84x160xf32, #tpu.memory_space<vmem>>, vector<1x84x160xf32>
    %43 = vector.shape_cast %42 : vector<1x84x160xf32> to vector<84x160xf32>
    %cst_35 = arith.constant dense<0.000000e+00> : vector<10x160xf32>
    %44 = tpu.matmul %41, %43, %cst_35 {dimension_numbers = #tpu.dot_dimension_numbers<[1], [0], [0], [1], [0, 0, 1, 1], [], []>} : vector<10x84xf32>, vector<84x160xf32>, vector<10x160xf32> -> vector<10x160xf32>
    %45 = vector.extract_strided_slice %40 {offsets = [1, 0], sizes = [10, 84], strides = [1, 1]} : vector<14x84xf32> to vector<10x84xf32>
    %c1_36 = arith.constant 1 : index
    %c0_37 = arith.constant 0 : index
    %c0_38 = arith.constant 0 : index
    %46 = vector.load %arg4[%c1_36, %c0_37, %c0_38] : memref<5x84x160xf32, #tpu.memory_space<vmem>>, vector<1x84x160xf32>
    %47 = vector.shape_cast %46 : vector<1x84x160xf32> to vector<84x160xf32>
    %cst_39 = arith.constant dense<0.000000e+00> : vector<10x160xf32>
    %48 = tpu.matmul %45, %47, %cst_39 {dimension_numbers = #tpu.dot_dimension_numbers<[1], [0], [0], [1], [0, 0, 1, 1], [], []>} : vector<10x84xf32>, vector<84x160xf32>, vector<10x160xf32> -> vector<10x160xf32>
    %49 = arith.addf %44, %48 : vector<10x160xf32>
    %50 = vector.extract_strided_slice %40 {offsets = [2, 0], sizes = [10, 84], strides = [1, 1]} : vector<14x84xf32> to vector<10x84xf32>
    %c2_40 = arith.constant 2 : index
    %c0_41 = arith.constant 0 : index
    %c0_42 = arith.constant 0 : index
    %51 = vector.load %arg4[%c2_40, %c0_41, %c0_42] : memref<5x84x160xf32, #tpu.memory_space<vmem>>, vector<1x84x160xf32>
    %52 = vector.shape_cast %51 : vector<1x84x160xf32> to vector<84x160xf32>
    %cst_43 = arith.constant dense<0.000000e+00> : vector<10x160xf32>
    %53 = tpu.matmul %50, %52, %cst_43 {dimension_numbers = #tpu.dot_dimension_numbers<[1], [0], [0], [1], [0, 0, 1, 1], [], []>} : vector<10x84xf32>, vector<84x160xf32>, vector<10x160xf32> -> vector<10x160xf32>
    %54 = arith.addf %49, %53 : vector<10x160xf32>
    %55 = vector.extract_strided_slice %40 {offsets = [3, 0], sizes = [10, 84], strides = [1, 1]} : vector<14x84xf32> to vector<10x84xf32>
    %c3_44 = arith.constant 3 : index
    %c0_45 = arith.constant 0 : index
    %c0_46 = arith.constant 0 : index
    %56 = vector.load %arg4[%c3_44, %c0_45, %c0_46] : memref<5x84x160xf32, #tpu.memory_space<vmem>>, vector<1x84x160xf32>
    %57 = vector.shape_cast %56 : vector<1x84x160xf32> to vector<84x160xf32>
    %cst_47 = arith.constant dense<0.000000e+00> : vector<10x160xf32>
    %58 = tpu.matmul %55, %57, %cst_47 {dimension_numbers = #tpu.dot_dimension_numbers<[1], [0], [0], [1], [0, 0, 1, 1], [], []>} : vector<10x84xf32>, vector<84x160xf32>, vector<10x160xf32> -> vector<10x160xf32>
    %59 = arith.addf %54, %58 : vector<10x160xf32>
    %60 = vector.extract_strided_slice %40 {offsets = [4, 0], sizes = [10, 84], strides = [1, 1]} : vector<14x84xf32> to vector<10x84xf32>
    %c4_48 = arith.constant 4 : index
    %c0_49 = arith.constant 0 : index
    %c0_50 = arith.constant 0 : index
    %61 = vector.load %arg4[%c4_48, %c0_49, %c0_50] : memref<5x84x160xf32, #tpu.memory_space<vmem>>, vector<1x84x160xf32>
    %62 = vector.shape_cast %61 : vector<1x84x160xf32> to vector<84x160xf32>
    %cst_51 = arith.constant dense<0.000000e+00> : vector<10x160xf32>
    %63 = tpu.matmul %60, %62, %cst_51 {dimension_numbers = #tpu.dot_dimension_numbers<[1], [0], [0], [1], [0, 0, 1, 1], [], []>} : vector<10x84xf32>, vector<84x160xf32>, vector<10x160xf32> -> vector<10x160xf32>
    %64 = arith.addf %59, %63 : vector<10x160xf32>
    %c0_52 = arith.constant 0 : index
    %c0_53 = arith.constant 0 : index
    %65 = vector.load %arg5[%c0_52, %c0_53] : memref<1x160xf32, #tpu.memory_space<vmem>>, vector<1x160xf32>
    %66 = vector.broadcast %65 : vector<1x160xf32> to vector<10x160xf32>
    %67 = arith.addf %64, %66 : vector<10x160xf32>
    %cst_54 = arith.constant 0.000000e+00 : f32
    %68 = vector.broadcast %cst_54 : f32 to vector<10x160xf32>
    %69 = arith.maximumf %67, %68 : vector<10x160xf32>
    %c0_55 = arith.constant 0 : index
    %c0_56 = arith.constant 0 : index
    %70 = vector.load %arg12[%c0_55, %c0_56] : memref<5x10xf32, #tpu.memory_space<vmem>>, vector<5x10xf32>
    %cst_57 = arith.constant dense<0.000000e+00> : vector<5x160xf32>
    %71 = tpu.matmul %70, %69, %cst_57 {dimension_numbers = #tpu.dot_dimension_numbers<[1], [0], [0], [1], [0, 0, 1, 1], [], []>} : vector<5x10xf32>, vector<10x160xf32>, vector<5x160xf32> -> vector<5x160xf32>
    %c0_58 = arith.constant 0 : index
    %c0_59 = arith.constant 0 : index
    %72 = vector.load %arg13[%c0_58, %c0_59] : memref<5x10xf32, #tpu.memory_space<vmem>>, vector<5x10xf32>
    %cst_60 = arith.constant dense<0.000000e+00> : vector<5x160xf32>
    %73 = tpu.matmul %72, %69, %cst_60 {dimension_numbers = #tpu.dot_dimension_numbers<[1], [0], [0], [1], [0, 0, 1, 1], [], []>} : vector<5x10xf32>, vector<10x160xf32>, vector<5x160xf32> -> vector<5x160xf32>
    %74 = arith.maximumf %71, %73 : vector<5x160xf32>
    %c0_61 = arith.constant 0 : index
    %c0_62 = arith.constant 0 : index
    %75 = vector.load %arg14[%c0_61, %c0_62] : memref<160x80xf32, #tpu.memory_space<vmem>>, vector<160x80xf32>
    %cst_63 = arith.constant dense<0.000000e+00> : vector<5x80xf32>
    %76 = tpu.matmul %74, %75, %cst_63 {dimension_numbers = #tpu.dot_dimension_numbers<[1], [0], [0], [1], [0, 0, 1, 1], [], []>} : vector<5x160xf32>, vector<160x80xf32>, vector<5x80xf32> -> vector<5x80xf32>
    %c0_64 = arith.constant 0 : index
    %c0_65 = arith.constant 0 : index
    %77 = vector.load %arg15[%c0_64, %c0_65] : memref<160x80xf32, #tpu.memory_space<vmem>>, vector<160x80xf32>
    %cst_66 = arith.constant dense<0.000000e+00> : vector<5x80xf32>
    %78 = tpu.matmul %74, %77, %cst_66 {dimension_numbers = #tpu.dot_dimension_numbers<[1], [0], [0], [1], [0, 0, 1, 1], [], []>} : vector<5x160xf32>, vector<160x80xf32>, vector<5x80xf32> -> vector<5x80xf32>
    %79 = arith.maximumf %76, %78 : vector<5x80xf32>
    %80 = vector.extract_strided_slice %79 {offsets = [0, 0], sizes = [1, 80], strides = [1, 1]} : vector<5x80xf32> to vector<1x80xf32>
    %c0_67 = arith.constant 0 : index
    %c0_68 = arith.constant 0 : index
    %c0_69 = arith.constant 0 : index
    %81 = vector.load %arg6[%c0_67, %c0_68, %c0_69] : memref<5x80x120xf32, #tpu.memory_space<vmem>>, vector<1x80x120xf32>
    %82 = vector.shape_cast %81 : vector<1x80x120xf32> to vector<80x120xf32>
    %cst_70 = arith.constant dense<0.000000e+00> : vector<1x120xf32>
    %83 = tpu.matmul %80, %82, %cst_70 {dimension_numbers = #tpu.dot_dimension_numbers<[1], [0], [0], [1], [0, 0, 1, 1], [], []>} : vector<1x80xf32>, vector<80x120xf32>, vector<1x120xf32> -> vector<1x120xf32>
    %84 = vector.extract_strided_slice %79 {offsets = [1, 0], sizes = [1, 80], strides = [1, 1]} : vector<5x80xf32> to vector<1x80xf32>
    %c1_71 = arith.constant 1 : index
    %c0_72 = arith.constant 0 : index
    %c0_73 = arith.constant 0 : index
    %85 = vector.load %arg6[%c1_71, %c0_72, %c0_73] : memref<5x80x120xf32, #tpu.memory_space<vmem>>, vector<1x80x120xf32>
    %86 = vector.shape_cast %85 : vector<1x80x120xf32> to vector<80x120xf32>
    %cst_74 = arith.constant dense<0.000000e+00> : vector<1x120xf32>
    %87 = tpu.matmul %84, %86, %cst_74 {dimension_numbers = #tpu.dot_dimension_numbers<[1], [0], [0], [1], [0, 0, 1, 1], [], []>} : vector<1x80xf32>, vector<80x120xf32>, vector<1x120xf32> -> vector<1x120xf32>
    %88 = arith.addf %83, %87 : vector<1x120xf32>
    %89 = vector.extract_strided_slice %79 {offsets = [2, 0], sizes = [1, 80], strides = [1, 1]} : vector<5x80xf32> to vector<1x80xf32>
    %c2_75 = arith.constant 2 : index
    %c0_76 = arith.constant 0 : index
    %c0_77 = arith.constant 0 : index
    %90 = vector.load %arg6[%c2_75, %c0_76, %c0_77] : memref<5x80x120xf32, #tpu.memory_space<vmem>>, vector<1x80x120xf32>
    %91 = vector.shape_cast %90 : vector<1x80x120xf32> to vector<80x120xf32>
    %cst_78 = arith.constant dense<0.000000e+00> : vector<1x120xf32>
    %92 = tpu.matmul %89, %91, %cst_78 {dimension_numbers = #tpu.dot_dimension_numbers<[1], [0], [0], [1], [0, 0, 1, 1], [], []>} : vector<1x80xf32>, vector<80x120xf32>, vector<1x120xf32> -> vector<1x120xf32>
    %93 = arith.addf %88, %92 : vector<1x120xf32>
    %94 = vector.extract_strided_slice %79 {offsets = [3, 0], sizes = [1, 80], strides = [1, 1]} : vector<5x80xf32> to vector<1x80xf32>
    %c3_79 = arith.constant 3 : index
    %c0_80 = arith.constant 0 : index
    %c0_81 = arith.constant 0 : index
    %95 = vector.load %arg6[%c3_79, %c0_80, %c0_81] : memref<5x80x120xf32, #tpu.memory_space<vmem>>, vector<1x80x120xf32>
    %96 = vector.shape_cast %95 : vector<1x80x120xf32> to vector<80x120xf32>
    %cst_82 = arith.constant dense<0.000000e+00> : vector<1x120xf32>
    %97 = tpu.matmul %94, %96, %cst_82 {dimension_numbers = #tpu.dot_dimension_numbers<[1], [0], [0], [1], [0, 0, 1, 1], [], []>} : vector<1x80xf32>, vector<80x120xf32>, vector<1x120xf32> -> vector<1x120xf32>
    %98 = arith.addf %93, %97 : vector<1x120xf32>
    %99 = vector.extract_strided_slice %79 {offsets = [4, 0], sizes = [1, 80], strides = [1, 1]} : vector<5x80xf32> to vector<1x80xf32>
    %c4_83 = arith.constant 4 : index
    %c0_84 = arith.constant 0 : index
    %c0_85 = arith.constant 0 : index
    %100 = vector.load %arg6[%c4_83, %c0_84, %c0_85] : memref<5x80x120xf32, #tpu.memory_space<vmem>>, vector<1x80x120xf32>
    %101 = vector.shape_cast %100 : vector<1x80x120xf32> to vector<80x120xf32>
    %cst_86 = arith.constant dense<0.000000e+00> : vector<1x120xf32>
    %102 = tpu.matmul %99, %101, %cst_86 {dimension_numbers = #tpu.dot_dimension_numbers<[1], [0], [0], [1], [0, 0, 1, 1], [], []>} : vector<1x80xf32>, vector<80x120xf32>, vector<1x120xf32> -> vector<1x120xf32>
    %103 = arith.addf %98, %102 : vector<1x120xf32>
    %c0_87 = arith.constant 0 : index
    %c0_88 = arith.constant 0 : index
    %104 = vector.load %arg7[%c0_87, %c0_88] : memref<1x120xf32, #tpu.memory_space<vmem>>, vector<1x120xf32>
    %105 = arith.addf %103, %104 : vector<1x120xf32>
    %cst_89 = arith.constant 0.000000e+00 : f32
    %106 = vector.broadcast %cst_89 : f32 to vector<1x120xf32>
    %107 = arith.maximumf %105, %106 : vector<1x120xf32>
    %c0_90 = arith.constant 0 : index
    %c0_91 = arith.constant 0 : index
    %108 = vector.load %arg16[%c0_90, %c0_91] : memref<120x84xf32, #tpu.memory_space<vmem>>, vector<120x84xf32>
    %cst_92 = arith.constant dense<0.000000e+00> : vector<1x84xf32>
    %109 = tpu.matmul %107, %108, %cst_92 {dimension_numbers = #tpu.dot_dimension_numbers<[1], [0], [0], [1], [0, 0, 1, 1], [], []>} : vector<1x120xf32>, vector<120x84xf32>, vector<1x84xf32> -> vector<1x84xf32>
    %c0_93 = arith.constant 0 : index
    %c0_94 = arith.constant 0 : index
    %110 = vector.load %arg17[%c0_93, %c0_94] : memref<1x84xf32, #tpu.memory_space<vmem>>, vector<1x84xf32>
    %111 = arith.addf %109, %110 : vector<1x84xf32>
    %cst_95 = arith.constant 0.000000e+00 : f32
    %112 = vector.broadcast %cst_95 : f32 to vector<1x84xf32>
    %113 = arith.maximumf %111, %112 : vector<1x84xf32>
    %c0_96 = arith.constant 0 : index
    %c0_97 = arith.constant 0 : index
    %114 = vector.load %arg18[%c0_96, %c0_97] : memref<84x128xf32, #tpu.memory_space<vmem>>, vector<84x128xf32>
    %cst_98 = arith.constant dense<0.000000e+00> : vector<1x128xf32>
    %115 = tpu.matmul %113, %114, %cst_98 {dimension_numbers = #tpu.dot_dimension_numbers<[1], [0], [0], [1], [0, 0, 1, 1], [], []>} : vector<1x84xf32>, vector<84x128xf32>, vector<1x128xf32> -> vector<1x128xf32>
    %c0_99 = arith.constant 0 : index
    %c0_100 = arith.constant 0 : index
    %116 = vector.load %arg19[%c0_99, %c0_100] : memref<1x128xf32, #tpu.memory_space<vmem>>, vector<1x128xf32>
    %117 = arith.addf %115, %116 : vector<1x128xf32>
    %c0_101 = arith.constant 0 : index
    %c0_102 = arith.constant 0 : index
    %c0_103 = arith.constant 0 : index
    %118 = vector.load %arg20[%c0_101, %c0_102, %c0_103] : memref<2x1x128xf32, #tpu.memory_space<vmem>>, vector<1x1x128xf32>
    %119 = vector.shape_cast %118 : vector<1x1x128xf32> to vector<1x128xf32>
    %120 = vector.shape_cast %117 : vector<1x128xf32> to vector<1x1x128xf32>
    tpu.vector_store %arg20[%c0_101, %c0_102, %c0_103], %120 {strides = array<i32>} : memref<2x1x128xf32, #tpu.memory_space<vmem>>, vector<1x1x128xf32>,
    %c1_104 = arith.constant 1 : index
    %c0_105 = arith.constant 0 : index
    %c0_106 = arith.constant 0 : index
    %121 = vector.load %arg1[%c1_104, %c0_105, %c0_106] : memref<2x32x32xf32, #tpu.memory_space<vmem>>, vector<1x32x32xf32>
    %122 = vector.shape_cast %121 : vector<1x32x32xf32> to vector<32x32xf32>
    %123 = vector.extract_strided_slice %122 {offsets = [0, 0], sizes = [28, 32], strides = [1, 1]} : vector<32x32xf32> to vector<28x32xf32>
    %c0_107 = arith.constant 0 : index
    %c0_108 = arith.constant 0 : index
    %c0_109 = arith.constant 0 : index
    %124 = vector.load %arg2[%c0_107, %c0_108, %c0_109] : memref<5x32x168xf32, #tpu.memory_space<vmem>>, vector<1x32x168xf32>
    %125 = vector.shape_cast %124 : vector<1x32x168xf32> to vector<32x168xf32>
    %cst_110 = arith.constant dense<0.000000e+00> : vector<28x168xf32>
    %126 = tpu.matmul %123, %125, %cst_110 {dimension_numbers = #tpu.dot_dimension_numbers<[1], [0], [0], [1], [0, 0, 1, 1], [], []>} : vector<28x32xf32>, vector<32x168xf32>, vector<28x168xf32> -> vector<28x168xf32>
    %127 = vector.extract_strided_slice %122 {offsets = [1, 0], sizes = [28, 32], strides = [1, 1]} : vector<32x32xf32> to vector<28x32xf32>
    %c1_111 = arith.constant 1 : index
    %c0_112 = arith.constant 0 : index
    %c0_113 = arith.constant 0 : index
    %128 = vector.load %arg2[%c1_111, %c0_112, %c0_113] : memref<5x32x168xf32, #tpu.memory_space<vmem>>, vector<1x32x168xf32>
    %129 = vector.shape_cast %128 : vector<1x32x168xf32> to vector<32x168xf32>
    %cst_114 = arith.constant dense<0.000000e+00> : vector<28x168xf32>
    %130 = tpu.matmul %127, %129, %cst_114 {dimension_numbers = #tpu.dot_dimension_numbers<[1], [0], [0], [1], [0, 0, 1, 1], [], []>} : vector<28x32xf32>, vector<32x168xf32>, vector<28x168xf32> -> vector<28x168xf32>
    %131 = arith.addf %126, %130 : vector<28x168xf32>
    %132 = vector.extract_strided_slice %122 {offsets = [2, 0], sizes = [28, 32], strides = [1, 1]} : vector<32x32xf32> to vector<28x32xf32>
    %c2_115 = arith.constant 2 : index
    %c0_116 = arith.constant 0 : index
    %c0_117 = arith.constant 0 : index
    %133 = vector.load %arg2[%c2_115, %c0_116, %c0_117] : memref<5x32x168xf32, #tpu.memory_space<vmem>>, vector<1x32x168xf32>
    %134 = vector.shape_cast %133 : vector<1x32x168xf32> to vector<32x168xf32>
    %cst_118 = arith.constant dense<0.000000e+00> : vector<28x168xf32>
    %135 = tpu.matmul %132, %134, %cst_118 {dimension_numbers = #tpu.dot_dimension_numbers<[1], [0], [0], [1], [0, 0, 1, 1], [], []>} : vector<28x32xf32>, vector<32x168xf32>, vector<28x168xf32> -> vector<28x168xf32>
    %136 = arith.addf %131, %135 : vector<28x168xf32>
    %137 = vector.extract_strided_slice %122 {offsets = [3, 0], sizes = [28, 32], strides = [1, 1]} : vector<32x32xf32> to vector<28x32xf32>
    %c3_119 = arith.constant 3 : index
    %c0_120 = arith.constant 0 : index
    %c0_121 = arith.constant 0 : index
    %138 = vector.load %arg2[%c3_119, %c0_120, %c0_121] : memref<5x32x168xf32, #tpu.memory_space<vmem>>, vector<1x32x168xf32>
    %139 = vector.shape_cast %138 : vector<1x32x168xf32> to vector<32x168xf32>
    %cst_122 = arith.constant dense<0.000000e+00> : vector<28x168xf32>
    %140 = tpu.matmul %137, %139, %cst_122 {dimension_numbers = #tpu.dot_dimension_numbers<[1], [0], [0], [1], [0, 0, 1, 1], [], []>} : vector<28x32xf32>, vector<32x168xf32>, vector<28x168xf32> -> vector<28x168xf32>
    %141 = arith.addf %136, %140 : vector<28x168xf32>
    %142 = vector.extract_strided_slice %122 {offsets = [4, 0], sizes = [28, 32], strides = [1, 1]} : vector<32x32xf32> to vector<28x32xf32>
    %c4_123 = arith.constant 4 : index
    %c0_124 = arith.constant 0 : index
    %c0_125 = arith.constant 0 : index
    %143 = vector.load %arg2[%c4_123, %c0_124, %c0_125] : memref<5x32x168xf32, #tpu.memory_space<vmem>>, vector<1x32x168xf32>
    %144 = vector.shape_cast %143 : vector<1x32x168xf32> to vector<32x168xf32>
    %cst_126 = arith.constant dense<0.000000e+00> : vector<28x168xf32>
    %145 = tpu.matmul %142, %144, %cst_126 {dimension_numbers = #tpu.dot_dimension_numbers<[1], [0], [0], [1], [0, 0, 1, 1], [], []>} : vector<28x32xf32>, vector<32x168xf32>, vector<28x168xf32> -> vector<28x168xf32>
    %146 = arith.addf %141, %145 : vector<28x168xf32>
    %c0_127 = arith.constant 0 : index
    %c0_128 = arith.constant 0 : index
    %147 = vector.load %arg3[%c0_127, %c0_128] : memref<1x168xf32, #tpu.memory_space<vmem>>, vector<1x168xf32>
    %148 = vector.broadcast %147 : vector<1x168xf32> to vector<28x168xf32>
    %149 = arith.addf %146, %148 : vector<28x168xf32>
    %cst_129 = arith.constant 0.000000e+00 : f32
    %150 = vector.broadcast %cst_129 : f32 to vector<28x168xf32>
    %151 = arith.maximumf %149, %150 : vector<28x168xf32>
    %c0_130 = arith.constant 0 : index
    %c0_131 = arith.constant 0 : index
    %152 = vector.load %arg8[%c0_130, %c0_131] : memref<14x28xf32, #tpu.memory_space<vmem>>, vector<14x28xf32>
    %cst_132 = arith.constant dense<0.000000e+00> : vector<14x168xf32>
    %153 = tpu.matmul %152, %151, %cst_132 {dimension_numbers = #tpu.dot_dimension_numbers<[1], [0], [0], [1], [0, 0, 1, 1], [], []>} : vector<14x28xf32>, vector<28x168xf32>, vector<14x168xf32> -> vector<14x168xf32>
    %c0_133 = arith.constant 0 : index
    %c0_134 = arith.constant 0 : index
    %154 = vector.load %arg9[%c0_133, %c0_134] : memref<14x28xf32, #tpu.memory_space<vmem>>, vector<14x28xf32>
    %cst_135 = arith.constant dense<0.000000e+00> : vector<14x168xf32>
    %155 = tpu.matmul %154, %151, %cst_135 {dimension_numbers = #tpu.dot_dimension_numbers<[1], [0], [0], [1], [0, 0, 1, 1], [], []>} : vector<14x28xf32>, vector<28x168xf32>, vector<14x168xf32> -> vector<14x168xf32>
    %156 = arith.maximumf %153, %155 : vector<14x168xf32>
    %c0_136 = arith.constant 0 : index
    %c0_137 = arith.constant 0 : index
    %157 = vector.load %arg10[%c0_136, %c0_137] : memref<168x84xf32, #tpu.memory_space<vmem>>, vector<168x84xf32>
    %cst_138 = arith.constant dense<0.000000e+00> : vector<14x84xf32>
    %158 = tpu.matmul %156, %157, %cst_138 {dimension_numbers = #tpu.dot_dimension_numbers<[1], [0], [0], [1], [0, 0, 1, 1], [], []>} : vector<14x168xf32>, vector<168x84xf32>, vector<14x84xf32> -> vector<14x84xf32>
    %c0_139 = arith.constant 0 : index
    %c0_140 = arith.constant 0 : index
    %159 = vector.load %arg11[%c0_139, %c0_140] : memref<168x84xf32, #tpu.memory_space<vmem>>, vector<168x84xf32>
    %cst_141 = arith.constant dense<0.000000e+00> : vector<14x84xf32>
    %160 = tpu.matmul %156, %159, %cst_141 {dimension_numbers = #tpu.dot_dimension_numbers<[1], [0], [0], [1], [0, 0, 1, 1], [], []>} : vector<14x168xf32>, vector<168x84xf32>, vector<14x84xf32> -> vector<14x84xf32>
    %161 = arith.maximumf %158, %160 : vector<14x84xf32>
    %162 = vector.extract_strided_slice %161 {offsets = [0, 0], sizes = [10, 84], strides = [1, 1]} : vector<14x84xf32> to vector<10x84xf32>
    %c0_142 = arith.constant 0 : index
    %c0_143 = arith.constant 0 : index
    %c0_144 = arith.constant 0 : index
    %163 = vector.load %arg4[%c0_142, %c0_143, %c0_144] : memref<5x84x160xf32, #tpu.memory_space<vmem>>, vector<1x84x160xf32>
    %164 = vector.shape_cast %163 : vector<1x84x160xf32> to vector<84x160xf32>
    %cst_145 = arith.constant dense<0.000000e+00> : vector<10x160xf32>
    %165 = tpu.matmul %162, %164, %cst_145 {dimension_numbers = #tpu.dot_dimension_numbers<[1], [0], [0], [1], [0, 0, 1, 1], [], []>} : vector<10x84xf32>, vector<84x160xf32>, vector<10x160xf32> -> vector<10x160xf32>
    %166 = vector.extract_strided_slice %161 {offsets = [1, 0], sizes = [10, 84], strides = [1, 1]} : vector<14x84xf32> to vector<10x84xf32>
    %c1_146 = arith.constant 1 : index
    %c0_147 = arith.constant 0 : index
    %c0_148 = arith.constant 0 : index
    %167 = vector.load %arg4[%c1_146, %c0_147, %c0_148] : memref<5x84x160xf32, #tpu.memory_space<vmem>>, vector<1x84x160xf32>
    %168 = vector.shape_cast %167 : vector<1x84x160xf32> to vector<84x160xf32>
    %cst_149 = arith.constant dense<0.000000e+00> : vector<10x160xf32>
    %169 = tpu.matmul %166, %168, %cst_149 {dimension_numbers = #tpu.dot_dimension_numbers<[1], [0], [0], [1], [0, 0, 1, 1], [], []>} : vector<10x84xf32>, vector<84x160xf32>, vector<10x160xf32> -> vector<10x160xf32>
    %170 = arith.addf %165, %169 : vector<10x160xf32>
    %171 = vector.extract_strided_slice %161 {offsets = [2, 0], sizes = [10, 84], strides = [1, 1]} : vector<14x84xf32> to vector<10x84xf32>
    %c2_150 = arith.constant 2 : index
    %c0_151 = arith.constant 0 : index
    %c0_152 = arith.constant 0 : index
    %172 = vector.load %arg4[%c2_150, %c0_151, %c0_152] : memref<5x84x160xf32, #tpu.memory_space<vmem>>, vector<1x84x160xf32>
    %173 = vector.shape_cast %172 : vector<1x84x160xf32> to vector<84x160xf32>
    %cst_153 = arith.constant dense<0.000000e+00> : vector<10x160xf32>
    %174 = tpu.matmul %171, %173, %cst_153 {dimension_numbers = #tpu.dot_dimension_numbers<[1], [0], [0], [1], [0, 0, 1, 1], [], []>} : vector<10x84xf32>, vector<84x160xf32>, vector<10x160xf32> -> vector<10x160xf32>
    %175 = arith.addf %170, %174 : vector<10x160xf32>
    %176 = vector.extract_strided_slice %161 {offsets = [3, 0], sizes = [10, 84], strides = [1, 1]} : vector<14x84xf32> to vector<10x84xf32>
    %c3_154 = arith.constant 3 : index
    %c0_155 = arith.constant 0 : index
    %c0_156 = arith.constant 0 : index
    %177 = vector.load %arg4[%c3_154, %c0_155, %c0_156] : memref<5x84x160xf32, #tpu.memory_space<vmem>>, vector<1x84x160xf32>
    %178 = vector.shape_cast %177 : vector<1x84x160xf32> to vector<84x160xf32>
    %cst_157 = arith.constant dense<0.000000e+00> : vector<10x160xf32>
    %179 = tpu.matmul %176, %178, %cst_157 {dimension_numbers = #tpu.dot_dimension_numbers<[1], [0], [0], [1], [0, 0, 1, 1], [], []>} : vector<10x84xf32>, vector<84x160xf32>, vector<10x160xf32> -> vector<10x160xf32>
    %180 = arith.addf %175, %179 : vector<10x160xf32>
    %181 = vector.extract_strided_slice %161 {offsets = [4, 0], sizes = [10, 84], strides = [1, 1]} : vector<14x84xf32> to vector<10x84xf32>
    %c4_158 = arith.constant 4 : index
    %c0_159 = arith.constant 0 : index
    %c0_160 = arith.constant 0 : index
    %182 = vector.load %arg4[%c4_158, %c0_159, %c0_160] : memref<5x84x160xf32, #tpu.memory_space<vmem>>, vector<1x84x160xf32>
    %183 = vector.shape_cast %182 : vector<1x84x160xf32> to vector<84x160xf32>
    %cst_161 = arith.constant dense<0.000000e+00> : vector<10x160xf32>
    %184 = tpu.matmul %181, %183, %cst_161 {dimension_numbers = #tpu.dot_dimension_numbers<[1], [0], [0], [1], [0, 0, 1, 1], [], []>} : vector<10x84xf32>, vector<84x160xf32>, vector<10x160xf32> -> vector<10x160xf32>
    %185 = arith.addf %180, %184 : vector<10x160xf32>
    %c0_162 = arith.constant 0 : index
    %c0_163 = arith.constant 0 : index
    %186 = vector.load %arg5[%c0_162, %c0_163] : memref<1x160xf32, #tpu.memory_space<vmem>>, vector<1x160xf32>
    %187 = vector.broadcast %186 : vector<1x160xf32> to vector<10x160xf32>
    %188 = arith.addf %185, %187 : vector<10x160xf32>
    %cst_164 = arith.constant 0.000000e+00 : f32
    %189 = vector.broadcast %cst_164 : f32 to vector<10x160xf32>
    %190 = arith.maximumf %188, %189 : vector<10x160xf32>
    %c0_165 = arith.constant 0 : index
    %c0_166 = arith.constant 0 : index
    %191 = vector.load %arg12[%c0_165, %c0_166] : memref<5x10xf32, #tpu.memory_space<vmem>>, vector<5x10xf32>
    %cst_167 = arith.constant dense<0.000000e+00> : vector<5x160xf32>
    %192 = tpu.matmul %191, %190, %cst_167 {dimension_numbers = #tpu.dot_dimension_numbers<[1], [0], [0], [1], [0, 0, 1, 1], [], []>} : vector<5x10xf32>, vector<10x160xf32>, vector<5x160xf32> -> vector<5x160xf32>
    %c0_168 = arith.constant 0 : index
    %c0_169 = arith.constant 0 : index
    %193 = vector.load %arg13[%c0_168, %c0_169] : memref<5x10xf32, #tpu.memory_space<vmem>>, vector<5x10xf32>
    %cst_170 = arith.constant dense<0.000000e+00> : vector<5x160xf32>
    %194 = tpu.matmul %193, %190, %cst_170 {dimension_numbers = #tpu.dot_dimension_numbers<[1], [0], [0], [1], [0, 0, 1, 1], [], []>} : vector<5x10xf32>, vector<10x160xf32>, vector<5x160xf32> -> vector<5x160xf32>
    %195 = arith.maximumf %192, %194 : vector<5x160xf32>
    %c0_171 = arith.constant 0 : index
    %c0_172 = arith.constant 0 : index
    %196 = vector.load %arg14[%c0_171, %c0_172] : memref<160x80xf32, #tpu.memory_space<vmem>>, vector<160x80xf32>
    %cst_173 = arith.constant dense<0.000000e+00> : vector<5x80xf32>
    %197 = tpu.matmul %195, %196, %cst_173 {dimension_numbers = #tpu.dot_dimension_numbers<[1], [0], [0], [1], [0, 0, 1, 1], [], []>} : vector<5x160xf32>, vector<160x80xf32>, vector<5x80xf32> -> vector<5x80xf32>
    %c0_174 = arith.constant 0 : index
    %c0_175 = arith.constant 0 : index
    %198 = vector.load %arg15[%c0_174, %c0_175] : memref<160x80xf32, #tpu.memory_space<vmem>>, vector<160x80xf32>
    %cst_176 = arith.constant dense<0.000000e+00> : vector<5x80xf32>
    %199 = tpu.matmul %195, %198, %cst_176 {dimension_numbers = #tpu.dot_dimension_numbers<[1], [0], [0], [1], [0, 0, 1, 1], [], []>} : vector<5x160xf32>, vector<160x80xf32>, vector<5x80xf32> -> vector<5x80xf32>
    %200 = arith.maximumf %197, %199 : vector<5x80xf32>
    %201 = vector.extract_strided_slice %200 {offsets = [0, 0], sizes = [1, 80], strides = [1, 1]} : vector<5x80xf32> to vector<1x80xf32>
    %c0_177 = arith.constant 0 : index
    %c0_178 = arith.constant 0 : index
    %c0_179 = arith.constant 0 : index
    %202 = vector.load %arg6[%c0_177, %c0_178, %c0_179] : memref<5x80x120xf32, #tpu.memory_space<vmem>>, vector<1x80x120xf32>
    %203 = vector.shape_cast %202 : vector<1x80x120xf32> to vector<80x120xf32>
    %cst_180 = arith.constant dense<0.000000e+00> : vector<1x120xf32>
    %204 = tpu.matmul %201, %203, %cst_180 {dimension_numbers = #tpu.dot_dimension_numbers<[1], [0], [0], [1], [0, 0, 1, 1], [], []>} : vector<1x80xf32>, vector<80x120xf32>, vector<1x120xf32> -> vector<1x120xf32>
    %205 = vector.extract_strided_slice %200 {offsets = [1, 0], sizes = [1, 80], strides = [1, 1]} : vector<5x80xf32> to vector<1x80xf32>
    %c1_181 = arith.constant 1 : index
    %c0_182 = arith.constant 0 : index
    %c0_183 = arith.constant 0 : index
    %206 = vector.load %arg6[%c1_181, %c0_182, %c0_183] : memref<5x80x120xf32, #tpu.memory_space<vmem>>, vector<1x80x120xf32>
    %207 = vector.shape_cast %206 : vector<1x80x120xf32> to vector<80x120xf32>
    %cst_184 = arith.constant dense<0.000000e+00> : vector<1x120xf32>
    %208 = tpu.matmul %205, %207, %cst_184 {dimension_numbers = #tpu.dot_dimension_numbers<[1], [0], [0], [1], [0, 0, 1, 1], [], []>} : vector<1x80xf32>, vector<80x120xf32>, vector<1x120xf32> -> vector<1x120xf32>
    %209 = arith.addf %204, %208 : vector<1x120xf32>
    %210 = vector.extract_strided_slice %200 {offsets = [2, 0], sizes = [1, 80], strides = [1, 1]} : vector<5x80xf32> to vector<1x80xf32>
    %c2_185 = arith.constant 2 : index
    %c0_186 = arith.constant 0 : index
    %c0_187 = arith.constant 0 : index
    %211 = vector.load %arg6[%c2_185, %c0_186, %c0_187] : memref<5x80x120xf32, #tpu.memory_space<vmem>>, vector<1x80x120xf32>
    %212 = vector.shape_cast %211 : vector<1x80x120xf32> to vector<80x120xf32>
    %cst_188 = arith.constant dense<0.000000e+00> : vector<1x120xf32>
    %213 = tpu.matmul %210, %212, %cst_188 {dimension_numbers = #tpu.dot_dimension_numbers<[1], [0], [0], [1], [0, 0, 1, 1], [], []>} : vector<1x80xf32>, vector<80x120xf32>, vector<1x120xf32> -> vector<1x120xf32>
    %214 = arith.addf %209, %213 : vector<1x120xf32>
    %215 = vector.extract_strided_slice %200 {offsets = [3, 0], sizes = [1, 80], strides = [1, 1]} : vector<5x80xf32> to vector<1x80xf32>
    %c3_189 = arith.constant 3 : index
    %c0_190 = arith.constant 0 : index
    %c0_191 = arith.constant 0 : index
    %216 = vector.load %arg6[%c3_189, %c0_190, %c0_191] : memref<5x80x120xf32, #tpu.memory_space<vmem>>, vector<1x80x120xf32>
    %217 = vector.shape_cast %216 : vector<1x80x120xf32> to vector<80x120xf32>
    %cst_192 = arith.constant dense<0.000000e+00> : vector<1x120xf32>
    %218 = tpu.matmul %215, %217, %cst_192 {dimension_numbers = #tpu.dot_dimension_numbers<[1], [0], [0], [1], [0, 0, 1, 1], [], []>} : vector<1x80xf32>, vector<80x120xf32>, vector<1x120xf32> -> vector<1x120xf32>
    %219 = arith.addf %214, %218 : vector<1x120xf32>
    %220 = vector.extract_strided_slice %200 {offsets = [4, 0], sizes = [1, 80], strides = [1, 1]} : vector<5x80xf32> to vector<1x80xf32>
    %c4_193 = arith.constant 4 : index
    %c0_194 = arith.constant 0 : index
    %c0_195 = arith.constant 0 : index
    %221 = vector.load %arg6[%c4_193, %c0_194, %c0_195] : memref<5x80x120xf32, #tpu.memory_space<vmem>>, vector<1x80x120xf32>
    %222 = vector.shape_cast %221 : vector<1x80x120xf32> to vector<80x120xf32>
    %cst_196 = arith.constant dense<0.000000e+00> : vector<1x120xf32>
    %223 = tpu.matmul %220, %222, %cst_196 {dimension_numbers = #tpu.dot_dimension_numbers<[1], [0], [0], [1], [0, 0, 1, 1], [], []>} : vector<1x80xf32>, vector<80x120xf32>, vector<1x120xf32> -> vector<1x120xf32>
    %224 = arith.addf %219, %223 : vector<1x120xf32>
    %c0_197 = arith.constant 0 : index
    %c0_198 = arith.constant 0 : index
    %225 = vector.load %arg7[%c0_197, %c0_198] : memref<1x120xf32, #tpu.memory_space<vmem>>, vector<1x120xf32>
    %226 = arith.addf %224, %225 : vector<1x120xf32>
    %cst_199 = arith.constant 0.000000e+00 : f32
    %227 = vector.broadcast %cst_199 : f32 to vector<1x120xf32>
    %228 = arith.maximumf %226, %227 : vector<1x120xf32>
    %c0_200 = arith.constant 0 : index
    %c0_201 = arith.constant 0 : index
    %229 = vector.load %arg16[%c0_200, %c0_201] : memref<120x84xf32, #tpu.memory_space<vmem>>, vector<120x84xf32>
    %cst_202 = arith.constant dense<0.000000e+00> : vector<1x84xf32>
    %230 = tpu.matmul %228, %229, %cst_202 {dimension_numbers = #tpu.dot_dimension_numbers<[1], [0], [0], [1], [0, 0, 1, 1], [], []>} : vector<1x120xf32>, vector<120x84xf32>, vector<1x84xf32> -> vector<1x84xf32>
    %c0_203 = arith.constant 0 : index
    %c0_204 = arith.constant 0 : index
    %231 = vector.load %arg17[%c0_203, %c0_204] : memref<1x84xf32, #tpu.memory_space<vmem>>, vector<1x84xf32>
    %232 = arith.addf %230, %231 : vector<1x84xf32>
    %cst_205 = arith.constant 0.000000e+00 : f32
    %233 = vector.broadcast %cst_205 : f32 to vector<1x84xf32>
    %234 = arith.maximumf %232, %233 : vector<1x84xf32>
    %c0_206 = arith.constant 0 : index
    %c0_207 = arith.constant 0 : index
    %235 = vector.load %arg18[%c0_206, %c0_207] : memref<84x128xf32, #tpu.memory_space<vmem>>, vector<84x128xf32>
    %cst_208 = arith.constant dense<0.000000e+00> : vector<1x128xf32>
    %236 = tpu.matmul %234, %235, %cst_208 {dimension_numbers = #tpu.dot_dimension_numbers<[1], [0], [0], [1], [0, 0, 1, 1], [], []>} : vector<1x84xf32>, vector<84x128xf32>, vector<1x128xf32> -> vector<1x128xf32>
    %c0_209 = arith.constant 0 : index
    %c0_210 = arith.constant 0 : index
    %237 = vector.load %arg19[%c0_209, %c0_210] : memref<1x128xf32, #tpu.memory_space<vmem>>, vector<1x128xf32>
    %238 = arith.addf %236, %237 : vector<1x128xf32>
    %c1_211 = arith.constant 1 : index
    %c0_212 = arith.constant 0 : index
    %c0_213 = arith.constant 0 : index
    %239 = vector.load %arg20[%c1_211, %c0_212, %c0_213] : memref<2x1x128xf32, #tpu.memory_space<vmem>>, vector<1x1x128xf32>
    %240 = vector.shape_cast %239 : vector<1x1x128xf32> to vector<1x128xf32>
    %241 = vector.shape_cast %238 : vector<1x128xf32> to vector<1x1x128xf32>
    tpu.vector_store %arg20[%c1_211, %c0_212, %c0_213], %241 {strides = array<i32>} : memref<2x1x128xf32, #tpu.memory_space<vmem>>, vector<1x1x128xf32>,
    return
  }
  func.func @transform_0(%arg0: i32) -> (i32, i32, i32) {
    %c0_i32 = arith.constant 0 : i32
    %c0_i32_0 = arith.constant 0 : i32
    %c0_i32_1 = arith.constant 0 : i32
    return %arg0, %c0_i32, %c0_i32_0 : i32, i32, i32
  }
  func.func @transform_1(%arg0: i32) -> (i32, i32, i32) {
    %c0_i32 = arith.constant 0 : i32
    %c0_i32_0 = arith.constant 0 : i32
    %c0_i32_1 = arith.constant 0 : i32
    %c0_i32_2 = arith.constant 0 : i32
    return %c0_i32, %c0_i32_0, %c0_i32_1 : i32, i32, i32
  }
  func.func @transform_2(%arg0: i32) -> (i32, i32) {
    %c0_i32 = arith.constant 0 : i32
    %c0_i32_0 = arith.constant 0 : i32
    %c0_i32_1 = arith.constant 0 : i32
    return %c0_i32, %c0_i32_0 : i32, i32
  }
  func.func @transform_3(%arg0: i32) -> (i32, i32, i32) {
    %c0_i32 = arith.constant 0 : i32
    %c0_i32_0 = arith.constant 0 : i32
    %c0_i32_1 = arith.constant 0 : i32
    %c0_i32_2 = arith.constant 0 : i32
    return %c0_i32, %c0_i32_0, %c0_i32_1 : i32, i32, i32
  }
  func.func @transform_4(%arg0: i32) -> (i32, i32) {
    %c0_i32 = arith.constant 0 : i32
    %c0_i32_0 = arith.constant 0 : i32
    %c0_i32_1 = arith.constant 0 : i32
    return %c0_i32, %c0_i32_0 : i32, i32
  }
  func.func @transform_5(%arg0: i32) -> (i32, i32, i32) {
    %c0_i32 = arith.constant 0 : i32
    %c0_i32_0 = arith.constant 0 : i32
    %c0_i32_1 = arith.constant 0 : i32
    %c0_i32_2 = arith.constant 0 : i32
    return %c0_i32, %c0_i32_0, %c0_i32_1 : i32, i32, i32
  }
  func.func @transform_6(%arg0: i32) -> (i32, i32) {
    %c0_i32 = arith.constant 0 : i32
    %c0_i32_0 = arith.constant 0 : i32
    %c0_i32_1 = arith.constant 0 : i32
    return %c0_i32, %c0_i32_0 : i32, i32
  }
  func.func @transform_7(%arg0: i32) -> (i32, i32) {
    %c0_i32 = arith.constant 0 : i32
    %c0_i32_0 = arith.constant 0 : i32
    %c0_i32_1 = arith.constant 0 : i32
    return %c0_i32, %c0_i32_0 : i32, i32
  }
  func.func @transform_8(%arg0: i32) -> (i32, i32) {
    %c0_i32 = arith.constant 0 : i32
    %c0_i32_0 = arith.constant 0 : i32
    %c0_i32_1 = arith.constant 0 : i32
    return %c0_i32, %c0_i32_0 : i32, i32
  }
  func.func @transform_9(%arg0: i32) -> (i32, i32) {
    %c0_i32 = arith.constant 0 : i32
    %c0_i32_0 = arith.constant 0 : i32
    %c0_i32_1 = arith.constant 0 : i32
    return %c0_i32, %c0_i32_0 : i32, i32
  }
  func.func @transform_10(%arg0: i32) -> (i32, i32) {
    %c0_i32 = arith.constant 0 : i32
    %c0_i32_0 = arith.constant 0 : i32
    %c0_i32_1 = arith.constant 0 : i32
    return %c0_i32, %c0_i32_0 : i32, i32
  }
  func.func @transform_11(%arg0: i32) -> (i32, i32) {
    %c0_i32 = arith.constant 0 : i32
    %c0_i32_0 = arith.constant 0 : i32
    %c0_i32_1 = arith.constant 0 : i32
    return %c0_i32, %c0_i32_0 : i32, i32
  }
  func.func @transform_12(%arg0: i32) -> (i32, i32) {
    %c0_i32 = arith.constant 0 : i32
    %c0_i32_0 = arith.constant 0 : i32
    %c0_i32_1 = arith.constant 0 : i32
    return %c0_i32, %c0_i32_0 : i32, i32
  }
  func.func @transform_13(%arg0: i32) -> (i32, i32) {
    %c0_i32 = arith.constant 0 : i32
    %c0_i32_0 = arith.constant 0 : i32
    %c0_i32_1 = arith.constant 0 : i32
    return %c0_i32, %c0_i32_0 : i32, i32
  }
  func.func @transform_14(%arg0: i32) -> (i32, i32) {
    %c0_i32 = arith.constant 0 : i32
    %c0_i32_0 = arith.constant 0 : i32
    %c0_i32_1 = arith.constant 0 : i32
    return %c0_i32, %c0_i32_0 : i32, i32
  }
  func.func @transform_15(%arg0: i32) -> (i32, i32) {
    %c0_i32 = arith.constant 0 : i32
    %c0_i32_0 = arith.constant 0 : i32
    %c0_i32_1 = arith.constant 0 : i32
    return %c0_i32, %c0_i32_0 : i32, i32
  }
  func.func @transform_16(%arg0: i32) -> (i32, i32) {
    %c0_i32 = arith.constant 0 : i32
    %c0_i32_0 = arith.constant 0 : i32
    %c0_i32_1 = arith.constant 0 : i32
    return %c0_i32, %c0_i32_0 : i32, i32
  }
  func.func @transform_17(%arg0: i32) -> (i32, i32) {
    %c0_i32 = arith.constant 0 : i32
    %c0_i32_0 = arith.constant 0 : i32
    %c0_i32_1 = arith.constant 0 : i32
    return %c0_i32, %c0_i32_0 : i32, i32
  }
  func.func @transform_18(%arg0: i32) -> (i32, i32) {
    %c0_i32 = arith.constant 0 : i32
    %c0_i32_0 = arith.constant 0 : i32
    %c0_i32_1 = arith.constant 0 : i32
    return %c0_i32, %c0_i32_0 : i32, i32
  }
  func.func @transform_19(%arg0: i32) -> (i32, i32, i32) {
    %c0_i32 = arith.constant 0 : i32
    %c0_i32_0 = arith.constant 0 : i32
    %c0_i32_1 = arith.constant 0 : i32
    return %arg0, %c0_i32, %c0_i32_0 : i32, i32, i32
  }
}

</mosaic_0001>

<llo_original>
// kernel: lenet5_forward.1
$region0: #{lenet5_forward.1}
  #allocation0 [shape = 'u32[]', space=smem, size = 0x4, offset = 0x4, fixed_abs, tag = 'smem constant byte address 0x4 - core index']
  #allocation1 [shape = 'u32[144,128]{1,0:T(1,128)}', space=vmem, size = 0x12000, scoped, tag = 'internal scratch']
  %s0 = inlined_call_operand.vmem [shape: f32[2,32,32], index: 0, kind: input, shape index: {}]
  %s1 = inlined_call_operand.vmem [shape: f32[5,32,168], index: 1, kind: input, shape index: {}]
  %s2 = inlined_call_operand.vmem [shape: f32[1,168], index: 2, kind: input, shape index: {}]
  %s3 = inlined_call_operand.vmem [shape: f32[5,84,160], index: 3, kind: input, shape index: {}]
  %s4 = inlined_call_operand.vmem [shape: f32[1,160], index: 4, kind: input, shape index: {}]
  %s5 = inlined_call_operand.vmem [shape: f32[5,80,120], index: 5, kind: input, shape index: {}]
  %s6 = inlined_call_operand.vmem [shape: f32[1,120], index: 6, kind: input, shape index: {}]
  %s7 = inlined_call_operand.vmem [shape: f32[14,28], index: 7, kind: input, shape index: {}]
  %s8 = inlined_call_operand.vmem [shape: f32[14,28], index: 8, kind: input, shape index: {}]
  %s9 = inlined_call_operand.vmem [shape: f32[168,84], index: 9, kind: input, shape index: {}]
  %s10 = inlined_call_operand.vmem [shape: f32[168,84], index: 10, kind: input, shape index: {}]
  %s11 = inlined_call_operand.vmem [shape: f32[5,10], index: 11, kind: input, shape index: {}]
  %s12 = inlined_call_operand.vmem [shape: f32[5,10], index: 12, kind: input, shape index: {}]
  %s13 = inlined_call_operand.vmem [shape: f32[160,80], index: 13, kind: input, shape index: {}]
  %s14 = inlined_call_operand.vmem [shape: f32[160,80], index: 14, kind: input, shape index: {}]
  %s15 = inlined_call_operand.vmem [shape: f32[120,84], index: 15, kind: input, shape index: {}]
  %s16 = inlined_call_operand.vmem [shape: f32[1,84], index: 16, kind: input, shape index: {}]
  %s17 = inlined_call_operand.vmem [shape: f32[84,128], index: 17, kind: input, shape index: {}]
  %s18 = inlined_call_operand.vmem [shape: f32[1,128], index: 18, kind: input, shape index: {}]
  %s19 = inlined_call_operand.hbm [shape: f32[2,1,128], index: 19, kind: output, shape index: {}]
  %s20 = sld [smem:[#allocation0]]
  $region86: #{lenet5_forward.1} parent=0
    _
  %s22 = ssub.s32 1, %s20
  %s23 = scalar_select 0, %s22, %s20
  $region1: #{lenet5_forward.1} parent=0
    #allocation2 [shape = 'u8[1024]{0}', space=vmem, size = 0x400, scoped, tag = 'output window, operand 0, single buffered']
    #allocation3 [shape = 's32[1]{0}', space=sflag, size = 0x4, scoped, tag = 'scoped memory for lenet5_forward.1']
    %24 = vsyncpa [#allocation3], 0
    // Predicated region
    $region2: #{lenet5_forward.1} parent=1 // pred_check
      _
    $region3: #{lenet5_forward.1} parent=1 // pred_check_branch
      %26 = sbr.rel (0) target = $region5
    $region4: #{lenet5_forward.1} parent=1 // pred_region
      _
    $region5: #{lenet5_forward.1} parent=1 // pred_fallthru
      _
    // Predicated region
    $region6: #{lenet5_forward.1} parent=1 // pred_check
      _
    $region7: #{lenet5_forward.1} parent=1 // pred_check_branch
      %28 = sbr.rel (0) target = $region9
    $region8: #{lenet5_forward.1} parent=1 // pred_region
      _
    $region9: #{lenet5_forward.1} parent=1 // pred_fallthru
      _
    // Predicated region
    $region10: #{lenet5_forward.1} parent=1 // pred_check
      _
    $region11: #{lenet5_forward.1} parent=1 // pred_check_branch
      %30 = sbr.rel (0) target = $region13
    $region12: #{lenet5_forward.1} parent=1 // pred_region
      _
    $region13: #{lenet5_forward.1} parent=1 // pred_fallthru
      _
    // Predicated region
    $region14: #{lenet5_forward.1} parent=1 // pred_check
      _
    $region15: #{lenet5_forward.1} parent=1 // pred_check_branch
      %32 = sbr.rel (0) target = $region17
    $region16: #{lenet5_forward.1} parent=1 // pred_region
      _
    $region17: #{lenet5_forward.1} parent=1 // pred_fallthru
      _
    // Predicated region
    $region18: #{lenet5_forward.1} parent=1 // pred_check
      _
    $region19: #{lenet5_forward.1} parent=1 // pred_check_branch
      %34 = sbr.rel (0) target = $region21
    $region20: #{lenet5_forward.1} parent=1 // pred_region
      _
    $region21: #{lenet5_forward.1} parent=1 // pred_fallthru
      _
    // Predicated region
    $region22: #{lenet5_forward.1} parent=1 // pred_check
      _
    $region23: #{lenet5_forward.1} parent=1 // pred_check_branch
      %36 = sbr.rel (0) target = $region25
    $region24: #{lenet5_forward.1} parent=1 // pred_region
      _
    $region25: #{lenet5_forward.1} parent=1 // pred_fallthru
      _
    // Predicated region
    $region26: #{lenet5_forward.1} parent=1 // pred_check
      _
    $region27: #{lenet5_forward.1} parent=1 // pred_check_branch
      %38 = sbr.rel (0) target = $region29
    $region28: #{lenet5_forward.1} parent=1 // pred_region
      _
    $region29: #{lenet5_forward.1} parent=1 // pred_fallthru
      _
    // Predicated region
    $region30: #{lenet5_forward.1} parent=1 // pred_check
      _
    $region31: #{lenet5_forward.1} parent=1 // pred_check_branch
      %40 = sbr.rel (0) target = $region33
    $region32: #{lenet5_forward.1} parent=1 // pred_region
      _
    $region33: #{lenet5_forward.1} parent=1 // pred_fallthru
      _
    // Predicated region
    $region34: #{lenet5_forward.1} parent=1 // pred_check
      _
    $region35: #{lenet5_forward.1} parent=1 // pred_check_branch
      %42 = sbr.rel (0) target = $region37
    $region36: #{lenet5_forward.1} parent=1 // pred_region
      _
    $region37: #{lenet5_forward.1} parent=1 // pred_fallthru
      _
    // Predicated region
    $region38: #{lenet5_forward.1} parent=1 // pred_check
      _
    $region39: #{lenet5_forward.1} parent=1 // pred_check_branch
      %44 = sbr.rel (0) target = $region41
    $region40: #{lenet5_forward.1} parent=1 // pred_region
      _
    $region41: #{lenet5_forward.1} parent=1 // pred_fallthru
      _
    // Predicated region
    $region42: #{lenet5_forward.1} parent=1 // pred_check
      _
    $region43: #{lenet5_forward.1} parent=1 // pred_check_branch
      %46 = sbr.rel (0) target = $region45
    $region44: #{lenet5_forward.1} parent=1 // pred_region
      _
    $region45: #{lenet5_forward.1} parent=1 // pred_fallthru
      _
    // Predicated region
    $region46: #{lenet5_forward.1} parent=1 // pred_check
      _
    $region47: #{lenet5_forward.1} parent=1 // pred_check_branch
      %48 = sbr.rel (0) target = $region49
    $region48: #{lenet5_forward.1} parent=1 // pred_region
      _
    $region49: #{lenet5_forward.1} parent=1 // pred_fallthru
      _
    // Predicated region
    $region50: #{lenet5_forward.1} parent=1 // pred_check
      _
    $region51: #{lenet5_forward.1} parent=1 // pred_check_branch
      %50 = sbr.rel (0) target = $region53
    $region52: #{lenet5_forward.1} parent=1 // pred_region
      _
    $region53: #{lenet5_forward.1} parent=1 // pred_fallthru
      _
    // Predicated region
    $region54: #{lenet5_forward.1} parent=1 // pred_check
      _
    $region55: #{lenet5_forward.1} parent=1 // pred_check_branch
      %52 = sbr.rel (0) target = $region57
    $region56: #{lenet5_forward.1} parent=1 // pred_region
      _
    $region57: #{lenet5_forward.1} parent=1 // pred_fallthru
      _
    // Predicated region
    $region58: #{lenet5_forward.1} parent=1 // pred_check
      _
    $region59: #{lenet5_forward.1} parent=1 // pred_check_branch
      %54 = sbr.rel (0) target = $region61
    $region60: #{lenet5_forward.1} parent=1 // pred_region
      _
    $region61: #{lenet5_forward.1} parent=1 // pred_fallthru
      _
    // Predicated region
    $region62: #{lenet5_forward.1} parent=1 // pred_check
      _
    $region63: #{lenet5_forward.1} parent=1 // pred_check_branch
      %56 = sbr.rel (0) target = $region65
    $region64: #{lenet5_forward.1} parent=1 // pred_region
      _
    $region65: #{lenet5_forward.1} parent=1 // pred_fallthru
      _
    // Predicated region
    $region66: #{lenet5_forward.1} parent=1 // pred_check
      _
    $region67: #{lenet5_forward.1} parent=1 // pred_check_branch
      %58 = sbr.rel (0) target = $region69
    $region68: #{lenet5_forward.1} parent=1 // pred_region
      _
    $region69: #{lenet5_forward.1} parent=1 // pred_fallthru
      _
    // Predicated region
    $region70: #{lenet5_forward.1} parent=1 // pred_check
      _
    $region71: #{lenet5_forward.1} parent=1 // pred_check_branch
      %60 = sbr.rel (0) target = $region73
    $region72: #{lenet5_forward.1} parent=1 // pred_region
      _
    $region73: #{lenet5_forward.1} parent=1 // pred_fallthru
      _
    // Predicated region
    $region74: #{lenet5_forward.1} parent=1 // pred_check
      _
    $region75: #{lenet5_forward.1} parent=1 // pred_check_branch
      %62 = sbr.rel (0) target = $region77
    $region76: #{lenet5_forward.1} parent=1 // pred_region
      _
    $region77: #{lenet5_forward.1} parent=1 // pred_fallthru
      _
    %v63 = vld [vmem:[%s0] sm:$0xff]
    %v64 = vld [vmem:[%s0 + $0x8] sm:$0xff]
    %v65 = vld [vmem:[%s0 + $0x10] sm:$0xff]
    %v66 = vld [vmem:[%s0 + $0x18] sm:$0xff]
    %v67 = vld [vmem:[%s1] sm:$0xff]
    %v68 = vld [vmem:[%s1 + $0x8] sm:$0xff]
    %v69 = vld [vmem:[%s1 + $0x10] sm:$0xff]
    %v70 = vld [vmem:[%s1 + $0x18] sm:$0xff]
    %v71 = vld [vmem:[%s1 + $0x20] sm:$0xff]
    %v72 = vld [vmem:[%s1 + $0x28] sm:$0xff]
    %v73 = vld [vmem:[%s1 + $0x30] sm:$0xff]
    %v74 = vld [vmem:[%s1 + $0x38] sm:$0xff]
    %s75 = scalar_lea.vmem %s1, 64
    %v76 = vld [vmem:[%s75] sm:$0xff]
    %v77 = vld [vmem:[%s75 + $0x8] sm:$0xff]
    %v78 = vld [vmem:[%s75 + $0x10] sm:$0xff]
    %v79 = vld [vmem:[%s75 + $0x18] sm:$0xff]
    %v80 = vld [vmem:[%s75 + $0x20] sm:$0xff]
    %v81 = vld [vmem:[%s75 + $0x28] sm:$0xff]
    %v82 = vld [vmem:[%s75 + $0x30] sm:$0xff]
    %v83 = vld [vmem:[%s75 + $0x38] sm:$0xff]
    %vm88 = vcmask 1046528
    %v89 = vrot.slane %v63, 1
    %v90 = vrot.slane %v64, 1
    %v91 = vsel %vm88, %v89, %v90
    %v92 = vrot.slane %v65, 1
    %v93 = vsel %vm88, %v90, %v92
    %v94 = vrot.slane %v66, 1
    %v95 = vsel %vm88, %v92, %v94
    %vm96 = vcmask 261120
    %v97 = vsel %vm96, %v91, 0
    %v99 = vsel %vm96, %v93, 0
    %v101 = vsel %vm96, %v95, 0
    %v103 = vsel %vm96, %v94, 0
    %105 = vmatprep.subr.mxu0 %v77
    %106 = vmatpush1.msra.mxu0 %v76
    %107 = vmatprep.subr.mxu0 %v79
    %108 = vmatpush1.msra.mxu0 %v78
    %109 = vmatprep.subr.mxu0 %v81
    %110 = vmatpush1.msra.mxu0 %v80
    %111 = vmatprep.subr.mxu0 %v83
    %112 = vmatpush1.msra.mxu0 %v82
    %113 = vmatprep.subr.mxu0 0.0
    %114 = vmatpush1.msra.mxu0 0.0
    %115 = vmatprep.subr.mxu0 0.0
    %116 = vmatpush1.msra.mxu0 0.0
    %117 = vmatprep.subr.mxu0 0.0
    %118 = vmatpush1.msra.mxu0 0.0
    %119 = vmatprep.subr.mxu0 0.0
    %120 = vmatpush1.msra.mxu0 0.0
    %121 = vmatprep.subr.mxu0 0.0
    %122 = vmatpush1.msra.mxu0 0.0
    %123 = vmatprep.subr.mxu0 0.0
    %124 = vmatpush1.msra.mxu0 0.0
    %125 = vmatprep.subr.mxu0 0.0
    %126 = vmatpush1.msra.mxu0 0.0
    %127 = vmatprep.subr.mxu0 0.0
    %128 = vmatpush1.msra.mxu0 0.0
    %129 = vmatprep.subr.mxu0 0.0
    %130 = vmatpush1.msra.mxu0 0.0
    %131 = vmatprep.subr.mxu0 0.0
    %132 = vmatpush1.msra.mxu0 0.0
    %133 = vmatprep.subr.mxu0 0.0
    %134 = vmatpush1.msra.mxu0 0.0
    %135 = vmatprep.subr.mxu0 0.0
    %136 = vmatpush1.msra.mxu0 0.0
    %137 = vmatprep.subr.mxu0 0.0
    %138 = vmatpush1.msra.mxu0 0.0
    %139 = vmatprep.subr.mxu0 0.0
    %140 = vmatpush1.msra.mxu0 0.0
    %141 = vmatprep.subr.mxu0 0.0
    %142 = vmatpush1.msra.mxu0 0.0
    %143 = vmatprep.subr.mxu0 0.0
    %144 = vmatpush1.msra.mxu0 0.0
    %145 = vmatprep.subr.mxu0 0.0
    %146 = vmatpush1.msra.mxu0 0.0
    %147 = vmatprep.subr.mxu0 0.0
    %148 = vmatpush1.msra.mxu0 0.0
    %149 = vmatprep.subr.mxu0 0.0
    %150 = vmatpush1.msra.mxu0 0.0
    %151 = vmatprep.subr.mxu0 0.0
    %152 = vmatpush1.msra.mxu0 0.0
    %153 = vmatprep.subr.mxu0 0.0
    %154 = vmatpush1.msra.mxu0 0.0
    %155 = vmatprep.subr.mxu0 0.0
    %156 = vmatpush1.msra.mxu0 0.0
    %157 = vmatprep.subr.mxu0 0.0
    %158 = vmatpush1.msra.mxu0 0.0
    %159 = vmatprep.subr.mxu0 0.0
    %160 = vmatpush1.msra.mxu0 0.0
    %161 = vmatprep.subr.mxu0 0.0
    %162 = vmatpush1.msra.mxu0 0.0
    %163 = vmatprep.subr.mxu0 0.0
    %164 = vmatpush1.msra.mxu0 0.0
    %165 = vmatprep.subr.mxu0 0.0
    %166 = vmatpush1.msra.mxu0 0.0
    %167 = vmatprep.subr.mxu0 0.0
    %168 = vmatpush1.msra.mxu0 0.0
    %169 = vmatprep.mubr.f32.mxu0 0.0
    %170 = vmatmul.mubr.f32.gmra.mrb[0].mxu0 %v97
    %v171 = vpop.f32.mrb[0].mxu0
    %v172 = vadd.f32 0.0, %v171
    %v173 = vpop.f32.mrb[0].mxu0
    %v174 = vadd.f32 0.0, %v173
    %175 = vmatprep.mubr.f32.mxu0 0.0
    %176 = vmatmul.mubr.f32.gmra.mrb[0].mxu0 %v99
    %v177 = vpop.f32.mrb[0].mxu0
    %v178 = vadd.f32 0.0, %v177
    %v179 = vpop.f32.mrb[0].mxu0
    %v180 = vadd.f32 0.0, %v179
    %181 = vmatprep.mubr.f32.mxu0 0.0
    %182 = vmatmul.mubr.f32.gmra.mrb[0].mxu0 %v101
    %v183 = vpop.f32.mrb[0].mxu0
    %v184 = vadd.f32 0.0, %v183
    %v185 = vpop.f32.mrb[0].mxu0
    %v186 = vadd.f32 0.0, %v185
    %187 = vmatprep.mubr.f32.mxu0 0.0
    %188 = vmatmul.mubr.f32.gmra.mrb[0].mxu0 %v103
    %v189 = vpop.f32.mrb[0].mxu0
    %v190 = vadd.f32 0.0, %v189
    %v191 = vpop.f32.mrb[0].mxu0
    %v192 = vadd.f32 0.0, %v191
    %193 = vdwg.mxu0
    %v194 = vsel %vm96, %v63, 0
    %v196 = vsel %vm96, %v64, 0
    %v198 = vsel %vm96, %v65, 0
    %v200 = vsel %vm96, %v66, 0
    %202 = vmatprep.subr.mxu0 %v68
    %203 = vmatpush1.msra.mxu0 %v67
    %204 = vmatprep.subr.mxu0 %v70
    %205 = vmatpush1.msra.mxu0 %v69
    %206 = vmatprep.subr.mxu0 %v72
    %207 = vmatpush1.msra.mxu0 %v71
    %208 = vmatprep.subr.mxu0 %v74
    %209 = vmatpush1.msra.mxu0 %v73
    %210 = vmatprep.subr.mxu0 0.0
    %211 = vmatpush1.msra.mxu0 0.0
    %212 = vmatprep.subr.mxu0 0.0
    %213 = vmatpush1.msra.mxu0 0.0
    %214 = vmatprep.subr.mxu0 0.0
    %215 = vmatpush1.msra.mxu0 0.0
    %216 = vmatprep.subr.mxu0 0.0
    %217 = vmatpush1.msra.mxu0 0.0
    %218 = vmatprep.subr.mxu0 0.0
    %219 = vmatpush1.msra.mxu0 0.0
    %220 = vmatprep.subr.mxu0 0.0
    %221 = vmatpush1.msra.mxu0 0.0
    %222 = vmatprep.subr.mxu0 0.0
    %223 = vmatpush1.msra.mxu0 0.0
    %224 = vmatprep.subr.mxu0 0.0
    %225 = vmatpush1.msra.mxu0 0.0
    %226 = vmatprep.subr.mxu0 0.0
    %227 = vmatpush1.msra.mxu0 0.0
    %228 = vmatprep.subr.mxu0 0.0
    %229 = vmatpush1.msra.mxu0 0.0
    %230 = vmatprep.subr.mxu0 0.0
    %231 = vmatpush1.msra.mxu0 0.0
    %232 = vmatprep.subr.mxu0 0.0
    %233 = vmatpush1.msra.mxu0 0.0
    %234 = vmatprep.subr.mxu0 0.0
    %235 = vmatpush1.msra.mxu0 0.0
    %236 = vmatprep.subr.mxu0 0.0
    %237 = vmatpush1.msra.mxu0 0.0
    %238 = vmatprep.subr.mxu0 0.0
    %239 = vmatpush1.msra.mxu0 0.0
    %240 = vmatprep.subr.mxu0 0.0
    %241 = vmatpush1.msra.mxu0 0.0
    %242 = vmatprep.subr.mxu0 0.0
    %243 = vmatpush1.msra.mxu0 0.0
    %244 = vmatprep.subr.mxu0 0.0
    %245 = vmatpush1.msra.mxu0 0.0
    %246 = vmatprep.subr.mxu0 0.0
    %247 = vmatpush1.msra.mxu0 0.0
    %248 = vmatprep.subr.mxu0 0.0
    %249 = vmatpush1.msra.mxu0 0.0
    %250 = vmatprep.subr.mxu0 0.0
    %251 = vmatpush1.msra.mxu0 0.0
    %252 = vmatprep.subr.mxu0 0.0
    %253 = vmatpush1.msra.mxu0 0.0
    %254 = vmatprep.subr.mxu0 0.0
    %255 = vmatpush1.msra.mxu0 0.0
    %256 = vmatprep.subr.mxu0 0.0
    %257 = vmatpush1.msra.mxu0 0.0
    %258 = vmatprep.subr.mxu0 0.0
    %259 = vmatpush1.msra.mxu0 0.0
    %260 = vmatprep.subr.mxu0 0.0
    %261 = vmatpush1.msra.mxu0 0.0
    %262 = vmatprep.subr.mxu0 0.0
    %263 = vmatpush1.msra.mxu0 0.0
    %264 = vmatprep.subr.mxu0 0.0
    %265 = vmatpush1.msra.mxu0 0.0
    %266 = vmatprep.mubr.f32.mxu0 0.0
    %267 = vmatmul.mubr.f32.gmra.mrb[0].mxu0 %v194
    %v268 = vpop.f32.mrb[0].mxu0
    %v269 = vadd.f32 %v172, %v268
    %v270 = vpop.f32.mrb[0].mxu0
    %v271 = vadd.f32 %v174, %v270
    %272 = vmatprep.mubr.f32.mxu0 0.0
    %273 = vmatmul.mubr.f32.gmra.mrb[0].mxu0 %v196
    %v274 = vpop.f32.mrb[0].mxu0
    %v275 = vadd.f32 %v178, %v274
    %v276 = vpop.f32.mrb[0].mxu0
    %v277 = vadd.f32 %v180, %v276
    %278 = vmatprep.mubr.f32.mxu0 0.0
    %279 = vmatmul.mubr.f32.gmra.mrb[0].mxu0 %v198
    %v280 = vpop.f32.mrb[0].mxu0
    %v281 = vadd.f32 %v184, %v280
    %v282 = vpop.f32.mrb[0].mxu0
    %v283 = vadd.f32 %v186, %v282
    %284 = vmatprep.mubr.f32.mxu0 0.0
    %285 = vmatmul.mubr.f32.gmra.mrb[0].mxu0 %v200
    %v286 = vpop.f32.mrb[0].mxu0
    %v287 = vadd.f32 %v190, %v286
    %v288 = vpop.f32.mrb[0].mxu0
    %v289 = vadd.f32 %v192, %v288
    %290 = vdwg.mxu0
    %s291 = scalar_lea.vmem %s1, 128
    %v292 = vld [vmem:[%s291] sm:$0xff]
    %v293 = vld [vmem:[%s291 + $0x8] sm:$0xff]
    %v294 = vld [vmem:[%s291 + $0x10] sm:$0xff]
    %v295 = vld [vmem:[%s291 + $0x18] sm:$0xff]
    %v296 = vld [vmem:[%s291 + $0x20] sm:$0xff]
    %v297 = vld [vmem:[%s291 + $0x28] sm:$0xff]
    %v298 = vld [vmem:[%s291 + $0x30] sm:$0xff]
    %v299 = vld [vmem:[%s291 + $0x38] sm:$0xff]
    %vm300 = vcmask 1045504
    %v301 = vrot.slane %v63, 2
    %v302 = vrot.slane %v64, 2
    %v303 = vsel %vm300, %v301, %v302
    %v304 = vrot.slane %v65, 2
    %v305 = vsel %vm300, %v302, %v304
    %v306 = vrot.slane %v66, 2
    %v307 = vsel %vm300, %v304, %v306
    %v308 = vsel %vm96, %v303, 0
    %v310 = vsel %vm96, %v305, 0
    %v312 = vsel %vm96, %v307, 0
    %v314 = vsel %vm96, %v306, 0
    %316 = vmatprep.subr.mxu0 %v293
    %317 = vmatpush1.msra.mxu0 %v292
    %318 = vmatprep.subr.mxu0 %v295
    %319 = vmatpush1.msra.mxu0 %v294
    %320 = vmatprep.subr.mxu0 %v297
    %321 = vmatpush1.msra.mxu0 %v296
    %322 = vmatprep.subr.mxu0 %v299
    %323 = vmatpush1.msra.mxu0 %v298
    %324 = vmatprep.subr.mxu0 0.0
    %325 = vmatpush1.msra.mxu0 0.0
    %326 = vmatprep.subr.mxu0 0.0
    %327 = vmatpush1.msra.mxu0 0.0
    %328 = vmatprep.subr.mxu0 0.0
    %329 = vmatpush1.msra.mxu0 0.0
    %330 = vmatprep.subr.mxu0 0.0
    %331 = vmatpush1.msra.mxu0 0.0
    %332 = vmatprep.subr.mxu0 0.0
    %333 = vmatpush1.msra.mxu0 0.0
    %334 = vmatprep.subr.mxu0 0.0
    %335 = vmatpush1.msra.mxu0 0.0
    %336 = vmatprep.subr.mxu0 0.0
    %337 = vmatpush1.msra.mxu0 0.0
    %338 = vmatprep.subr.mxu0 0.0
    %339 = vmatpush1.msra.mxu0 0.0
    %340 = vmatprep.subr.mxu0 0.0
    %341 = vmatpush1.msra.mxu0 0.0
    %342 = vmatprep.subr.mxu0 0.0
    %343 = vmatpush1.msra.mxu0 0.0
    %344 = vmatprep.subr.mxu0 0.0
    %345 = vmatpush1.msra.mxu0 0.0
    %346 = vmatprep.subr.mxu0 0.0
    %347 = vmatpush1.msra.mxu0 0.0
    %348 = vmatprep.subr.mxu0 0.0
    %349 = vmatpush1.msra.mxu0 0.0
    %350 = vmatprep.subr.mxu0 0.0
    %351 = vmatpush1.msra.mxu0 0.0
    %352 = vmatprep.subr.mxu0 0.0
    %353 = vmatpush1.msra.mxu0 0.0
    %354 = vmatprep.subr.mxu0 0.0
    %355 = vmatpush1.msra.mxu0 0.0
    %356 = vmatprep.subr.mxu0 0.0
    %357 = vmatpush1.msra.mxu0 0.0
    %358 = vmatprep.subr.mxu0 0.0
    %359 = vmatpush1.msra.mxu0 0.0
    %360 = vmatprep.subr.mxu0 0.0
    %361 = vmatpush1.msra.mxu0 0.0
    %362 = vmatprep.subr.mxu0 0.0
    %363 = vmatpush1.msra.mxu0 0.0
    %364 = vmatprep.subr.mxu0 0.0
    %365 = vmatpush1.msra.mxu0 0.0
    %366 = vmatprep.subr.mxu0 0.0
    %367 = vmatpush1.msra.mxu0 0.0
    %368 = vmatprep.subr.mxu0 0.0
    %369 = vmatpush1.msra.mxu0 0.0
    %370 = vmatprep.subr.mxu0 0.0
    %371 = vmatpush1.msra.mxu0 0.0
    %372 = vmatprep.subr.mxu0 0.0
    %373 = vmatpush1.msra.mxu0 0.0
    %374 = vmatprep.subr.mxu0 0.0
    %375 = vmatpush1.msra.mxu0 0.0
    %376 = vmatprep.subr.mxu0 0.0
    %377 = vmatpush1.msra.mxu0 0.0
    %378 = vmatprep.subr.mxu0 0.0
    %379 = vmatpush1.msra.mxu0 0.0
    %380 = vmatprep.mubr.f32.mxu0 0.0
    %381 = vmatmul.mubr.f32.gmra.mrb[0].mxu0 %v308
    %v382 = vpop.f32.mrb[0].mxu0
    %v383 = vadd.f32 0.0, %v382
    %v384 = vpop.f32.mrb[0].mxu0
    %v385 = vadd.f32 0.0, %v384
    %386 = vmatprep.mubr.f32.mxu0 0.0
    %387 = vmatmul.mubr.f32.gmra.mrb[0].mxu0 %v310
    %v388 = vpop.f32.mrb[0].mxu0
    %v389 = vadd.f32 0.0, %v388
    %v390 = vpop.f32.mrb[0].mxu0
    %v391 = vadd.f32 0.0, %v390
    %392 = vmatprep.mubr.f32.mxu0 0.0
    %393 = vmatmul.mubr.f32.gmra.mrb[0].mxu0 %v312
    %v394 = vpop.f32.mrb[0].mxu0
    %v395 = vadd.f32 0.0, %v394
    %v396 = vpop.f32.mrb[0].mxu0
    %v397 = vadd.f32 0.0, %v396
    %398 = vmatprep.mubr.f32.mxu0 0.0
    %399 = vmatmul.mubr.f32.gmra.mrb[0].mxu0 %v314
    %v400 = vpop.f32.mrb[0].mxu0
    %v401 = vadd.f32 0.0, %v400
    %v402 = vpop.f32.mrb[0].mxu0
    %v403 = vadd.f32 0.0, %v402
    %404 = vdwg.mxu0
    %v405 = vadd.f32 %v269, %v383
    %v406 = vadd.f32 %v271, %v385
    %v407 = vadd.f32 %v275, %v389
    %v408 = vadd.f32 %v277, %v391
    %v409 = vadd.f32 %v281, %v395
    %v410 = vadd.f32 %v283, %v397
    %v411 = vadd.f32 %v287, %v401
    %v412 = vadd.f32 %v289, %v403
    %s413 = scalar_lea.vmem %s1, 192
    %v414 = vld [vmem:[%s413] sm:$0xff]
    %v415 = vld [vmem:[%s413 + $0x8] sm:$0xff]
    %v416 = vld [vmem:[%s413 + $0x10] sm:$0xff]
    %v417 = vld [vmem:[%s413 + $0x18] sm:$0xff]
    %v418 = vld [vmem:[%s413 + $0x20] sm:$0xff]
    %v419 = vld [vmem:[%s413 + $0x28] sm:$0xff]
    %v420 = vld [vmem:[%s413 + $0x30] sm:$0xff]
    %v421 = vld [vmem:[%s413 + $0x38] sm:$0xff]
    %vm422 = vcmask 1044480
    %v423 = vrot.slane %v63, 3
    %v424 = vrot.slane %v64, 3
    %v425 = vsel %vm422, %v423, %v424
    %v426 = vrot.slane %v65, 3
    %v427 = vsel %vm422, %v424, %v426
    %v428 = vrot.slane %v66, 3
    %v429 = vsel %vm422, %v426, %v428
    %v430 = vsel %vm96, %v425, 0
    %v432 = vsel %vm96, %v427, 0
    %v434 = vsel %vm96, %v429, 0
    %v436 = vsel %vm96, %v428, 0
    %438 = vmatprep.subr.mxu0 %v415
    %439 = vmatpush1.msra.mxu0 %v414
    %440 = vmatprep.subr.mxu0 %v417
    %441 = vmatpush1.msra.mxu0 %v416
    %442 = vmatprep.subr.mxu0 %v419
    %443 = vmatpush1.msra.mxu0 %v418
    %444 = vmatprep.subr.mxu0 %v421
    %445 = vmatpush1.msra.mxu0 %v420
    %446 = vmatprep.subr.mxu0 0.0
    %447 = vmatpush1.msra.mxu0 0.0
    %448 = vmatprep.subr.mxu0 0.0
    %449 = vmatpush1.msra.mxu0 0.0
    %450 = vmatprep.subr.mxu0 0.0
    %451 = vmatpush1.msra.mxu0 0.0
    %452 = vmatprep.subr.mxu0 0.0
    %453 = vmatpush1.msra.mxu0 0.0
    %454 = vmatprep.subr.mxu0 0.0
    %455 = vmatpush1.msra.mxu0 0.0
    %456 = vmatprep.subr.mxu0 0.0
    %457 = vmatpush1.msra.mxu0 0.0
    %458 = vmatprep.subr.mxu0 0.0
    %459 = vmatpush1.msra.mxu0 0.0
    %460 = vmatprep.subr.mxu0 0.0
    %461 = vmatpush1.msra.mxu0 0.0
    %462 = vmatprep.subr.mxu0 0.0
    %463 = vmatpush1.msra.mxu0 0.0
    %464 = vmatprep.subr.mxu0 0.0
    %465 = vmatpush1.msra.mxu0 0.0
    %466 = vmatprep.subr.mxu0 0.0
    %467 = vmatpush1.msra.mxu0 0.0
    %468 = vmatprep.subr.mxu0 0.0
    %469 = vmatpush1.msra.mxu0 0.0
    %470 = vmatprep.subr.mxu0 0.0
    %471 = vmatpush1.msra.mxu0 0.0
    %472 = vmatprep.subr.mxu0 0.0
    %473 = vmatpush1.msra.mxu0 0.0
    %474 = vmatprep.subr.mxu0 0.0
    %475 = vmatpush1.msra.mxu0 0.0
    %476 = vmatprep.subr.mxu0 0.0
    %477 = vmatpush1.msra.mxu0 0.0
    %478 = vmatprep.subr.mxu0 0.0
    %479 = vmatpush1.msra.mxu0 0.0
    %480 = vmatprep.subr.mxu0 0.0
    %481 = vmatpush1.msra.mxu0 0.0
    %482 = vmatprep.subr.mxu0 0.0
    %483 = vmatpush1.msra.mxu0 0.0
    %484 = vmatprep.subr.mxu0 0.0
    %485 = vmatpush1.msra.mxu0 0.0
    %486 = vmatprep.subr.mxu0 0.0
    %487 = vmatpush1.msra.mxu0 0.0
    %488 = vmatprep.subr.mxu0 0.0
    %489 = vmatpush1.msra.mxu0 0.0
    %490 = vmatprep.subr.mxu0 0.0
    %491 = vmatpush1.msra.mxu0 0.0
    %492 = vmatprep.subr.mxu0 0.0
    %493 = vmatpush1.msra.mxu0 0.0
    %494 = vmatprep.subr.mxu0 0.0
    %495 = vmatpush1.msra.mxu0 0.0
    %496 = vmatprep.subr.mxu0 0.0
    %497 = vmatpush1.msra.mxu0 0.0
    %498 = vmatprep.subr.mxu0 0.0
    %499 = vmatpush1.msra.mxu0 0.0
    %500 = vmatprep.subr.mxu0 0.0
    %501 = vmatpush1.msra.mxu0 0.0
    %502 = vmatprep.mubr.f32.mxu0 0.0
    %503 = vmatmul.mubr.f32.gmra.mrb[0].mxu0 %v430
    %v504 = vpop.f32.mrb[0].mxu0
    %v505 = vadd.f32 0.0, %v504
    %v506 = vpop.f32.mrb[0].mxu0
    %v507 = vadd.f32 0.0, %v506
    %508 = vmatprep.mubr.f32.mxu0 0.0
    %509 = vmatmul.mubr.f32.gmra.mrb[0].mxu0 %v432
    %v510 = vpop.f32.mrb[0].mxu0
    %v511 = vadd.f32 0.0, %v510
    %v512 = vpop.f32.mrb[0].mxu0
    %v513 = vadd.f32 0.0, %v512
    %514 = vmatprep.mubr.f32.mxu0 0.0
    %515 = vmatmul.mubr.f32.gmra.mrb[0].mxu0 %v434
    %v516 = vpop.f32.mrb[0].mxu0
    %v517 = vadd.f32 0.0, %v516
    %v518 = vpop.f32.mrb[0].mxu0
    %v519 = vadd.f32 0.0, %v518
    %520 = vmatprep.mubr.f32.mxu0 0.0
    %521 = vmatmul.mubr.f32.gmra.mrb[0].mxu0 %v436
    %v522 = vpop.f32.mrb[0].mxu0
    %v523 = vadd.f32 0.0, %v522
    %v524 = vpop.f32.mrb[0].mxu0
    %v525 = vadd.f32 0.0, %v524
    %526 = vdwg.mxu0
    %v527 = vadd.f32 %v405, %v505
    %v528 = vadd.f32 %v406, %v507
    %v529 = vadd.f32 %v407, %v511
    %v530 = vadd.f32 %v408, %v513
    %v531 = vadd.f32 %v409, %v517
    %v532 = vadd.f32 %v410, %v519
    %v533 = vadd.f32 %v411, %v523
    %v534 = vadd.f32 %v412, %v525
    %s535 = scalar_lea.vmem %s1, 256
    %v536 = vld [vmem:[%s535] sm:$0xff]
    %v537 = vld [vmem:[%s535 + $0x8] sm:$0xff]
    %v538 = vld [vmem:[%s535 + $0x10] sm:$0xff]
    %v539 = vld [vmem:[%s535 + $0x18] sm:$0xff]
    %v540 = vld [vmem:[%s535 + $0x20] sm:$0xff]
    %v541 = vld [vmem:[%s535 + $0x28] sm:$0xff]
    %v542 = vld [vmem:[%s535 + $0x30] sm:$0xff]
    %v543 = vld [vmem:[%s535 + $0x38] sm:$0xff]
    %vm544 = vcmask 1043456
    %v545 = vrot.slane %v63, 4
    %v546 = vrot.slane %v64, 4
    %v547 = vsel %vm544, %v545, %v546
    %v548 = vrot.slane %v65, 4
    %v549 = vsel %vm544, %v546, %v548
    %v550 = vrot.slane %v66, 4
    %v551 = vsel %vm544, %v548, %v550
    %v552 = vsel %vm96, %v547, 0
    %v554 = vsel %vm96, %v549, 0
    %v556 = vsel %vm96, %v551, 0
    %v558 = vsel %vm96, %v550, 0
    %560 = vmatprep.subr.mxu0 %v537
    %561 = vmatpush1.msra.mxu0 %v536
    %562 = vmatprep.subr.mxu0 %v539
    %563 = vmatpush1.msra.mxu0 %v538
    %564 = vmatprep.subr.mxu0 %v541
    %565 = vmatpush1.msra.mxu0 %v540
    %566 = vmatprep.subr.mxu0 %v543
    %567 = vmatpush1.msra.mxu0 %v542
    %568 = vmatprep.subr.mxu0 0.0
    %569 = vmatpush1.msra.mxu0 0.0
    %570 = vmatprep.subr.mxu0 0.0
    %571 = vmatpush1.msra.mxu0 0.0
    %572 = vmatprep.subr.mxu0 0.0
    %573 = vmatpush1.msra.mxu0 0.0
    %574 = vmatprep.subr.mxu0 0.0
    %575 = vmatpush1.msra.mxu0 0.0
    %576 = vmatprep.subr.mxu0 0.0
    %577 = vmatpush1.msra.mxu0 0.0
    %578 = vmatprep.subr.mxu0 0.0
    %579 = vmatpush1.msra.mxu0 0.0
    %580 = vmatprep.subr.mxu0 0.0
    %581 = vmatpush1.msra.mxu0 0.0
    %582 = vmatprep.subr.mxu0 0.0
    %583 = vmatpush1.msra.mxu0 0.0
    %584 = vmatprep.subr.mxu0 0.0
    %585 = vmatpush1.msra.mxu0 0.0
    %586 = vmatprep.subr.mxu0 0.0
    %587 = vmatpush1.msra.mxu0 0.0
    %588 = vmatprep.subr.mxu0 0.0
    %589 = vmatpush1.msra.mxu0 0.0
    %590 = vmatprep.subr.mxu0 0.0
    %591 = vmatpush1.msra.mxu0 0.0
    %592 = vmatprep.subr.mxu0 0.0
    %593 = vmatpush1.msra.mxu0 0.0
    %594 = vmatprep.subr.mxu0 0.0
    %595 = vmatpush1.msra.mxu0 0.0
    %596 = vmatprep.subr.mxu0 0.0
    %597 = vmatpush1.msra.mxu0 0.0
    %598 = vmatprep.subr.mxu0 0.0
    %599 = vmatpush1.msra.mxu0 0.0
    %600 = vmatprep.subr.mxu0 0.0
    %601 = vmatpush1.msra.mxu0 0.0
    %602 = vmatprep.subr.mxu0 0.0
    %603 = vmatpush1.msra.mxu0 0.0
    %604 = vmatprep.subr.mxu0 0.0
    %605 = vmatpush1.msra.mxu0 0.0
    %606 = vmatprep.subr.mxu0 0.0
    %607 = vmatpush1.msra.mxu0 0.0
    %608 = vmatprep.subr.mxu0 0.0
    %609 = vmatpush1.msra.mxu0 0.0
    %610 = vmatprep.subr.mxu0 0.0
    %611 = vmatpush1.msra.mxu0 0.0
    %612 = vmatprep.subr.mxu0 0.0
    %613 = vmatpush1.msra.mxu0 0.0
    %614 = vmatprep.subr.mxu0 0.0
    %615 = vmatpush1.msra.mxu0 0.0
    %616 = vmatprep.subr.mxu0 0.0
    %617 = vmatpush1.msra.mxu0 0.0
    %618 = vmatprep.subr.mxu0 0.0
    %619 = vmatpush1.msra.mxu0 0.0
    %620 = vmatprep.subr.mxu0 0.0
    %621 = vmatpush1.msra.mxu0 0.0
    %622 = vmatprep.subr.mxu0 0.0
    %623 = vmatpush1.msra.mxu0 0.0
    %624 = vmatprep.mubr.f32.mxu0 0.0
    %625 = vmatmul.mubr.f32.gmra.mrb[0].mxu0 %v552
    %v626 = vpop.f32.mrb[0].mxu0
    %v627 = vadd.f32 0.0, %v626
    %v628 = vpop.f32.mrb[0].mxu0
    %v629 = vadd.f32 0.0, %v628
    %630 = vmatprep.mubr.f32.mxu0 0.0
    %631 = vmatmul.mubr.f32.gmra.mrb[0].mxu0 %v554
    %v632 = vpop.f32.mrb[0].mxu0
    %v633 = vadd.f32 0.0, %v632
    %v634 = vpop.f32.mrb[0].mxu0
    %v635 = vadd.f32 0.0, %v634
    %636 = vmatprep.mubr.f32.mxu0 0.0
    %637 = vmatmul.mubr.f32.gmra.mrb[0].mxu0 %v556
    %v638 = vpop.f32.mrb[0].mxu0
    %v639 = vadd.f32 0.0, %v638
    %v640 = vpop.f32.mrb[0].mxu0
    %v641 = vadd.f32 0.0, %v640
    %642 = vmatprep.mubr.f32.mxu0 0.0
    %643 = vmatmul.mubr.f32.gmra.mrb[0].mxu0 %v558
    %v644 = vpop.f32.mrb[0].mxu0
    %v645 = vadd.f32 0.0, %v644
    %v646 = vpop.f32.mrb[0].mxu0
    %v647 = vadd.f32 0.0, %v646
    %648 = vdwg.mxu0
    %v649 = vadd.f32 %v527, %v627
    %v650 = vadd.f32 %v528, %v629
    %v651 = vadd.f32 %v529, %v633
    %v652 = vadd.f32 %v530, %v635
    %v653 = vadd.f32 %v531, %v639
    %v654 = vadd.f32 %v532, %v641
    %v655 = vadd.f32 %v533, %v645
    %v656 = vadd.f32 %v534, %v647
    %v657 = vld [vmem:[%s2] sm:$0x3]
    %v659 = vlaneseq
    %v660 = vshrl.u32 %v659, 7
    %v661 = vsub.s32 0, %v660
    %v662 = vrot.slane %v657, %v661
    %v663 = vlaneseq
    %v664 = vshrl.u32 %v663, 7
    %v665 = vsub.s32 1, %v664
    %v666 = vrot.slane %v657, %v665
    %v669 = vadd.f32 %v649, %v662
    %v670 = vadd.f32 %v650, %v666
    %v671 = vadd.f32 %v651, %v662
    %v672 = vadd.f32 %v652, %v666
    %v673 = vadd.f32 %v653, %v662
    %v674 = vadd.f32 %v654, %v666
    %v675 = vadd.f32 %v655, %v662
    %v676 = vadd.f32 %v656, %v666
    %v677 = vmax.f32 %v669, 0.0
    %v678 = vmax.f32 %v670, 0.0
    %v679 = vmax.f32 %v671, 0.0
    %v680 = vmax.f32 %v672, 0.0
    %v681 = vmax.f32 %v673, 0.0
    %v682 = vmax.f32 %v674, 0.0
    %v683 = vmax.f32 %v675, 0.0
    %v684 = vmax.f32 %v676, 0.0
    %v685 = vld [vmem:[%s7] sm:$0xff]
    %v686 = vld [vmem:[%s7 + $0x8] sm:$0x3f]
    %vm687 = vcmask 228352
    %v689 = vsel %vm687, %v685, 0
    %v692 = vsel %vm687, %v686, 0
    %v695 = vsel %vm544, %v683, 0
    %v698 = vsel %vm544, %v684, 0
    %700 = vmatprep.subr.mxu0 %v678
    %701 = vmatpush1.msra.mxu0 %v677
    %702 = vmatprep.subr.mxu0 %v680
    %703 = vmatpush1.msra.mxu0 %v679
    %704 = vmatprep.subr.mxu0 %v682
    %705 = vmatpush1.msra.mxu0 %v681
    %706 = vmatprep.subr.mxu0 %v698
    %707 = vmatpush1.msra.mxu0 %v695
    %708 = vmatprep.subr.mxu0 0.0
    %709 = vmatpush1.msra.mxu0 0.0
    %710 = vmatprep.subr.mxu0 0.0
    %711 = vmatpush1.msra.mxu0 0.0
    %712 = vmatprep.subr.mxu0 0.0
    %713 = vmatpush1.msra.mxu0 0.0
    %714 = vmatprep.subr.mxu0 0.0
    %715 = vmatpush1.msra.mxu0 0.0
    %716 = vmatprep.subr.mxu0 0.0
    %717 = vmatpush1.msra.mxu0 0.0
    %718 = vmatprep.subr.mxu0 0.0
    %719 = vmatpush1.msra.mxu0 0.0
    %720 = vmatprep.subr.mxu0 0.0
    %721 = vmatpush1.msra.mxu0 0.0
    %722 = vmatprep.subr.mxu0 0.0
    %723 = vmatpush1.msra.mxu0 0.0
    %724 = vmatprep.subr.mxu0 0.0
    %725 = vmatpush1.msra.mxu0 0.0
    %726 = vmatprep.subr.mxu0 0.0
    %727 = vmatpush1.msra.mxu0 0.0
    %728 = vmatprep.subr.mxu0 0.0
    %729 = vmatpush1.msra.mxu0 0.0
    %730 = vmatprep.subr.mxu0 0.0
    %731 = vmatpush1.msra.mxu0 0.0
    %732 = vmatprep.subr.mxu0 0.0
    %733 = vmatpush1.msra.mxu0 0.0
    %734 = vmatprep.subr.mxu0 0.0
    %735 = vmatpush1.msra.mxu0 0.0
    %736 = vmatprep.subr.mxu0 0.0
    %737 = vmatpush1.msra.mxu0 0.0
    %738 = vmatprep.subr.mxu0 0.0
    %739 = vmatpush1.msra.mxu0 0.0
    %740 = vmatprep.subr.mxu0 0.0
    %741 = vmatpush1.msra.mxu0 0.0
    %742 = vmatprep.subr.mxu0 0.0
    %743 = vmatpush1.msra.mxu0 0.0
    %744 = vmatprep.subr.mxu0 0.0
    %745 = vmatpush1.msra.mxu0 0.0
    %746 = vmatprep.subr.mxu0 0.0
    %747 = vmatpush1.msra.mxu0 0.0
    %748 = vmatprep.subr.mxu0 0.0
    %749 = vmatpush1.msra.mxu0 0.0
    %750 = vmatprep.subr.mxu0 0.0
    %751 = vmatpush1.msra.mxu0 0.0
    %752 = vmatprep.subr.mxu0 0.0
    %753 = vmatpush1.msra.mxu0 0.0
    %754 = vmatprep.subr.mxu0 0.0
    %755 = vmatpush1.msra.mxu0 0.0
    %756 = vmatprep.subr.mxu0 0.0
    %757 = vmatpush1.msra.mxu0 0.0
    %758 = vmatprep.subr.mxu0 0.0
    %759 = vmatpush1.msra.mxu0 0.0
    %760 = vmatprep.subr.mxu0 0.0
    %761 = vmatpush1.msra.mxu0 0.0
    %762 = vmatprep.subr.mxu0 0.0
    %763 = vmatpush1.msra.mxu0 0.0
    %764 = vmatprep.mubr.f32.mxu0 0.0
    %765 = vmatmul.mubr.f32.gmra.mrb[0].mxu0 %v689
    %v766 = vpop.f32.mrb[0].mxu0
    %v767 = vadd.f32 0.0, %v766
    %v768 = vpop.f32.mrb[0].mxu0
    %v769 = vadd.f32 0.0, %v768
    %770 = vmatprep.mubr.f32.mxu0 0.0
    %771 = vmatmul.mubr.f32.gmra.mrb[0].mxu0 %v692
    %v772 = vpop.f32.mrb[0].mxu0
    %v773 = vadd.f32 0.0, %v772
    %v774 = vpop.f32.mrb[0].mxu0
    %v775 = vadd.f32 0.0, %v774
    %776 = vdwg.mxu0
    %v777 = vld [vmem:[%s8] sm:$0xff]
    %v778 = vld [vmem:[%s8 + $0x8] sm:$0x3f]
    %v780 = vsel %vm687, %v777, 0
    %v783 = vsel %vm687, %v778, 0
    %785 = vmatprep.subr.mxu0 %v678
    %786 = vmatpush1.msra.mxu0 %v677
    %787 = vmatprep.subr.mxu0 %v680
    %788 = vmatpush1.msra.mxu0 %v679
    %789 = vmatprep.subr.mxu0 %v682
    %790 = vmatpush1.msra.mxu0 %v681
    %791 = vmatprep.subr.mxu0 %v698
    %792 = vmatpush1.msra.mxu0 %v695
    %793 = vmatprep.subr.mxu0 0.0
    %794 = vmatpush1.msra.mxu0 0.0
    %795 = vmatprep.subr.mxu0 0.0
    %796 = vmatpush1.msra.mxu0 0.0
    %797 = vmatprep.subr.mxu0 0.0
    %798 = vmatpush1.msra.mxu0 0.0
    %799 = vmatprep.subr.mxu0 0.0
    %800 = vmatpush1.msra.mxu0 0.0
    %801 = vmatprep.subr.mxu0 0.0
    %802 = vmatpush1.msra.mxu0 0.0
    %803 = vmatprep.subr.mxu0 0.0
    %804 = vmatpush1.msra.mxu0 0.0
    %805 = vmatprep.subr.mxu0 0.0
    %806 = vmatpush1.msra.mxu0 0.0
    %807 = vmatprep.subr.mxu0 0.0
    %808 = vmatpush1.msra.mxu0 0.0
    %809 = vmatprep.subr.mxu0 0.0
    %810 = vmatpush1.msra.mxu0 0.0
    %811 = vmatprep.subr.mxu0 0.0
    %812 = vmatpush1.msra.mxu0 0.0
    %813 = vmatprep.subr.mxu0 0.0
    %814 = vmatpush1.msra.mxu0 0.0
    %815 = vmatprep.subr.mxu0 0.0
    %816 = vmatpush1.msra.mxu0 0.0
    %817 = vmatprep.subr.mxu0 0.0
    %818 = vmatpush1.msra.mxu0 0.0
    %819 = vmatprep.subr.mxu0 0.0
    %820 = vmatpush1.msra.mxu0 0.0
    %821 = vmatprep.subr.mxu0 0.0
    %822 = vmatpush1.msra.mxu0 0.0
    %823 = vmatprep.subr.mxu0 0.0
    %824 = vmatpush1.msra.mxu0 0.0
    %825 = vmatprep.subr.mxu0 0.0
    %826 = vmatpush1.msra.mxu0 0.0
    %827 = vmatprep.subr.mxu0 0.0
    %828 = vmatpush1.msra.mxu0 0.0
    %829 = vmatprep.subr.mxu0 0.0
    %830 = vmatpush1.msra.mxu0 0.0
    %831 = vmatprep.subr.mxu0 0.0
    %832 = vmatpush1.msra.mxu0 0.0
    %833 = vmatprep.subr.mxu0 0.0
    %834 = vmatpush1.msra.mxu0 0.0
    %835 = vmatprep.subr.mxu0 0.0
    %836 = vmatpush1.msra.mxu0 0.0
    %837 = vmatprep.subr.mxu0 0.0
    %838 = vmatpush1.msra.mxu0 0.0
    %839 = vmatprep.subr.mxu0 0.0
    %840 = vmatpush1.msra.mxu0 0.0
    %841 = vmatprep.subr.mxu0 0.0
    %842 = vmatpush1.msra.mxu0 0.0
    %843 = vmatprep.subr.mxu0 0.0
    %844 = vmatpush1.msra.mxu0 0.0
    %845 = vmatprep.subr.mxu0 0.0
    %846 = vmatpush1.msra.mxu0 0.0
    %847 = vmatprep.subr.mxu0 0.0
    %848 = vmatpush1.msra.mxu0 0.0
    %849 = vmatprep.mubr.f32.mxu0 0.0
    %850 = vmatmul.mubr.f32.gmra.mrb[0].mxu0 %v780
    %v851 = vpop.f32.mrb[0].mxu0
    %v852 = vadd.f32 0.0, %v851
    %v853 = vpop.f32.mrb[0].mxu0
    %v854 = vadd.f32 0.0, %v853
    %855 = vmatprep.mubr.f32.mxu0 0.0
    %856 = vmatmul.mubr.f32.gmra.mrb[0].mxu0 %v783
    %v857 = vpop.f32.mrb[0].mxu0
    %v858 = vadd.f32 0.0, %v857
    %v859 = vpop.f32.mrb[0].mxu0
    %v860 = vadd.f32 0.0, %v859
    %861 = vdwg.mxu0
    %v862 = vmax.f32 %v767, %v852
    %v863 = vmax.f32 %v769, %v854
    %v864 = vmax.f32 %v773, %v858
    %v865 = vmax.f32 %v775, %v860
    %v866 = vld [vmem:[%s9] sm:$0xff]
    %v867 = vld [vmem:[%s9 + $0x8] sm:$0xff]
    %v868 = vld [vmem:[%s9 + $0x10] sm:$0xff]
    %v869 = vld [vmem:[%s9 + $0x18] sm:$0xff]
    %v870 = vld [vmem:[%s9 + $0x20] sm:$0xff]
    %v871 = vld [vmem:[%s9 + $0x28] sm:$0xff]
    %v872 = vld [vmem:[%s9 + $0x30] sm:$0xff]
    %v873 = vld [vmem:[%s9 + $0x38] sm:$0xff]
    %v874 = vld [vmem:[%s9 + $0x40] sm:$0xff]
    %v875 = vld [vmem:[%s9 + $0x48] sm:$0xff]
    %v876 = vld [vmem:[%s9 + $0x50] sm:$0xff]
    %v877 = vld [vmem:[%s9 + $0x58] sm:$0xff]
    %v878 = vld [vmem:[%s9 + $0x60] sm:$0xff]
    %v879 = vld [vmem:[%s9 + $0x68] sm:$0xff]
    %v880 = vld [vmem:[%s9 + $0x70] sm:$0xff]
    %v881 = vld [vmem:[%s9 + $0x78] sm:$0xff]
    %v882 = vld [vmem:[%s9 + $0x80] sm:$0xff]
    %v883 = vld [vmem:[%s9 + $0x88] sm:$0xff]
    %v884 = vld [vmem:[%s9 + $0x90] sm:$0xff]
    %v885 = vld [vmem:[%s9 + $0x98] sm:$0xff]
    %v886 = vld [vmem:[%s9 + $0xa0] sm:$0xff]
    %vm887 = vcmask 326656
    %v889 = vsel %vm887, %v863, 0
    %v892 = vsel %vm887, %v865, 0
    %894 = vmatprep.subr.mxu0 0.0
    %895 = vmatpush1.msra.mxu0 %v866
    %896 = vmatprep.subr.mxu0 0.0
    %897 = vmatpush1.msra.mxu0 %v867
    %898 = vmatprep.subr.mxu0 0.0
    %899 = vmatpush1.msra.mxu0 %v868
    %900 = vmatprep.subr.mxu0 0.0
    %901 = vmatpush1.msra.mxu0 %v869
    %902 = vmatprep.subr.mxu0 0.0
    %903 = vmatpush1.msra.mxu0 %v870
    %904 = vmatprep.subr.mxu0 0.0
    %905 = vmatpush1.msra.mxu0 %v871
    %906 = vmatprep.subr.mxu0 0.0
    %907 = vmatpush1.msra.mxu0 %v872
    %908 = vmatprep.subr.mxu0 0.0
    %909 = vmatpush1.msra.mxu0 %v873
    %910 = vmatprep.subr.mxu0 0.0
    %911 = vmatpush1.msra.mxu0 %v874
    %912 = vmatprep.subr.mxu0 0.0
    %913 = vmatpush1.msra.mxu0 %v875
    %914 = vmatprep.subr.mxu0 0.0
    %915 = vmatpush1.msra.mxu0 %v876
    %916 = vmatprep.subr.mxu0 0.0
    %917 = vmatpush1.msra.mxu0 %v877
    %918 = vmatprep.subr.mxu0 0.0
    %919 = vmatpush1.msra.mxu0 %v878
    %920 = vmatprep.subr.mxu0 0.0
    %921 = vmatpush1.msra.mxu0 %v879
    %922 = vmatprep.subr.mxu0 0.0
    %923 = vmatpush1.msra.mxu0 %v880
    %924 = vmatprep.subr.mxu0 0.0
    %925 = vmatpush1.msra.mxu0 %v881
    %926 = vmatprep.subr.mxu0 0.0
    %927 = vmatpush1.msra.mxu0 %v882
    %928 = vmatprep.subr.mxu0 0.0
    %929 = vmatpush1.msra.mxu0 %v883
    %930 = vmatprep.subr.mxu0 0.0
    %931 = vmatpush1.msra.mxu0 %v884
    %932 = vmatprep.subr.mxu0 0.0
    %933 = vmatpush1.msra.mxu0 %v885
    %934 = vmatprep.subr.mxu0 0.0
    %935 = vmatpush1.msra.mxu0 %v886
    %936 = vmatprep.subr.mxu0 0.0
    %937 = vmatpush1.msra.mxu0 0.0
    %938 = vmatprep.subr.mxu0 0.0
    %939 = vmatpush1.msra.mxu0 0.0
    %940 = vmatprep.subr.mxu0 0.0
    %941 = vmatpush1.msra.mxu0 0.0
    %942 = vmatprep.subr.mxu0 0.0
    %943 = vmatpush1.msra.mxu0 0.0
    %944 = vmatprep.subr.mxu0 0.0
    %945 = vmatpush1.msra.mxu0 0.0
    %946 = vmatprep.subr.mxu0 0.0
    %947 = vmatpush1.msra.mxu0 0.0
    %948 = vmatprep.subr.mxu0 0.0
    %949 = vmatpush1.msra.mxu0 0.0
    %950 = vmatprep.subr.mxu0 0.0
    %951 = vmatpush1.msra.mxu0 0.0
    %952 = vmatprep.subr.mxu0 0.0
    %953 = vmatpush1.msra.mxu0 0.0
    %954 = vmatprep.subr.mxu0 0.0
    %955 = vmatpush1.msra.mxu0 0.0
    %956 = vmatprep.subr.mxu0 0.0
    %957 = vmatpush1.msra.mxu0 0.0
    %958 = vmatprep.mubr.f32.mxu0 %v889
    %959 = vmatmul.mubr.f32.gmra.mrb[0].mxu0 %v862
    %v960 = vpop.f32.mrb[0].mxu0
    %v961 = vadd.f32 0.0, %v960
    %v962 = vpop.f32.mrb[0].mxu0
    %963 = vmatprep.mubr.f32.mxu0 %v892
    %964 = vmatmul.mubr.f32.gmra.mrb[0].mxu0 %v864
    %v965 = vpop.f32.mrb[0].mxu0
    %v966 = vadd.f32 0.0, %v965
    %v967 = vpop.f32.mrb[0].mxu0
    %968 = vdwg.mxu0
    %v969 = vld [vmem:[%s10] sm:$0xff]
    %v970 = vld [vmem:[%s10 + $0x8] sm:$0xff]
    %v971 = vld [vmem:[%s10 + $0x10] sm:$0xff]
    %v972 = vld [vmem:[%s10 + $0x18] sm:$0xff]
    %v973 = vld [vmem:[%s10 + $0x20] sm:$0xff]
    %v974 = vld [vmem:[%s10 + $0x28] sm:$0xff]
    %v975 = vld [vmem:[%s10 + $0x30] sm:$0xff]
    %v976 = vld [vmem:[%s10 + $0x38] sm:$0xff]
    %v977 = vld [vmem:[%s10 + $0x40] sm:$0xff]
    %v978 = vld [vmem:[%s10 + $0x48] sm:$0xff]
    %v979 = vld [vmem:[%s10 + $0x50] sm:$0xff]
    %v980 = vld [vmem:[%s10 + $0x58] sm:$0xff]
    %v981 = vld [vmem:[%s10 + $0x60] sm:$0xff]
    %v982 = vld [vmem:[%s10 + $0x68] sm:$0xff]
    %v983 = vld [vmem:[%s10 + $0x70] sm:$0xff]
    %v984 = vld [vmem:[%s10 + $0x78] sm:$0xff]
    %v985 = vld [vmem:[%s10 + $0x80] sm:$0xff]
    %v986 = vld [vmem:[%s10 + $0x88] sm:$0xff]
    %v987 = vld [vmem:[%s10 + $0x90] sm:$0xff]
    %v988 = vld [vmem:[%s10 + $0x98] sm:$0xff]
    %v989 = vld [vmem:[%s10 + $0xa0] sm:$0xff]
    %990 = vmatprep.subr.mxu0 0.0
    %991 = vmatpush1.msra.mxu0 %v969
    %992 = vmatprep.subr.mxu0 0.0
    %993 = vmatpush1.msra.mxu0 %v970
    %994 = vmatprep.subr.mxu0 0.0
    %995 = vmatpush1.msra.mxu0 %v971
    %996 = vmatprep.subr.mxu0 0.0
    %997 = vmatpush1.msra.mxu0 %v972
    %998 = vmatprep.subr.mxu0 0.0
    %999 = vmatpush1.msra.mxu0 %v973
    %1000 = vmatprep.subr.mxu0 0.0
    %1001 = vmatpush1.msra.mxu0 %v974
    %1002 = vmatprep.subr.mxu0 0.0
    %1003 = vmatpush1.msra.mxu0 %v975
    %1004 = vmatprep.subr.mxu0 0.0
    %1005 = vmatpush1.msra.mxu0 %v976
    %1006 = vmatprep.subr.mxu0 0.0
    %1007 = vmatpush1.msra.mxu0 %v977
    %1008 = vmatprep.subr.mxu0 0.0
    %1009 = vmatpush1.msra.mxu0 %v978
    %1010 = vmatprep.subr.mxu0 0.0
    %1011 = vmatpush1.msra.mxu0 %v979
    %1012 = vmatprep.subr.mxu0 0.0
    %1013 = vmatpush1.msra.mxu0 %v980
    %1014 = vmatprep.subr.mxu0 0.0
    %1015 = vmatpush1.msra.mxu0 %v981
    %1016 = vmatprep.subr.mxu0 0.0
    %1017 = vmatpush1.msra.mxu0 %v982
    %1018 = vmatprep.subr.mxu0 0.0
    %1019 = vmatpush1.msra.mxu0 %v983
    %1020 = vmatprep.subr.mxu0 0.0
    %1021 = vmatpush1.msra.mxu0 %v984
    %1022 = vmatprep.subr.mxu0 0.0
    %1023 = vmatpush1.msra.mxu0 %v985
    %1024 = vmatprep.subr.mxu0 0.0
    %1025 = vmatpush1.msra.mxu0 %v986
    %1026 = vmatprep.subr.mxu0 0.0
    %1027 = vmatpush1.msra.mxu0 %v987
    %1028 = vmatprep.subr.mxu0 0.0
    %1029 = vmatpush1.msra.mxu0 %v988
    %1030 = vmatprep.subr.mxu0 0.0
    %1031 = vmatpush1.msra.mxu0 %v989
    %1032 = vmatprep.subr.mxu0 0.0
    %1033 = vmatpush1.msra.mxu0 0.0
    %1034 = vmatprep.subr.mxu0 0.0
    %1035 = vmatpush1.msra.mxu0 0.0
    %1036 = vmatprep.subr.mxu0 0.0
    %1037 = vmatpush1.msra.mxu0 0.0
    %1038 = vmatprep.subr.mxu0 0.0
    %1039 = vmatpush1.msra.mxu0 0.0
    %1040 = vmatprep.subr.mxu0 0.0
    %1041 = vmatpush1.msra.mxu0 0.0
    %1042 = vmatprep.subr.mxu0 0.0
    %1043 = vmatpush1.msra.mxu0 0.0
    %1044 = vmatprep.subr.mxu0 0.0
    %1045 = vmatpush1.msra.mxu0 0.0
    %1046 = vmatprep.subr.mxu0 0.0
    %1047 = vmatpush1.msra.mxu0 0.0
    %1048 = vmatprep.subr.mxu0 0.0
    %1049 = vmatpush1.msra.mxu0 0.0
    %1050 = vmatprep.subr.mxu0 0.0
    %1051 = vmatpush1.msra.mxu0 0.0
    %1052 = vmatprep.subr.mxu0 0.0
    %1053 = vmatpush1.msra.mxu0 0.0
    %1054 = vmatprep.mubr.f32.mxu0 %v889
    %1055 = vmatmul.mubr.f32.gmra.mrb[0].mxu0 %v862
    %v1056 = vpop.f32.mrb[0].mxu0
    %v1057 = vadd.f32 0.0, %v1056
    %v1058 = vpop.f32.mrb[0].mxu0
    %1059 = vmatprep.mubr.f32.mxu0 %v892
    %1060 = vmatmul.mubr.f32.gmra.mrb[0].mxu0 %v864
    %v1061 = vpop.f32.mrb[0].mxu0
    %v1062 = vadd.f32 0.0, %v1061
    %v1063 = vpop.f32.mrb[0].mxu0
    %1064 = vdwg.mxu0
    %v1065 = vmax.f32 %v961, %v1057
    %v1066 = vmax.f32 %v966, %v1062
    %v1067 = vld [vmem:[%s3] sm:$0xff]
    %v1068 = vld [vmem:[%s3 + $0x8] sm:$0xff]
    %v1069 = vld [vmem:[%s3 + $0x10] sm:$0xff]
    %v1070 = vld [vmem:[%s3 + $0x18] sm:$0xff]
    %v1071 = vld [vmem:[%s3 + $0x20] sm:$0xff]
    %v1072 = vld [vmem:[%s3 + $0x28] sm:$0xff]
    %v1073 = vld [vmem:[%s3 + $0x30] sm:$0xff]
    %v1074 = vld [vmem:[%s3 + $0x38] sm:$0xff]
    %v1075 = vld [vmem:[%s3 + $0x40] sm:$0xff]
    %v1076 = vld [vmem:[%s3 + $0x48] sm:$0xff]
    %v1077 = vld [vmem:[%s3 + $0x50] sm:$0xff]
    %v1078 = vld [vmem:[%s3 + $0x58] sm:$0xff]
    %v1079 = vld [vmem:[%s3 + $0x60] sm:$0xff]
    %v1080 = vld [vmem:[%s3 + $0x68] sm:$0xff]
    %v1081 = vld [vmem:[%s3 + $0x70] sm:$0xff]
    %v1082 = vld [vmem:[%s3 + $0x78] sm:$0xff]
    %v1083 = vld [vmem:[%s3 + $0x80] sm:$0xff]
    %v1084 = vld [vmem:[%s3 + $0x88] sm:$0xff]
    %v1085 = vld [vmem:[%s3 + $0x90] sm:$0xff]
    %v1086 = vld [vmem:[%s3 + $0x98] sm:$0xff]
    %v1087 = vld [vmem:[%s3 + $0xa0] sm:$0xf]
    %v1088 = vld [vmem:[%s3 + $0xa8] sm:$0xf]
    %s1089 = scalar_lea.vmem %s3, 176
    %v1090 = vld [vmem:[%s1089] sm:$0xff]
    %v1091 = vld [vmem:[%s1089 + $0x8] sm:$0xff]
    %v1092 = vld [vmem:[%s1089 + $0x10] sm:$0xff]
    %v1093 = vld [vmem:[%s1089 + $0x18] sm:$0xff]
    %v1094 = vld [vmem:[%s1089 + $0x20] sm:$0xff]
    %v1095 = vld [vmem:[%s1089 + $0x28] sm:$0xff]
    %v1096 = vld [vmem:[%s1089 + $0x30] sm:$0xff]
    %v1097 = vld [vmem:[%s1089 + $0x38] sm:$0xff]
    %v1098 = vld [vmem:[%s1089 + $0x40] sm:$0xff]
    %v1099 = vld [vmem:[%s1089 + $0x48] sm:$0xff]
    %v1100 = vld [vmem:[%s1089 + $0x50] sm:$0xff]
    %v1101 = vld [vmem:[%s1089 + $0x58] sm:$0xff]
    %v1102 = vld [vmem:[%s1089 + $0x60] sm:$0xff]
    %v1103 = vld [vmem:[%s1089 + $0x68] sm:$0xff]
    %v1104 = vld [vmem:[%s1089 + $0x70] sm:$0xff]
    %v1105 = vld [vmem:[%s1089 + $0x78] sm:$0xff]
    %v1106 = vld [vmem:[%s1089 + $0x80] sm:$0xff]
    %v1107 = vld [vmem:[%s1089 + $0x88] sm:$0xff]
    %v1108 = vld [vmem:[%s1089 + $0x90] sm:$0xff]
    %v1109 = vld [vmem:[%s1089 + $0x98] sm:$0xff]
    %v1110 = vld [vmem:[%s1089 + $0xa0] sm:$0xf]
    %v1111 = vld [vmem:[%s1089 + $0xa8] sm:$0xf]
    %v1114 = vrot.slane %v1065, 1
    %v1115 = vrot.slane %v1066, 1
    %v1116 = vsel %vm88, %v1114, %v1115
    %vm1117 = vcmask 687104
    %v1118 = vsel %vm1117, %v1116, 0
    %v1120 = vsel %vm1117, %v1115, 0
    %v1123 = vsel %vm544, %v1110, 0
    %v1126 = vsel %vm544, %v1111, 0
    %1128 = vmatprep.subr.mxu0 %v1091
    %1129 = vmatpush1.msra.mxu0 %v1090
    %1130 = vmatprep.subr.mxu0 %v1093
    %1131 = vmatpush1.msra.mxu0 %v1092
    %1132 = vmatprep.subr.mxu0 %v1095
    %1133 = vmatpush1.msra.mxu0 %v1094
    %1134 = vmatprep.subr.mxu0 %v1097
    %1135 = vmatpush1.msra.mxu0 %v1096
    %1136 = vmatprep.subr.mxu0 %v1099
    %1137 = vmatpush1.msra.mxu0 %v1098
    %1138 = vmatprep.subr.mxu0 %v1101
    %1139 = vmatpush1.msra.mxu0 %v1100
    %1140 = vmatprep.subr.mxu0 %v1103
    %1141 = vmatpush1.msra.mxu0 %v1102
    %1142 = vmatprep.subr.mxu0 %v1105
    %1143 = vmatpush1.msra.mxu0 %v1104
    %1144 = vmatprep.subr.mxu0 %v1107
    %1145 = vmatpush1.msra.mxu0 %v1106
    %1146 = vmatprep.subr.mxu0 %v1109
    %1147 = vmatpush1.msra.mxu0 %v1108
    %1148 = vmatprep.subr.mxu0 %v1126
    %1149 = vmatpush1.msra.mxu0 %v1123
    %1150 = vmatprep.subr.mxu0 0.0
    %1151 = vmatpush1.msra.mxu0 0.0
    %1152 = vmatprep.subr.mxu0 0.0
    %1153 = vmatpush1.msra.mxu0 0.0
    %1154 = vmatprep.subr.mxu0 0.0
    %1155 = vmatpush1.msra.mxu0 0.0
    %1156 = vmatprep.subr.mxu0 0.0
    %1157 = vmatpush1.msra.mxu0 0.0
    %1158 = vmatprep.subr.mxu0 0.0
    %1159 = vmatpush1.msra.mxu0 0.0
    %1160 = vmatprep.subr.mxu0 0.0
    %1161 = vmatpush1.msra.mxu0 0.0
    %1162 = vmatprep.subr.mxu0 0.0
    %1163 = vmatpush1.msra.mxu0 0.0
    %1164 = vmatprep.subr.mxu0 0.0
    %1165 = vmatpush1.msra.mxu0 0.0
    %1166 = vmatprep.subr.mxu0 0.0
    %1167 = vmatpush1.msra.mxu0 0.0
    %1168 = vmatprep.subr.mxu0 0.0
    %1169 = vmatpush1.msra.mxu0 0.0
    %1170 = vmatprep.subr.mxu0 0.0
    %1171 = vmatpush1.msra.mxu0 0.0
    %1172 = vmatprep.subr.mxu0 0.0
    %1173 = vmatpush1.msra.mxu0 0.0
    %1174 = vmatprep.subr.mxu0 0.0
    %1175 = vmatpush1.msra.mxu0 0.0
    %1176 = vmatprep.subr.mxu0 0.0
    %1177 = vmatpush1.msra.mxu0 0.0
    %1178 = vmatprep.subr.mxu0 0.0
    %1179 = vmatpush1.msra.mxu0 0.0
    %1180 = vmatprep.subr.mxu0 0.0
    %1181 = vmatpush1.msra.mxu0 0.0
    %1182 = vmatprep.subr.mxu0 0.0
    %1183 = vmatpush1.msra.mxu0 0.0
    %1184 = vmatprep.subr.mxu0 0.0
    %1185 = vmatpush1.msra.mxu0 0.0
    %1186 = vmatprep.subr.mxu0 0.0
    %1187 = vmatpush1.msra.mxu0 0.0
    %1188 = vmatprep.subr.mxu0 0.0
    %1189 = vmatpush1.msra.mxu0 0.0
    %1190 = vmatprep.subr.mxu0 0.0
    %1191 = vmatpush1.msra.mxu0 0.0
    %1192 = vmatprep.mubr.f32.mxu0 0.0
    %1193 = vmatmul.mubr.f32.gmra.mrb[0].mxu0 %v1118
    %v1194 = vpop.f32.mrb[0].mxu0
    %v1195 = vadd.f32 0.0, %v1194
    %v1196 = vpop.f32.mrb[0].mxu0
    %v1197 = vadd.f32 0.0, %v1196
    %1198 = vmatprep.mubr.f32.mxu0 0.0
    %1199 = vmatmul.mubr.f32.gmra.mrb[0].mxu0 %v1120
    %v1200 = vpop.f32.mrb[0].mxu0
    %v1201 = vadd.f32 0.0, %v1200
    %v1202 = vpop.f32.mrb[0].mxu0
    %v1203 = vadd.f32 0.0, %v1202
    %1204 = vdwg.mxu0
    %v1205 = vsel %vm1117, %v1065, 0
    %v1207 = vsel %vm1117, %v1066, 0
    %v1210 = vsel %vm544, %v1087, 0
    %v1213 = vsel %vm544, %v1088, 0
    %1215 = vmatprep.subr.mxu0 %v1068
    %1216 = vmatpush1.msra.mxu0 %v1067
    %1217 = vmatprep.subr.mxu0 %v1070
    %1218 = vmatpush1.msra.mxu0 %v1069
    %1219 = vmatprep.subr.mxu0 %v1072
    %1220 = vmatpush1.msra.mxu0 %v1071
    %1221 = vmatprep.subr.mxu0 %v1074
    %1222 = vmatpush1.msra.mxu0 %v1073
    %1223 = vmatprep.subr.mxu0 %v1076
    %1224 = vmatpush1.msra.mxu0 %v1075
    %1225 = vmatprep.subr.mxu0 %v1078
    %1226 = vmatpush1.msra.mxu0 %v1077
    %1227 = vmatprep.subr.mxu0 %v1080
    %1228 = vmatpush1.msra.mxu0 %v1079
    %1229 = vmatprep.subr.mxu0 %v1082
    %1230 = vmatpush1.msra.mxu0 %v1081
    %1231 = vmatprep.subr.mxu0 %v1084
    %1232 = vmatpush1.msra.mxu0 %v1083
    %1233 = vmatprep.subr.mxu0 %v1086
    %1234 = vmatpush1.msra.mxu0 %v1085
    %1235 = vmatprep.subr.mxu0 %v1213
    %1236 = vmatpush1.msra.mxu0 %v1210
    %1237 = vmatprep.subr.mxu0 0.0
    %1238 = vmatpush1.msra.mxu0 0.0
    %1239 = vmatprep.subr.mxu0 0.0
    %1240 = vmatpush1.msra.mxu0 0.0
    %1241 = vmatprep.subr.mxu0 0.0
    %1242 = vmatpush1.msra.mxu0 0.0
    %1243 = vmatprep.subr.mxu0 0.0
    %1244 = vmatpush1.msra.mxu0 0.0
    %1245 = vmatprep.subr.mxu0 0.0
    %1246 = vmatpush1.msra.mxu0 0.0
    %1247 = vmatprep.subr.mxu0 0.0
    %1248 = vmatpush1.msra.mxu0 0.0
    %1249 = vmatprep.subr.mxu0 0.0
    %1250 = vmatpush1.msra.mxu0 0.0
    %1251 = vmatprep.subr.mxu0 0.0
    %1252 = vmatpush1.msra.mxu0 0.0
    %1253 = vmatprep.subr.mxu0 0.0
    %1254 = vmatpush1.msra.mxu0 0.0
    %1255 = vmatprep.subr.mxu0 0.0
    %1256 = vmatpush1.msra.mxu0 0.0
    %1257 = vmatprep.subr.mxu0 0.0
    %1258 = vmatpush1.msra.mxu0 0.0
    %1259 = vmatprep.subr.mxu0 0.0
    %1260 = vmatpush1.msra.mxu0 0.0
    %1261 = vmatprep.subr.mxu0 0.0
    %1262 = vmatpush1.msra.mxu0 0.0
    %1263 = vmatprep.subr.mxu0 0.0
    %1264 = vmatpush1.msra.mxu0 0.0
    %1265 = vmatprep.subr.mxu0 0.0
    %1266 = vmatpush1.msra.mxu0 0.0
    %1267 = vmatprep.subr.mxu0 0.0
    %1268 = vmatpush1.msra.mxu0 0.0
    %1269 = vmatprep.subr.mxu0 0.0
    %1270 = vmatpush1.msra.mxu0 0.0
    %1271 = vmatprep.subr.mxu0 0.0
    %1272 = vmatpush1.msra.mxu0 0.0
    %1273 = vmatprep.subr.mxu0 0.0
    %1274 = vmatpush1.msra.mxu0 0.0
    %1275 = vmatprep.subr.mxu0 0.0
    %1276 = vmatpush1.msra.mxu0 0.0
    %1277 = vmatprep.subr.mxu0 0.0
    %1278 = vmatpush1.msra.mxu0 0.0
    %1279 = vmatprep.mubr.f32.mxu0 0.0
    %1280 = vmatmul.mubr.f32.gmra.mrb[0].mxu0 %v1205
    %v1281 = vpop.f32.mrb[0].mxu0
    %v1282 = vadd.f32 %v1195, %v1281
    %v1283 = vpop.f32.mrb[0].mxu0
    %v1284 = vadd.f32 %v1197, %v1283
    %1285 = vmatprep.mubr.f32.mxu0 0.0
    %1286 = vmatmul.mubr.f32.gmra.mrb[0].mxu0 %v1207
    %v1287 = vpop.f32.mrb[0].mxu0
    %v1288 = vadd.f32 %v1201, %v1287
    %v1289 = vpop.f32.mrb[0].mxu0
    %v1290 = vadd.f32 %v1203, %v1289
    %1291 = vdwg.mxu0
    %s1292 = scalar_lea.vmem %s3, 352
    %v1293 = vld [vmem:[%s1292] sm:$0xff]
    %v1294 = vld [vmem:[%s1292 + $0x8] sm:$0xff]
    %v1295 = vld [vmem:[%s1292 + $0x10] sm:$0xff]
    %v1296 = vld [vmem:[%s1292 + $0x18] sm:$0xff]
    %v1297 = vld [vmem:[%s1292 + $0x20] sm:$0xff]
    %v1298 = vld [vmem:[%s1292 + $0x28] sm:$0xff]
    %v1299 = vld [vmem:[%s1292 + $0x30] sm:$0xff]
    %v1300 = vld [vmem:[%s1292 + $0x38] sm:$0xff]
    %v1301 = vld [vmem:[%s1292 + $0x40] sm:$0xff]
    %v1302 = vld [vmem:[%s1292 + $0x48] sm:$0xff]
    %v1303 = vld [vmem:[%s1292 + $0x50] sm:$0xff]
    %v1304 = vld [vmem:[%s1292 + $0x58] sm:$0xff]
    %v1305 = vld [vmem:[%s1292 + $0x60] sm:$0xff]
    %v1306 = vld [vmem:[%s1292 + $0x68] sm:$0xff]
    %v1307 = vld [vmem:[%s1292 + $0x70] sm:$0xff]
    %v1308 = vld [vmem:[%s1292 + $0x78] sm:$0xff]
    %v1309 = vld [vmem:[%s1292 + $0x80] sm:$0xff]
    %v1310 = vld [vmem:[%s1292 + $0x88] sm:$0xff]
    %v1311 = vld [vmem:[%s1292 + $0x90] sm:$0xff]
    %v1312 = vld [vmem:[%s1292 + $0x98] sm:$0xff]
    %v1313 = vld [vmem:[%s1292 + $0xa0] sm:$0xf]
    %v1314 = vld [vmem:[%s1292 + $0xa8] sm:$0xf]
    %v1315 = vrot.slane %v1065, 2
    %v1316 = vrot.slane %v1066, 2
    %v1317 = vsel %vm300, %v1315, %v1316
    %v1318 = vsel %vm1117, %v1317, 0
    %v1320 = vsel %vm1117, %v1316, 0
    %v1323 = vsel %vm544, %v1313, 0
    %v1326 = vsel %vm544, %v1314, 0
    %1328 = vmatprep.subr.mxu0 %v1294
    %1329 = vmatpush1.msra.mxu0 %v1293
    %1330 = vmatprep.subr.mxu0 %v1296
    %1331 = vmatpush1.msra.mxu0 %v1295
    %1332 = vmatprep.subr.mxu0 %v1298
    %1333 = vmatpush1.msra.mxu0 %v1297
    %1334 = vmatprep.subr.mxu0 %v1300
    %1335 = vmatpush1.msra.mxu0 %v1299
    %1336 = vmatprep.subr.mxu0 %v1302
    %1337 = vmatpush1.msra.mxu0 %v1301
    %1338 = vmatprep.subr.mxu0 %v1304
    %1339 = vmatpush1.msra.mxu0 %v1303
    %1340 = vmatprep.subr.mxu0 %v1306
    %1341 = vmatpush1.msra.mxu0 %v1305
    %1342 = vmatprep.subr.mxu0 %v1308
    %1343 = vmatpush1.msra.mxu0 %v1307
    %1344 = vmatprep.subr.mxu0 %v1310
    %1345 = vmatpush1.msra.mxu0 %v1309
    %1346 = vmatprep.subr.mxu0 %v1312
    %1347 = vmatpush1.msra.mxu0 %v1311
    %1348 = vmatprep.subr.mxu0 %v1326
    %1349 = vmatpush1.msra.mxu0 %v1323
    %1350 = vmatprep.subr.mxu0 0.0
    %1351 = vmatpush1.msra.mxu0 0.0
    %1352 = vmatprep.subr.mxu0 0.0
    %1353 = vmatpush1.msra.mxu0 0.0
    %1354 = vmatprep.subr.mxu0 0.0
    %1355 = vmatpush1.msra.mxu0 0.0
    %1356 = vmatprep.subr.mxu0 0.0
    %1357 = vmatpush1.msra.mxu0 0.0
    %1358 = vmatprep.subr.mxu0 0.0
    %1359 = vmatpush1.msra.mxu0 0.0
    %1360 = vmatprep.subr.mxu0 0.0
    %1361 = vmatpush1.msra.mxu0 0.0
    %1362 = vmatprep.subr.mxu0 0.0
    %1363 = vmatpush1.msra.mxu0 0.0
    %1364 = vmatprep.subr.mxu0 0.0
    %1365 = vmatpush1.msra.mxu0 0.0
    %1366 = vmatprep.subr.mxu0 0.0
    %1367 = vmatpush1.msra.mxu0 0.0
    %1368 = vmatprep.subr.mxu0 0.0
    %1369 = vmatpush1.msra.mxu0 0.0
    %1370 = vmatprep.subr.mxu0 0.0
    %1371 = vmatpush1.msra.mxu0 0.0
    %1372 = vmatprep.subr.mxu0 0.0
    %1373 = vmatpush1.msra.mxu0 0.0
    %1374 = vmatprep.subr.mxu0 0.0
    %1375 = vmatpush1.msra.mxu0 0.0
    %1376 = vmatprep.subr.mxu0 0.0
    %1377 = vmatpush1.msra.mxu0 0.0
    %1378 = vmatprep.subr.mxu0 0.0
    %1379 = vmatpush1.msra.mxu0 0.0
    %1380 = vmatprep.subr.mxu0 0.0
    %1381 = vmatpush1.msra.mxu0 0.0
    %1382 = vmatprep.subr.mxu0 0.0
    %1383 = vmatpush1.msra.mxu0 0.0
    %1384 = vmatprep.subr.mxu0 0.0
    %1385 = vmatpush1.msra.mxu0 0.0
    %1386 = vmatprep.subr.mxu0 0.0
    %1387 = vmatpush1.msra.mxu0 0.0
    %1388 = vmatprep.subr.mxu0 0.0
    %1389 = vmatpush1.msra.mxu0 0.0
    %1390 = vmatprep.subr.mxu0 0.0
    %1391 = vmatpush1.msra.mxu0 0.0
    %1392 = vmatprep.mubr.f32.mxu0 0.0
    %1393 = vmatmul.mubr.f32.gmra.mrb[0].mxu0 %v1318
    %v1394 = vpop.f32.mrb[0].mxu0
    %v1395 = vadd.f32 0.0, %v1394
    %v1396 = vpop.f32.mrb[0].mxu0
    %v1397 = vadd.f32 0.0, %v1396
    %1398 = vmatprep.mubr.f32.mxu0 0.0
    %1399 = vmatmul.mubr.f32.gmra.mrb[0].mxu0 %v1320
    %v1400 = vpop.f32.mrb[0].mxu0
    %v1401 = vadd.f32 0.0, %v1400
    %v1402 = vpop.f32.mrb[0].mxu0
    %v1403 = vadd.f32 0.0, %v1402
    %1404 = vdwg.mxu0
    %v1405 = vadd.f32 %v1282, %v1395
    %v1406 = vadd.f32 %v1284, %v1397
    %v1407 = vadd.f32 %v1288, %v1401
    %v1408 = vadd.f32 %v1290, %v1403
    %s1409 = scalar_lea.vmem %s3, 528
    %v1410 = vld [vmem:[%s1409] sm:$0xff]
    %v1411 = vld [vmem:[%s1409 + $0x8] sm:$0xff]
    %v1412 = vld [vmem:[%s1409 + $0x10] sm:$0xff]
    %v1413 = vld [vmem:[%s1409 + $0x18] sm:$0xff]
    %v1414 = vld [vmem:[%s1409 + $0x20] sm:$0xff]
    %v1415 = vld [vmem:[%s1409 + $0x28] sm:$0xff]
    %v1416 = vld [vmem:[%s1409 + $0x30] sm:$0xff]
    %v1417 = vld [vmem:[%s1409 + $0x38] sm:$0xff]
    %v1418 = vld [vmem:[%s1409 + $0x40] sm:$0xff]
    %v1419 = vld [vmem:[%s1409 + $0x48] sm:$0xff]
    %v1420 = vld [vmem:[%s1409 + $0x50] sm:$0xff]
    %v1421 = vld [vmem:[%s1409 + $0x58] sm:$0xff]
    %v1422 = vld [vmem:[%s1409 + $0x60] sm:$0xff]
    %v1423 = vld [vmem:[%s1409 + $0x68] sm:$0xff]
    %v1424 = vld [vmem:[%s1409 + $0x70] sm:$0xff]
    %v1425 = vld [vmem:[%s1409 + $0x78] sm:$0xff]
    %v1426 = vld [vmem:[%s1409 + $0x80] sm:$0xff]
    %v1427 = vld [vmem:[%s1409 + $0x88] sm:$0xff]
    %v1428 = vld [vmem:[%s1409 + $0x90] sm:$0xff]
    %v1429 = vld [vmem:[%s1409 + $0x98] sm:$0xff]
    %v1430 = vld [vmem:[%s1409 + $0xa0] sm:$0xf]
    %v1431 = vld [vmem:[%s1409 + $0xa8] sm:$0xf]
    %v1432 = vrot.slane %v1065, 3
    %v1433 = vrot.slane %v1066, 3
    %v1434 = vsel %vm422, %v1432, %v1433
    %v1435 = vsel %vm1117, %v1434, 0
    %v1437 = vsel %vm1117, %v1433, 0
    %v1440 = vsel %vm544, %v1430, 0
    %v1443 = vsel %vm544, %v1431, 0
    %1445 = vmatprep.subr.mxu0 %v1411
    %1446 = vmatpush1.msra.mxu0 %v1410
    %1447 = vmatprep.subr.mxu0 %v1413
    %1448 = vmatpush1.msra.mxu0 %v1412
    %1449 = vmatprep.subr.mxu0 %v1415
    %1450 = vmatpush1.msra.mxu0 %v1414
    %1451 = vmatprep.subr.mxu0 %v1417
    %1452 = vmatpush1.msra.mxu0 %v1416
    %1453 = vmatprep.subr.mxu0 %v1419
    %1454 = vmatpush1.msra.mxu0 %v1418
    %1455 = vmatprep.subr.mxu0 %v1421
    %1456 = vmatpush1.msra.mxu0 %v1420
    %1457 = vmatprep.subr.mxu0 %v1423
    %1458 = vmatpush1.msra.mxu0 %v1422
    %1459 = vmatprep.subr.mxu0 %v1425
    %1460 = vmatpush1.msra.mxu0 %v1424
    %1461 = vmatprep.subr.mxu0 %v1427
    %1462 = vmatpush1.msra.mxu0 %v1426
    %1463 = vmatprep.subr.mxu0 %v1429
    %1464 = vmatpush1.msra.mxu0 %v1428
    %1465 = vmatprep.subr.mxu0 %v1443
    %1466 = vmatpush1.msra.mxu0 %v1440
    %1467 = vmatprep.subr.mxu0 0.0
    %1468 = vmatpush1.msra.mxu0 0.0
    %1469 = vmatprep.subr.mxu0 0.0
    %1470 = vmatpush1.msra.mxu0 0.0
    %1471 = vmatprep.subr.mxu0 0.0
    %1472 = vmatpush1.msra.mxu0 0.0
    %1473 = vmatprep.subr.mxu0 0.0
    %1474 = vmatpush1.msra.mxu0 0.0
    %1475 = vmatprep.subr.mxu0 0.0
    %1476 = vmatpush1.msra.mxu0 0.0
    %1477 = vmatprep.subr.mxu0 0.0
    %1478 = vmatpush1.msra.mxu0 0.0
    %1479 = vmatprep.subr.mxu0 0.0
    %1480 = vmatpush1.msra.mxu0 0.0
    %1481 = vmatprep.subr.mxu0 0.0
    %1482 = vmatpush1.msra.mxu0 0.0
    %1483 = vmatprep.subr.mxu0 0.0
    %1484 = vmatpush1.msra.mxu0 0.0
    %1485 = vmatprep.subr.mxu0 0.0
    %1486 = vmatpush1.msra.mxu0 0.0
    %1487 = vmatprep.subr.mxu0 0.0
    %1488 = vmatpush1.msra.mxu0 0.0
    %1489 = vmatprep.subr.mxu0 0.0
    %1490 = vmatpush1.msra.mxu0 0.0
    %1491 = vmatprep.subr.mxu0 0.0
    %1492 = vmatpush1.msra.mxu0 0.0
    %1493 = vmatprep.subr.mxu0 0.0
    %1494 = vmatpush1.msra.mxu0 0.0
    %1495 = vmatprep.subr.mxu0 0.0
    %1496 = vmatpush1.msra.mxu0 0.0
    %1497 = vmatprep.subr.mxu0 0.0
    %1498 = vmatpush1.msra.mxu0 0.0
    %1499 = vmatprep.subr.mxu0 0.0
    %1500 = vmatpush1.msra.mxu0 0.0
    %1501 = vmatprep.subr.mxu0 0.0
    %1502 = vmatpush1.msra.mxu0 0.0
    %1503 = vmatprep.subr.mxu0 0.0
    %1504 = vmatpush1.msra.mxu0 0.0
    %1505 = vmatprep.subr.mxu0 0.0
    %1506 = vmatpush1.msra.mxu0 0.0
    %1507 = vmatprep.subr.mxu0 0.0
    %1508 = vmatpush1.msra.mxu0 0.0
    %1509 = vmatprep.mubr.f32.mxu0 0.0
    %1510 = vmatmul.mubr.f32.gmra.mrb[0].mxu0 %v1435
    %v1511 = vpop.f32.mrb[0].mxu0
    %v1512 = vadd.f32 0.0, %v1511
    %v1513 = vpop.f32.mrb[0].mxu0
    %v1514 = vadd.f32 0.0, %v1513
    %1515 = vmatprep.mubr.f32.mxu0 0.0
    %1516 = vmatmul.mubr.f32.gmra.mrb[0].mxu0 %v1437
    %v1517 = vpop.f32.mrb[0].mxu0
    %v1518 = vadd.f32 0.0, %v1517
    %v1519 = vpop.f32.mrb[0].mxu0
    %v1520 = vadd.f32 0.0, %v1519
    %1521 = vdwg.mxu0
    %v1522 = vadd.f32 %v1405, %v1512
    %v1523 = vadd.f32 %v1406, %v1514
    %v1524 = vadd.f32 %v1407, %v1518
    %v1525 = vadd.f32 %v1408, %v1520
    %s1526 = scalar_lea.vmem %s3, 704
    %v1527 = vld [vmem:[%s1526] sm:$0xff]
    %v1528 = vld [vmem:[%s1526 + $0x8] sm:$0xff]
    %v1529 = vld [vmem:[%s1526 + $0x10] sm:$0xff]
    %v1530 = vld [vmem:[%s1526 + $0x18] sm:$0xff]
    %v1531 = vld [vmem:[%s1526 + $0x20] sm:$0xff]
    %v1532 = vld [vmem:[%s1526 + $0x28] sm:$0xff]
    %v1533 = vld [vmem:[%s1526 + $0x30] sm:$0xff]
    %v1534 = vld [vmem:[%s1526 + $0x38] sm:$0xff]
    %v1535 = vld [vmem:[%s1526 + $0x40] sm:$0xff]
    %v1536 = vld [vmem:[%s1526 + $0x48] sm:$0xff]
    %v1537 = vld [vmem:[%s1526 + $0x50] sm:$0xff]
    %v1538 = vld [vmem:[%s1526 + $0x58] sm:$0xff]
    %v1539 = vld [vmem:[%s1526 + $0x60] sm:$0xff]
    %v1540 = vld [vmem:[%s1526 + $0x68] sm:$0xff]
    %v1541 = vld [vmem:[%s1526 + $0x70] sm:$0xff]
    %v1542 = vld [vmem:[%s1526 + $0x78] sm:$0xff]
    %v1543 = vld [vmem:[%s1526 + $0x80] sm:$0xff]
    %v1544 = vld [vmem:[%s1526 + $0x88] sm:$0xff]
    %v1545 = vld [vmem:[%s1526 + $0x90] sm:$0xff]
    %v1546 = vld [vmem:[%s1526 + $0x98] sm:$0xff]
    %v1547 = vld [vmem:[%s1526 + $0xa0] sm:$0xf]
    %v1548 = vld [vmem:[%s1526 + $0xa8] sm:$0xf]
    %v1549 = vrot.slane %v1065, 4
    %v1550 = vrot.slane %v1066, 4
    %v1551 = vsel %vm544, %v1549, %v1550
    %v1552 = vsel %vm1117, %v1551, 0
    %v1554 = vsel %vm1117, %v1550, 0
    %v1557 = vsel %vm544, %v1547, 0
    %v1560 = vsel %vm544, %v1548, 0
    %1562 = vmatprep.subr.mxu0 %v1528
    %1563 = vmatpush1.msra.mxu0 %v1527
    %1564 = vmatprep.subr.mxu0 %v1530
    %1565 = vmatpush1.msra.mxu0 %v1529
    %1566 = vmatprep.subr.mxu0 %v1532
    %1567 = vmatpush1.msra.mxu0 %v1531
    %1568 = vmatprep.subr.mxu0 %v1534
    %1569 = vmatpush1.msra.mxu0 %v1533
    %1570 = vmatprep.subr.mxu0 %v1536
    %1571 = vmatpush1.msra.mxu0 %v1535
    %1572 = vmatprep.subr.mxu0 %v1538
    %1573 = vmatpush1.msra.mxu0 %v1537
    %1574 = vmatprep.subr.mxu0 %v1540
    %1575 = vmatpush1.msra.mxu0 %v1539
    %1576 = vmatprep.subr.mxu0 %v1542
    %1577 = vmatpush1.msra.mxu0 %v1541
    %1578 = vmatprep.subr.mxu0 %v1544
    %1579 = vmatpush1.msra.mxu0 %v1543
    %1580 = vmatprep.subr.mxu0 %v1546
    %1581 = vmatpush1.msra.mxu0 %v1545
    %1582 = vmatprep.subr.mxu0 %v1560
    %1583 = vmatpush1.msra.mxu0 %v1557
    %1584 = vmatprep.subr.mxu0 0.0
    %1585 = vmatpush1.msra.mxu0 0.0
    %1586 = vmatprep.subr.mxu0 0.0
    %1587 = vmatpush1.msra.mxu0 0.0
    %1588 = vmatprep.subr.mxu0 0.0
    %1589 = vmatpush1.msra.mxu0 0.0
    %1590 = vmatprep.subr.mxu0 0.0
    %1591 = vmatpush1.msra.mxu0 0.0
    %1592 = vmatprep.subr.mxu0 0.0
    %1593 = vmatpush1.msra.mxu0 0.0
    %1594 = vmatprep.subr.mxu0 0.0
    %1595 = vmatpush1.msra.mxu0 0.0
    %1596 = vmatprep.subr.mxu0 0.0
    %1597 = vmatpush1.msra.mxu0 0.0
    %1598 = vmatprep.subr.mxu0 0.0
    %1599 = vmatpush1.msra.mxu0 0.0
    %1600 = vmatprep.subr.mxu0 0.0
    %1601 = vmatpush1.msra.mxu0 0.0
    %1602 = vmatprep.subr.mxu0 0.0
    %1603 = vmatpush1.msra.mxu0 0.0
    %1604 = vmatprep.subr.mxu0 0.0
    %1605 = vmatpush1.msra.mxu0 0.0
    %1606 = vmatprep.subr.mxu0 0.0
    %1607 = vmatpush1.msra.mxu0 0.0
    %1608 = vmatprep.subr.mxu0 0.0
    %1609 = vmatpush1.msra.mxu0 0.0
    %1610 = vmatprep.subr.mxu0 0.0
    %1611 = vmatpush1.msra.mxu0 0.0
    %1612 = vmatprep.subr.mxu0 0.0
    %1613 = vmatpush1.msra.mxu0 0.0
    %1614 = vmatprep.subr.mxu0 0.0
    %1615 = vmatpush1.msra.mxu0 0.0
    %1616 = vmatprep.subr.mxu0 0.0
    %1617 = vmatpush1.msra.mxu0 0.0
    %1618 = vmatprep.subr.mxu0 0.0
    %1619 = vmatpush1.msra.mxu0 0.0
    %1620 = vmatprep.subr.mxu0 0.0
    %1621 = vmatpush1.msra.mxu0 0.0
    %1622 = vmatprep.subr.mxu0 0.0
    %1623 = vmatpush1.msra.mxu0 0.0
    %1624 = vmatprep.subr.mxu0 0.0
    %1625 = vmatpush1.msra.mxu0 0.0
    %1626 = vmatprep.mubr.f32.mxu0 0.0
    %1627 = vmatmul.mubr.f32.gmra.mrb[0].mxu0 %v1552
    %v1628 = vpop.f32.mrb[0].mxu0
    %v1629 = vadd.f32 0.0, %v1628
    %v1630 = vpop.f32.mrb[0].mxu0
    %v1631 = vadd.f32 0.0, %v1630
    %1632 = vmatprep.mubr.f32.mxu0 0.0
    %1633 = vmatmul.mubr.f32.gmra.mrb[0].mxu0 %v1554
    %v1634 = vpop.f32.mrb[0].mxu0
    %v1635 = vadd.f32 0.0, %v1634
    %v1636 = vpop.f32.mrb[0].mxu0
    %v1637 = vadd.f32 0.0, %v1636
    %1638 = vdwg.mxu0
    %v1639 = vadd.f32 %v1522, %v1629
    %v1640 = vadd.f32 %v1523, %v1631
    %v1641 = vadd.f32 %v1524, %v1635
    %v1642 = vadd.f32 %v1525, %v1637
    %v1643 = vld [vmem:[%s4] sm:$0x3]
    %v1645 = vlaneseq
    %v1646 = vshrl.u32 %v1645, 7
    %v1647 = vsub.s32 0, %v1646
    %v1648 = vrot.slane %v1643, %v1647
    %v1649 = vlaneseq
    %v1650 = vshrl.u32 %v1649, 7
    %v1651 = vsub.s32 1, %v1650
    %v1652 = vrot.slane %v1643, %v1651
    %v1655 = vadd.f32 %v1639, %v1648
    %v1656 = vadd.f32 %v1640, %v1652
    %v1657 = vadd.f32 %v1641, %v1648
    %v1658 = vadd.f32 %v1642, %v1652
    %v1659 = vmax.f32 %v1655, 0.0
    %v1660 = vmax.f32 %v1656, 0.0
    %v1661 = vmax.f32 %v1657, 0.0
    %v1662 = vmax.f32 %v1658, 0.0
    %v1663 = vld [vmem:[%s11] sm:$0x1f]
    %vm1664 = vcmask 80896
    %v1666 = vsel %vm1664, %v1663, 0
    %vm1668 = vcmask 1041408
    %v1670 = vsel %vm1668, %v1661, 0
    %v1673 = vsel %vm1668, %v1662, 0
    %1675 = vmatprep.subr.mxu0 %v1660
    %1676 = vmatpush1.msra.mxu0 %v1659
    %1677 = vmatprep.subr.mxu0 %v1673
    %1678 = vmatpush1.msra.mxu0 %v1670
    %1679 = vmatprep.subr.mxu0 0.0
    %1680 = vmatpush1.msra.mxu0 0.0
    %1681 = vmatprep.subr.mxu0 0.0
    %1682 = vmatpush1.msra.mxu0 0.0
    %1683 = vmatprep.subr.mxu0 0.0
    %1684 = vmatpush1.msra.mxu0 0.0
    %1685 = vmatprep.subr.mxu0 0.0
    %1686 = vmatpush1.msra.mxu0 0.0
    %1687 = vmatprep.subr.mxu0 0.0
    %1688 = vmatpush1.msra.mxu0 0.0
    %1689 = vmatprep.subr.mxu0 0.0
    %1690 = vmatpush1.msra.mxu0 0.0
    %1691 = vmatprep.subr.mxu0 0.0
    %1692 = vmatpush1.msra.mxu0 0.0
    %1693 = vmatprep.subr.mxu0 0.0
    %1694 = vmatpush1.msra.mxu0 0.0
    %1695 = vmatprep.subr.mxu0 0.0
    %1696 = vmatpush1.msra.mxu0 0.0
    %1697 = vmatprep.subr.mxu0 0.0
    %1698 = vmatpush1.msra.mxu0 0.0
    %1699 = vmatprep.subr.mxu0 0.0
    %1700 = vmatpush1.msra.mxu0 0.0
    %1701 = vmatprep.subr.mxu0 0.0
    %1702 = vmatpush1.msra.mxu0 0.0
    %1703 = vmatprep.subr.mxu0 0.0
    %1704 = vmatpush1.msra.mxu0 0.0
    %1705 = vmatprep.subr.mxu0 0.0
    %1706 = vmatpush1.msra.mxu0 0.0
    %1707 = vmatprep.subr.mxu0 0.0
    %1708 = vmatpush1.msra.mxu0 0.0
    %1709 = vmatprep.subr.mxu0 0.0
    %1710 = vmatpush1.msra.mxu0 0.0
    %1711 = vmatprep.subr.mxu0 0.0
    %1712 = vmatpush1.msra.mxu0 0.0
    %1713 = vmatprep.subr.mxu0 0.0
    %1714 = vmatpush1.msra.mxu0 0.0
    %1715 = vmatprep.subr.mxu0 0.0
    %1716 = vmatpush1.msra.mxu0 0.0
    %1717 = vmatprep.subr.mxu0 0.0
    %1718 = vmatpush1.msra.mxu0 0.0
    %1719 = vmatprep.subr.mxu0 0.0
    %1720 = vmatpush1.msra.mxu0 0.0
    %1721 = vmatprep.subr.mxu0 0.0
    %1722 = vmatpush1.msra.mxu0 0.0
    %1723 = vmatprep.subr.mxu0 0.0
    %1724 = vmatpush1.msra.mxu0 0.0
    %1725 = vmatprep.subr.mxu0 0.0
    %1726 = vmatpush1.msra.mxu0 0.0
    %1727 = vmatprep.subr.mxu0 0.0
    %1728 = vmatpush1.msra.mxu0 0.0
    %1729 = vmatprep.subr.mxu0 0.0
    %1730 = vmatpush1.msra.mxu0 0.0
    %1731 = vmatprep.subr.mxu0 0.0
    %1732 = vmatpush1.msra.mxu0 0.0
    %1733 = vmatprep.subr.mxu0 0.0
    %1734 = vmatpush1.msra.mxu0 0.0
    %1735 = vmatprep.subr.mxu0 0.0
    %1736 = vmatpush1.msra.mxu0 0.0
    %1737 = vmatprep.subr.mxu0 0.0
    %1738 = vmatpush1.msra.mxu0 0.0
    %1739 = vmatprep.mubr.f32.mxu0 0.0
    %1740 = vmatmul.mubr.f32.gmra.mrb[0].mxu0 %v1666
    %v1741 = vpop.f32.mrb[0].mxu0
    %v1742 = vadd.f32 0.0, %v1741
    %v1743 = vpop.f32.mrb[0].mxu0
    %v1744 = vadd.f32 0.0, %v1743
    %1745 = vdwg.mxu0
    %v1746 = vld [vmem:[%s12] sm:$0x1f]
    %v1748 = vsel %vm1664, %v1746, 0
    %1750 = vmatprep.subr.mxu0 %v1660
    %1751 = vmatpush1.msra.mxu0 %v1659
    %1752 = vmatprep.subr.mxu0 %v1673
    %1753 = vmatpush1.msra.mxu0 %v1670
    %1754 = vmatprep.subr.mxu0 0.0
    %1755 = vmatpush1.msra.mxu0 0.0
    %1756 = vmatprep.subr.mxu0 0.0
    %1757 = vmatpush1.msra.mxu0 0.0
    %1758 = vmatprep.subr.mxu0 0.0
    %1759 = vmatpush1.msra.mxu0 0.0
    %1760 = vmatprep.subr.mxu0 0.0
    %1761 = vmatpush1.msra.mxu0 0.0
    %1762 = vmatprep.subr.mxu0 0.0
    %1763 = vmatpush1.msra.mxu0 0.0
    %1764 = vmatprep.subr.mxu0 0.0
    %1765 = vmatpush1.msra.mxu0 0.0
    %1766 = vmatprep.subr.mxu0 0.0
    %1767 = vmatpush1.msra.mxu0 0.0
    %1768 = vmatprep.subr.mxu0 0.0
    %1769 = vmatpush1.msra.mxu0 0.0
    %1770 = vmatprep.subr.mxu0 0.0
    %1771 = vmatpush1.msra.mxu0 0.0
    %1772 = vmatprep.subr.mxu0 0.0
    %1773 = vmatpush1.msra.mxu0 0.0
    %1774 = vmatprep.subr.mxu0 0.0
    %1775 = vmatpush1.msra.mxu0 0.0
    %1776 = vmatprep.subr.mxu0 0.0
    %1777 = vmatpush1.msra.mxu0 0.0
    %1778 = vmatprep.subr.mxu0 0.0
    %1779 = vmatpush1.msra.mxu0 0.0
    %1780 = vmatprep.subr.mxu0 0.0
    %1781 = vmatpush1.msra.mxu0 0.0
    %1782 = vmatprep.subr.mxu0 0.0
    %1783 = vmatpush1.msra.mxu0 0.0
    %1784 = vmatprep.subr.mxu0 0.0
    %1785 = vmatpush1.msra.mxu0 0.0
    %1786 = vmatprep.subr.mxu0 0.0
    %1787 = vmatpush1.msra.mxu0 0.0
    %1788 = vmatprep.subr.mxu0 0.0
    %1789 = vmatpush1.msra.mxu0 0.0
    %1790 = vmatprep.subr.mxu0 0.0
    %1791 = vmatpush1.msra.mxu0 0.0
    %1792 = vmatprep.subr.mxu0 0.0
    %1793 = vmatpush1.msra.mxu0 0.0
    %1794 = vmatprep.subr.mxu0 0.0
    %1795 = vmatpush1.msra.mxu0 0.0
    %1796 = vmatprep.subr.mxu0 0.0
    %1797 = vmatpush1.msra.mxu0 0.0
    %1798 = vmatprep.subr.mxu0 0.0
    %1799 = vmatpush1.msra.mxu0 0.0
    %1800 = vmatprep.subr.mxu0 0.0
    %1801 = vmatpush1.msra.mxu0 0.0
    %1802 = vmatprep.subr.mxu0 0.0
    %1803 = vmatpush1.msra.mxu0 0.0
    %1804 = vmatprep.subr.mxu0 0.0
    %1805 = vmatpush1.msra.mxu0 0.0
    %1806 = vmatprep.subr.mxu0 0.0
    %1807 = vmatpush1.msra.mxu0 0.0
    %1808 = vmatprep.subr.mxu0 0.0
    %1809 = vmatpush1.msra.mxu0 0.0
    %1810 = vmatprep.subr.mxu0 0.0
    %1811 = vmatpush1.msra.mxu0 0.0
    %1812 = vmatprep.subr.mxu0 0.0
    %1813 = vmatpush1.msra.mxu0 0.0
    %1814 = vmatprep.mubr.f32.mxu0 0.0
    %1815 = vmatmul.mubr.f32.gmra.mrb[0].mxu0 %v1748
    %v1816 = vpop.f32.mrb[0].mxu0
    %v1817 = vadd.f32 0.0, %v1816
    %v1818 = vpop.f32.mrb[0].mxu0
    %v1819 = vadd.f32 0.0, %v1818
    %1820 = vdwg.mxu0
    %v1821 = vmax.f32 %v1742, %v1817
    %v1822 = vmax.f32 %v1744, %v1819
    %v1823 = vld [vmem:[%s13] sm:$0xff]
    %v1824 = vld [vmem:[%s13 + $0x8] sm:$0xff]
    %v1825 = vld [vmem:[%s13 + $0x10] sm:$0xff]
    %v1826 = vld [vmem:[%s13 + $0x18] sm:$0xff]
    %v1827 = vld [vmem:[%s13 + $0x20] sm:$0xff]
    %v1828 = vld [vmem:[%s13 + $0x28] sm:$0xff]
    %v1829 = vld [vmem:[%s13 + $0x30] sm:$0xff]
    %v1830 = vld [vmem:[%s13 + $0x38] sm:$0xff]
    %v1831 = vld [vmem:[%s13 + $0x40] sm:$0xff]
    %v1832 = vld [vmem:[%s13 + $0x48] sm:$0xff]
    %v1833 = vld [vmem:[%s13 + $0x50] sm:$0xff]
    %v1834 = vld [vmem:[%s13 + $0x58] sm:$0xff]
    %v1835 = vld [vmem:[%s13 + $0x60] sm:$0xff]
    %v1836 = vld [vmem:[%s13 + $0x68] sm:$0xff]
    %v1837 = vld [vmem:[%s13 + $0x70] sm:$0xff]
    %v1838 = vld [vmem:[%s13 + $0x78] sm:$0xff]
    %v1839 = vld [vmem:[%s13 + $0x80] sm:$0xff]
    %v1840 = vld [vmem:[%s13 + $0x88] sm:$0xff]
    %v1841 = vld [vmem:[%s13 + $0x90] sm:$0xff]
    %v1842 = vld [vmem:[%s13 + $0x98] sm:$0xff]
    %v1844 = vsel %vm96, %v1822, 0
    %1846 = vmatprep.subr.mxu0 0.0
    %1847 = vmatpush1.msra.mxu0 %v1823
    %1848 = vmatprep.subr.mxu0 0.0
    %1849 = vmatpush1.msra.mxu0 %v1824
    %1850 = vmatprep.subr.mxu0 0.0
    %1851 = vmatpush1.msra.mxu0 %v1825
    %1852 = vmatprep.subr.mxu0 0.0
    %1853 = vmatpush1.msra.mxu0 %v1826
    %1854 = vmatprep.subr.mxu0 0.0
    %1855 = vmatpush1.msra.mxu0 %v1827
    %1856 = vmatprep.subr.mxu0 0.0
    %1857 = vmatpush1.msra.mxu0 %v1828
    %1858 = vmatprep.subr.mxu0 0.0
    %1859 = vmatpush1.msra.mxu0 %v1829
    %1860 = vmatprep.subr.mxu0 0.0
    %1861 = vmatpush1.msra.mxu0 %v1830
    %1862 = vmatprep.subr.mxu0 0.0
    %1863 = vmatpush1.msra.mxu0 %v1831
    %1864 = vmatprep.subr.mxu0 0.0
    %1865 = vmatpush1.msra.mxu0 %v1832
    %1866 = vmatprep.subr.mxu0 0.0
    %1867 = vmatpush1.msra.mxu0 %v1833
    %1868 = vmatprep.subr.mxu0 0.0
    %1869 = vmatpush1.msra.mxu0 %v1834
    %1870 = vmatprep.subr.mxu0 0.0
    %1871 = vmatpush1.msra.mxu0 %v1835
    %1872 = vmatprep.subr.mxu0 0.0
    %1873 = vmatpush1.msra.mxu0 %v1836
    %1874 = vmatprep.subr.mxu0 0.0
    %1875 = vmatpush1.msra.mxu0 %v1837
    %1876 = vmatprep.subr.mxu0 0.0
    %1877 = vmatpush1.msra.mxu0 %v1838
    %1878 = vmatprep.subr.mxu0 0.0
    %1879 = vmatpush1.msra.mxu0 %v1839
    %1880 = vmatprep.subr.mxu0 0.0
    %1881 = vmatpush1.msra.mxu0 %v1840
    %1882 = vmatprep.subr.mxu0 0.0
    %1883 = vmatpush1.msra.mxu0 %v1841
    %1884 = vmatprep.subr.mxu0 0.0
    %1885 = vmatpush1.msra.mxu0 %v1842
    %1886 = vmatprep.subr.mxu0 0.0
    %1887 = vmatpush1.msra.mxu0 0.0
    %1888 = vmatprep.subr.mxu0 0.0
    %1889 = vmatpush1.msra.mxu0 0.0
    %1890 = vmatprep.subr.mxu0 0.0
    %1891 = vmatpush1.msra.mxu0 0.0
    %1892 = vmatprep.subr.mxu0 0.0
    %1893 = vmatpush1.msra.mxu0 0.0
    %1894 = vmatprep.subr.mxu0 0.0
    %1895 = vmatpush1.msra.mxu0 0.0
    %1896 = vmatprep.subr.mxu0 0.0
    %1897 = vmatpush1.msra.mxu0 0.0
    %1898 = vmatprep.subr.mxu0 0.0
    %1899 = vmatpush1.msra.mxu0 0.0
    %1900 = vmatprep.subr.mxu0 0.0
    %1901 = vmatpush1.msra.mxu0 0.0
    %1902 = vmatprep.subr.mxu0 0.0
    %1903 = vmatpush1.msra.mxu0 0.0
    %1904 = vmatprep.subr.mxu0 0.0
    %1905 = vmatpush1.msra.mxu0 0.0
    %1906 = vmatprep.subr.mxu0 0.0
    %1907 = vmatpush1.msra.mxu0 0.0
    %1908 = vmatprep.subr.mxu0 0.0
    %1909 = vmatpush1.msra.mxu0 0.0
    %1910 = vmatprep.mubr.f32.mxu0 %v1844
    %1911 = vmatmul.mubr.f32.gmra.mrb[0].mxu0 %v1821
    %v1912 = vpop.f32.mrb[0].mxu0
    %v1913 = vadd.f32 0.0, %v1912
    %v1914 = vpop.f32.mrb[0].mxu0
    %1915 = vdwg.mxu0
    %v1916 = vld [vmem:[%s14] sm:$0xff]
    %v1917 = vld [vmem:[%s14 + $0x8] sm:$0xff]
    %v1918 = vld [vmem:[%s14 + $0x10] sm:$0xff]
    %v1919 = vld [vmem:[%s14 + $0x18] sm:$0xff]
    %v1920 = vld [vmem:[%s14 + $0x20] sm:$0xff]
    %v1921 = vld [vmem:[%s14 + $0x28] sm:$0xff]
    %v1922 = vld [vmem:[%s14 + $0x30] sm:$0xff]
    %v1923 = vld [vmem:[%s14 + $0x38] sm:$0xff]
    %v1924 = vld [vmem:[%s14 + $0x40] sm:$0xff]
    %v1925 = vld [vmem:[%s14 + $0x48] sm:$0xff]
    %v1926 = vld [vmem:[%s14 + $0x50] sm:$0xff]
    %v1927 = vld [vmem:[%s14 + $0x58] sm:$0xff]
    %v1928 = vld [vmem:[%s14 + $0x60] sm:$0xff]
    %v1929 = vld [vmem:[%s14 + $0x68] sm:$0xff]
    %v1930 = vld [vmem:[%s14 + $0x70] sm:$0xff]
    %v1931 = vld [vmem:[%s14 + $0x78] sm:$0xff]
    %v1932 = vld [vmem:[%s14 + $0x80] sm:$0xff]
    %v1933 = vld [vmem:[%s14 + $0x88] sm:$0xff]
    %v1934 = vld [vmem:[%s14 + $0x90] sm:$0xff]
    %v1935 = vld [vmem:[%s14 + $0x98] sm:$0xff]
    %1936 = vmatprep.subr.mxu0 0.0
    %1937 = vmatpush1.msra.mxu0 %v1916
    %1938 = vmatprep.subr.mxu0 0.0
    %1939 = vmatpush1.msra.mxu0 %v1917
    %1940 = vmatprep.subr.mxu0 0.0
    %1941 = vmatpush1.msra.mxu0 %v1918
    %1942 = vmatprep.subr.mxu0 0.0
    %1943 = vmatpush1.msra.mxu0 %v1919
    %1944 = vmatprep.subr.mxu0 0.0
    %1945 = vmatpush1.msra.mxu0 %v1920
    %1946 = vmatprep.subr.mxu0 0.0
    %1947 = vmatpush1.msra.mxu0 %v1921
    %1948 = vmatprep.subr.mxu0 0.0
    %1949 = vmatpush1.msra.mxu0 %v1922
    %1950 = vmatprep.subr.mxu0 0.0
    %1951 = vmatpush1.msra.mxu0 %v1923
    %1952 = vmatprep.subr.mxu0 0.0
    %1953 = vmatpush1.msra.mxu0 %v1924
    %1954 = vmatprep.subr.mxu0 0.0
    %1955 = vmatpush1.msra.mxu0 %v1925
    %1956 = vmatprep.subr.mxu0 0.0
    %1957 = vmatpush1.msra.mxu0 %v1926
    %1958 = vmatprep.subr.mxu0 0.0
    %1959 = vmatpush1.msra.mxu0 %v1927
    %1960 = vmatprep.subr.mxu0 0.0
    %1961 = vmatpush1.msra.mxu0 %v1928
    %1962 = vmatprep.subr.mxu0 0.0
    %1963 = vmatpush1.msra.mxu0 %v1929
    %1964 = vmatprep.subr.mxu0 0.0
    %1965 = vmatpush1.msra.mxu0 %v1930
    %1966 = vmatprep.subr.mxu0 0.0
    %1967 = vmatpush1.msra.mxu0 %v1931
    %1968 = vmatprep.subr.mxu0 0.0
    %1969 = vmatpush1.msra.mxu0 %v1932
    %1970 = vmatprep.subr.mxu0 0.0
    %1971 = vmatpush1.msra.mxu0 %v1933
    %1972 = vmatprep.subr.mxu0 0.0
    %1973 = vmatpush1.msra.mxu0 %v1934
    %1974 = vmatprep.subr.mxu0 0.0
    %1975 = vmatpush1.msra.mxu0 %v1935
    %1976 = vmatprep.subr.mxu0 0.0
    %1977 = vmatpush1.msra.mxu0 0.0
    %1978 = vmatprep.subr.mxu0 0.0
    %1979 = vmatpush1.msra.mxu0 0.0
    %1980 = vmatprep.subr.mxu0 0.0
    %1981 = vmatpush1.msra.mxu0 0.0
    %1982 = vmatprep.subr.mxu0 0.0
    %1983 = vmatpush1.msra.mxu0 0.0
    %1984 = vmatprep.subr.mxu0 0.0
    %1985 = vmatpush1.msra.mxu0 0.0
    %1986 = vmatprep.subr.mxu0 0.0
    %1987 = vmatpush1.msra.mxu0 0.0
    %1988 = vmatprep.subr.mxu0 0.0
    %1989 = vmatpush1.msra.mxu0 0.0
    %1990 = vmatprep.subr.mxu0 0.0
    %1991 = vmatpush1.msra.mxu0 0.0
    %1992 = vmatprep.subr.mxu0 0.0
    %1993 = vmatpush1.msra.mxu0 0.0
    %1994 = vmatprep.subr.mxu0 0.0
    %1995 = vmatpush1.msra.mxu0 0.0
    %1996 = vmatprep.subr.mxu0 0.0
    %1997 = vmatpush1.msra.mxu0 0.0
    %1998 = vmatprep.subr.mxu0 0.0
    %1999 = vmatpush1.msra.mxu0 0.0
    %2000 = vmatprep.mubr.f32.mxu0 %v1844
    %2001 = vmatmul.mubr.f32.gmra.mrb[0].mxu0 %v1821
    %v2002 = vpop.f32.mrb[0].mxu0
    %v2003 = vadd.f32 0.0, %v2002
    %v2004 = vpop.f32.mrb[0].mxu0
    %2005 = vdwg.mxu0
    %v2006 = vmax.f32 %v1913, %v2003
    %v2007 = vld [vmem:[%s5] sm:$0xff]
    %v2008 = vld [vmem:[%s5 + $0x8] sm:$0xff]
    %v2009 = vld [vmem:[%s5 + $0x10] sm:$0xff]
    %v2010 = vld [vmem:[%s5 + $0x18] sm:$0xff]
    %v2011 = vld [vmem:[%s5 + $0x20] sm:$0xff]
    %v2012 = vld [vmem:[%s5 + $0x28] sm:$0xff]
    %v2013 = vld [vmem:[%s5 + $0x30] sm:$0xff]
    %v2014 = vld [vmem:[%s5 + $0x38] sm:$0xff]
    %v2015 = vld [vmem:[%s5 + $0x40] sm:$0xff]
    %v2016 = vld [vmem:[%s5 + $0x48] sm:$0xff]
    %s2017 = scalar_lea.vmem %s5, 80
    %v2018 = vld [vmem:[%s2017] sm:$0xff]
    %v2019 = vld [vmem:[%s2017 + $0x8] sm:$0xff]
    %v2020 = vld [vmem:[%s2017 + $0x10] sm:$0xff]
    %v2021 = vld [vmem:[%s2017 + $0x18] sm:$0xff]
    %v2022 = vld [vmem:[%s2017 + $0x20] sm:$0xff]
    %v2023 = vld [vmem:[%s2017 + $0x28] sm:$0xff]
    %v2024 = vld [vmem:[%s2017 + $0x30] sm:$0xff]
    %v2025 = vld [vmem:[%s2017 + $0x38] sm:$0xff]
    %v2026 = vld [vmem:[%s2017 + $0x40] sm:$0xff]
    %v2027 = vld [vmem:[%s2017 + $0x48] sm:$0xff]
    %v2029 = vrot.slane %v2006, 1
    %vm2030 = vcmask 654336
    %v2031 = vsel %vm2030, %v2029, 0
    %2033 = vmatprep.subr.mxu0 0.0
    %2034 = vmatpush1.msra.mxu0 %v2018
    %2035 = vmatprep.subr.mxu0 0.0
    %2036 = vmatpush1.msra.mxu0 %v2019
    %2037 = vmatprep.subr.mxu0 0.0
    %2038 = vmatpush1.msra.mxu0 %v2020
    %2039 = vmatprep.subr.mxu0 0.0
    %2040 = vmatpush1.msra.mxu0 %v2021
    %2041 = vmatprep.subr.mxu0 0.0
    %2042 = vmatpush1.msra.mxu0 %v2022
    %2043 = vmatprep.subr.mxu0 0.0
    %2044 = vmatpush1.msra.mxu0 %v2023
    %2045 = vmatprep.subr.mxu0 0.0
    %2046 = vmatpush1.msra.mxu0 %v2024
    %2047 = vmatprep.subr.mxu0 0.0
    %2048 = vmatpush1.msra.mxu0 %v2025
    %2049 = vmatprep.subr.mxu0 0.0
    %2050 = vmatpush1.msra.mxu0 %v2026
    %2051 = vmatprep.subr.mxu0 0.0
    %2052 = vmatpush1.msra.mxu0 %v2027
    %2053 = vmatprep.subr.mxu0 0.0
    %2054 = vmatpush1.msra.mxu0 0.0
    %2055 = vmatprep.subr.mxu0 0.0
    %2056 = vmatpush1.msra.mxu0 0.0
    %2057 = vmatprep.subr.mxu0 0.0
    %2058 = vmatpush1.msra.mxu0 0.0
    %2059 = vmatprep.subr.mxu0 0.0
    %2060 = vmatpush1.msra.mxu0 0.0
    %2061 = vmatprep.subr.mxu0 0.0
    %2062 = vmatpush1.msra.mxu0 0.0
    %2063 = vmatprep.subr.mxu0 0.0
    %2064 = vmatpush1.msra.mxu0 0.0
    %2065 = vmatprep.subr.mxu0 0.0
    %2066 = vmatpush1.msra.mxu0 0.0
    %2067 = vmatprep.subr.mxu0 0.0
    %2068 = vmatpush1.msra.mxu0 0.0
    %2069 = vmatprep.subr.mxu0 0.0
    %2070 = vmatpush1.msra.mxu0 0.0
    %2071 = vmatprep.subr.mxu0 0.0
    %2072 = vmatpush1.msra.mxu0 0.0
    %2073 = vmatprep.subr.mxu0 0.0
    %2074 = vmatpush1.msra.mxu0 0.0
    %2075 = vmatprep.subr.mxu0 0.0
    %2076 = vmatpush1.msra.mxu0 0.0
    %2077 = vmatprep.subr.mxu0 0.0
    %2078 = vmatpush1.msra.mxu0 0.0
    %2079 = vmatprep.subr.mxu0 0.0
    %2080 = vmatpush1.msra.mxu0 0.0
    %2081 = vmatprep.subr.mxu0 0.0
    %2082 = vmatpush1.msra.mxu0 0.0
    %2083 = vmatprep.subr.mxu0 0.0
    %2084 = vmatpush1.msra.mxu0 0.0
    %2085 = vmatprep.subr.mxu0 0.0
    %2086 = vmatpush1.msra.mxu0 0.0
    %2087 = vmatprep.subr.mxu0 0.0
    %2088 = vmatpush1.msra.mxu0 0.0
    %2089 = vmatprep.subr.mxu0 0.0
    %2090 = vmatpush1.msra.mxu0 0.0
    %2091 = vmatprep.subr.mxu0 0.0
    %2092 = vmatpush1.msra.mxu0 0.0
    %2093 = vmatprep.subr.mxu0 0.0
    %2094 = vmatpush1.msra.mxu0 0.0
    %2095 = vmatprep.subr.mxu0 0.0
    %2096 = vmatpush1.msra.mxu0 0.0
    %2097 = vmatprep.mubr.f32.mxu0 0.0
    %2098 = vmatmul.mubr.f32.gmra.mrb[0].mxu0 %v2031
    %v2099 = vpop.f32.mrb[0].mxu0
    %v2100 = vadd.f32 0.0, %v2099
    %v2101 = vpop.f32.mrb[0].mxu0
    %2102 = vdwg.mxu0
    %v2103 = vsel %vm2030, %v2006, 0
    %2105 = vmatprep.subr.mxu0 0.0
    %2106 = vmatpush1.msra.mxu0 %v2007
    %2107 = vmatprep.subr.mxu0 0.0
    %2108 = vmatpush1.msra.mxu0 %v2008
    %2109 = vmatprep.subr.mxu0 0.0
    %2110 = vmatpush1.msra.mxu0 %v2009
    %2111 = vmatprep.subr.mxu0 0.0
    %2112 = vmatpush1.msra.mxu0 %v2010
    %2113 = vmatprep.subr.mxu0 0.0
    %2114 = vmatpush1.msra.mxu0 %v2011
    %2115 = vmatprep.subr.mxu0 0.0
    %2116 = vmatpush1.msra.mxu0 %v2012
    %2117 = vmatprep.subr.mxu0 0.0
    %2118 = vmatpush1.msra.mxu0 %v2013
    %2119 = vmatprep.subr.mxu0 0.0
    %2120 = vmatpush1.msra.mxu0 %v2014
    %2121 = vmatprep.subr.mxu0 0.0
    %2122 = vmatpush1.msra.mxu0 %v2015
    %2123 = vmatprep.subr.mxu0 0.0
    %2124 = vmatpush1.msra.mxu0 %v2016
    %2125 = vmatprep.subr.mxu0 0.0
    %2126 = vmatpush1.msra.mxu0 0.0
    %2127 = vmatprep.subr.mxu0 0.0
    %2128 = vmatpush1.msra.mxu0 0.0
    %2129 = vmatprep.subr.mxu0 0.0
    %2130 = vmatpush1.msra.mxu0 0.0
    %2131 = vmatprep.subr.mxu0 0.0
    %2132 = vmatpush1.msra.mxu0 0.0
    %2133 = vmatprep.subr.mxu0 0.0
    %2134 = vmatpush1.msra.mxu0 0.0
    %2135 = vmatprep.subr.mxu0 0.0
    %2136 = vmatpush1.msra.mxu0 0.0
    %2137 = vmatprep.subr.mxu0 0.0
    %2138 = vmatpush1.msra.mxu0 0.0
    %2139 = vmatprep.subr.mxu0 0.0
    %2140 = vmatpush1.msra.mxu0 0.0
    %2141 = vmatprep.subr.mxu0 0.0
    %2142 = vmatpush1.msra.mxu0 0.0
    %2143 = vmatprep.subr.mxu0 0.0
    %2144 = vmatpush1.msra.mxu0 0.0
    %2145 = vmatprep.subr.mxu0 0.0
    %2146 = vmatpush1.msra.mxu0 0.0
    %2147 = vmatprep.subr.mxu0 0.0
    %2148 = vmatpush1.msra.mxu0 0.0
    %2149 = vmatprep.subr.mxu0 0.0
    %2150 = vmatpush1.msra.mxu0 0.0
    %2151 = vmatprep.subr.mxu0 0.0
    %2152 = vmatpush1.msra.mxu0 0.0
    %2153 = vmatprep.subr.mxu0 0.0
    %2154 = vmatpush1.msra.mxu0 0.0
    %2155 = vmatprep.subr.mxu0 0.0
    %2156 = vmatpush1.msra.mxu0 0.0
    %2157 = vmatprep.subr.mxu0 0.0
    %2158 = vmatpush1.msra.mxu0 0.0
    %2159 = vmatprep.subr.mxu0 0.0
    %2160 = vmatpush1.msra.mxu0 0.0
    %2161 = vmatprep.subr.mxu0 0.0
    %2162 = vmatpush1.msra.mxu0 0.0
    %2163 = vmatprep.subr.mxu0 0.0
    %2164 = vmatpush1.msra.mxu0 0.0
    %2165 = vmatprep.subr.mxu0 0.0
    %2166 = vmatpush1.msra.mxu0 0.0
    %2167 = vmatprep.subr.mxu0 0.0
    %2168 = vmatpush1.msra.mxu0 0.0
    %2169 = vmatprep.mubr.f32.mxu0 0.0
    %2170 = vmatmul.mubr.f32.gmra.mrb[0].mxu0 %v2103
    %v2171 = vpop.f32.mrb[0].mxu0
    %v2172 = vadd.f32 %v2100, %v2171
    %v2173 = vpop.f32.mrb[0].mxu0
    %2174 = vdwg.mxu0
    %s2175 = scalar_lea.vmem %s5, 160
    %v2176 = vld [vmem:[%s2175] sm:$0xff]
    %v2177 = vld [vmem:[%s2175 + $0x8] sm:$0xff]
    %v2178 = vld [vmem:[%s2175 + $0x10] sm:$0xff]
    %v2179 = vld [vmem:[%s2175 + $0x18] sm:$0xff]
    %v2180 = vld [vmem:[%s2175 + $0x20] sm:$0xff]
    %v2181 = vld [vmem:[%s2175 + $0x28] sm:$0xff]
    %v2182 = vld [vmem:[%s2175 + $0x30] sm:$0xff]
    %v2183 = vld [vmem:[%s2175 + $0x38] sm:$0xff]
    %v2184 = vld [vmem:[%s2175 + $0x40] sm:$0xff]
    %v2185 = vld [vmem:[%s2175 + $0x48] sm:$0xff]
    %v2186 = vrot.slane %v2006, 2
    %v2187 = vsel %vm2030, %v2186, 0
    %2189 = vmatprep.subr.mxu0 0.0
    %2190 = vmatpush1.msra.mxu0 %v2176
    %2191 = vmatprep.subr.mxu0 0.0
    %2192 = vmatpush1.msra.mxu0 %v2177
    %2193 = vmatprep.subr.mxu0 0.0
    %2194 = vmatpush1.msra.mxu0 %v2178
    %2195 = vmatprep.subr.mxu0 0.0
    %2196 = vmatpush1.msra.mxu0 %v2179
    %2197 = vmatprep.subr.mxu0 0.0
    %2198 = vmatpush1.msra.mxu0 %v2180
    %2199 = vmatprep.subr.mxu0 0.0
    %2200 = vmatpush1.msra.mxu0 %v2181
    %2201 = vmatprep.subr.mxu0 0.0
    %2202 = vmatpush1.msra.mxu0 %v2182
    %2203 = vmatprep.subr.mxu0 0.0
    %2204 = vmatpush1.msra.mxu0 %v2183
    %2205 = vmatprep.subr.mxu0 0.0
    %2206 = vmatpush1.msra.mxu0 %v2184
    %2207 = vmatprep.subr.mxu0 0.0
    %2208 = vmatpush1.msra.mxu0 %v2185
    %2209 = vmatprep.subr.mxu0 0.0
    %2210 = vmatpush1.msra.mxu0 0.0
    %2211 = vmatprep.subr.mxu0 0.0
    %2212 = vmatpush1.msra.mxu0 0.0
    %2213 = vmatprep.subr.mxu0 0.0
    %2214 = vmatpush1.msra.mxu0 0.0
    %2215 = vmatprep.subr.mxu0 0.0
    %2216 = vmatpush1.msra.mxu0 0.0
    %2217 = vmatprep.subr.mxu0 0.0
    %2218 = vmatpush1.msra.mxu0 0.0
    %2219 = vmatprep.subr.mxu0 0.0
    %2220 = vmatpush1.msra.mxu0 0.0
    %2221 = vmatprep.subr.mxu0 0.0
    %2222 = vmatpush1.msra.mxu0 0.0
    %2223 = vmatprep.subr.mxu0 0.0
    %2224 = vmatpush1.msra.mxu0 0.0
    %2225 = vmatprep.subr.mxu0 0.0
    %2226 = vmatpush1.msra.mxu0 0.0
    %2227 = vmatprep.subr.mxu0 0.0
    %2228 = vmatpush1.msra.mxu0 0.0
    %2229 = vmatprep.subr.mxu0 0.0
    %2230 = vmatpush1.msra.mxu0 0.0
    %2231 = vmatprep.subr.mxu0 0.0
    %2232 = vmatpush1.msra.mxu0 0.0
    %2233 = vmatprep.subr.mxu0 0.0
    %2234 = vmatpush1.msra.mxu0 0.0
    %2235 = vmatprep.subr.mxu0 0.0
    %2236 = vmatpush1.msra.mxu0 0.0
    %2237 = vmatprep.subr.mxu0 0.0
    %2238 = vmatpush1.msra.mxu0 0.0
    %2239 = vmatprep.subr.mxu0 0.0
    %2240 = vmatpush1.msra.mxu0 0.0
    %2241 = vmatprep.subr.mxu0 0.0
    %2242 = vmatpush1.msra.mxu0 0.0
    %2243 = vmatprep.subr.mxu0 0.0
    %2244 = vmatpush1.msra.mxu0 0.0
    %2245 = vmatprep.subr.mxu0 0.0
    %2246 = vmatpush1.msra.mxu0 0.0
    %2247 = vmatprep.subr.mxu0 0.0
    %2248 = vmatpush1.msra.mxu0 0.0
    %2249 = vmatprep.subr.mxu0 0.0
    %2250 = vmatpush1.msra.mxu0 0.0
    %2251 = vmatprep.subr.mxu0 0.0
    %2252 = vmatpush1.msra.mxu0 0.0
    %2253 = vmatprep.mubr.f32.mxu0 0.0
    %2254 = vmatmul.mubr.f32.gmra.mrb[0].mxu0 %v2187
    %v2255 = vpop.f32.mrb[0].mxu0
    %v2256 = vadd.f32 0.0, %v2255
    %v2257 = vpop.f32.mrb[0].mxu0
    %2258 = vdwg.mxu0
    %v2259 = vadd.f32 %v2172, %v2256
    %s2260 = scalar_lea.vmem %s5, 240
    %v2261 = vld [vmem:[%s2260] sm:$0xff]
    %v2262 = vld [vmem:[%s2260 + $0x8] sm:$0xff]
    %v2263 = vld [vmem:[%s2260 + $0x10] sm:$0xff]
    %v2264 = vld [vmem:[%s2260 + $0x18] sm:$0xff]
    %v2265 = vld [vmem:[%s2260 + $0x20] sm:$0xff]
    %v2266 = vld [vmem:[%s2260 + $0x28] sm:$0xff]
    %v2267 = vld [vmem:[%s2260 + $0x30] sm:$0xff]
    %v2268 = vld [vmem:[%s2260 + $0x38] sm:$0xff]
    %v2269 = vld [vmem:[%s2260 + $0x40] sm:$0xff]
    %v2270 = vld [vmem:[%s2260 + $0x48] sm:$0xff]
    %v2271 = vrot.slane %v2006, 3
    %v2272 = vsel %vm2030, %v2271, 0
    %2274 = vmatprep.subr.mxu0 0.0
    %2275 = vmatpush1.msra.mxu0 %v2261
    %2276 = vmatprep.subr.mxu0 0.0
    %2277 = vmatpush1.msra.mxu0 %v2262
    %2278 = vmatprep.subr.mxu0 0.0
    %2279 = vmatpush1.msra.mxu0 %v2263
    %2280 = vmatprep.subr.mxu0 0.0
    %2281 = vmatpush1.msra.mxu0 %v2264
    %2282 = vmatprep.subr.mxu0 0.0
    %2283 = vmatpush1.msra.mxu0 %v2265
    %2284 = vmatprep.subr.mxu0 0.0
    %2285 = vmatpush1.msra.mxu0 %v2266
    %2286 = vmatprep.subr.mxu0 0.0
    %2287 = vmatpush1.msra.mxu0 %v2267
    %2288 = vmatprep.subr.mxu0 0.0
    %2289 = vmatpush1.msra.mxu0 %v2268
    %2290 = vmatprep.subr.mxu0 0.0
    %2291 = vmatpush1.msra.mxu0 %v2269
    %2292 = vmatprep.subr.mxu0 0.0
    %2293 = vmatpush1.msra.mxu0 %v2270
    %2294 = vmatprep.subr.mxu0 0.0
    %2295 = vmatpush1.msra.mxu0 0.0
    %2296 = vmatprep.subr.mxu0 0.0
    %2297 = vmatpush1.msra.mxu0 0.0
    %2298 = vmatprep.subr.mxu0 0.0
    %2299 = vmatpush1.msra.mxu0 0.0
    %2300 = vmatprep.subr.mxu0 0.0
    %2301 = vmatpush1.msra.mxu0 0.0
    %2302 = vmatprep.subr.mxu0 0.0
    %2303 = vmatpush1.msra.mxu0 0.0
    %2304 = vmatprep.subr.mxu0 0.0
    %2305 = vmatpush1.msra.mxu0 0.0
    %2306 = vmatprep.subr.mxu0 0.0
    %2307 = vmatpush1.msra.mxu0 0.0
    %2308 = vmatprep.subr.mxu0 0.0
    %2309 = vmatpush1.msra.mxu0 0.0
    %2310 = vmatprep.subr.mxu0 0.0
    %2311 = vmatpush1.msra.mxu0 0.0
    %2312 = vmatprep.subr.mxu0 0.0
    %2313 = vmatpush1.msra.mxu0 0.0
    %2314 = vmatprep.subr.mxu0 0.0
    %2315 = vmatpush1.msra.mxu0 0.0
    %2316 = vmatprep.subr.mxu0 0.0
    %2317 = vmatpush1.msra.mxu0 0.0
    %2318 = vmatprep.subr.mxu0 0.0
    %2319 = vmatpush1.msra.mxu0 0.0
    %2320 = vmatprep.subr.mxu0 0.0
    %2321 = vmatpush1.msra.mxu0 0.0
    %2322 = vmatprep.subr.mxu0 0.0
    %2323 = vmatpush1.msra.mxu0 0.0
    %2324 = vmatprep.subr.mxu0 0.0
    %2325 = vmatpush1.msra.mxu0 0.0
    %2326 = vmatprep.subr.mxu0 0.0
    %2327 = vmatpush1.msra.mxu0 0.0
    %2328 = vmatprep.subr.mxu0 0.0
    %2329 = vmatpush1.msra.mxu0 0.0
    %2330 = vmatprep.subr.mxu0 0.0
    %2331 = vmatpush1.msra.mxu0 0.0
    %2332 = vmatprep.subr.mxu0 0.0
    %2333 = vmatpush1.msra.mxu0 0.0
    %2334 = vmatprep.subr.mxu0 0.0
    %2335 = vmatpush1.msra.mxu0 0.0
    %2336 = vmatprep.subr.mxu0 0.0
    %2337 = vmatpush1.msra.mxu0 0.0
    %2338 = vmatprep.mubr.f32.mxu0 0.0
    %2339 = vmatmul.mubr.f32.gmra.mrb[0].mxu0 %v2272
    %v2340 = vpop.f32.mrb[0].mxu0
    %v2341 = vadd.f32 0.0, %v2340
    %v2342 = vpop.f32.mrb[0].mxu0
    %2343 = vdwg.mxu0
    %v2344 = vadd.f32 %v2259, %v2341
    %s2345 = scalar_lea.vmem %s5, 320
    %v2346 = vld [vmem:[%s2345] sm:$0xff]
    %v2347 = vld [vmem:[%s2345 + $0x8] sm:$0xff]
    %v2348 = vld [vmem:[%s2345 + $0x10] sm:$0xff]
    %v2349 = vld [vmem:[%s2345 + $0x18] sm:$0xff]
    %v2350 = vld [vmem:[%s2345 + $0x20] sm:$0xff]
    %v2351 = vld [vmem:[%s2345 + $0x28] sm:$0xff]
    %v2352 = vld [vmem:[%s2345 + $0x30] sm:$0xff]
    %v2353 = vld [vmem:[%s2345 + $0x38] sm:$0xff]
    %v2354 = vld [vmem:[%s2345 + $0x40] sm:$0xff]
    %v2355 = vld [vmem:[%s2345 + $0x48] sm:$0xff]
    %v2356 = vrot.slane %v2006, 4
    %v2357 = vsel %vm2030, %v2356, 0
    %2359 = vmatprep.subr.mxu0 0.0
    %2360 = vmatpush1.msra.mxu0 %v2346
    %2361 = vmatprep.subr.mxu0 0.0
    %2362 = vmatpush1.msra.mxu0 %v2347
    %2363 = vmatprep.subr.mxu0 0.0
    %2364 = vmatpush1.msra.mxu0 %v2348
    %2365 = vmatprep.subr.mxu0 0.0
    %2366 = vmatpush1.msra.mxu0 %v2349
    %2367 = vmatprep.subr.mxu0 0.0
    %2368 = vmatpush1.msra.mxu0 %v2350
    %2369 = vmatprep.subr.mxu0 0.0
    %2370 = vmatpush1.msra.mxu0 %v2351
    %2371 = vmatprep.subr.mxu0 0.0
    %2372 = vmatpush1.msra.mxu0 %v2352
    %2373 = vmatprep.subr.mxu0 0.0
    %2374 = vmatpush1.msra.mxu0 %v2353
    %2375 = vmatprep.subr.mxu0 0.0
    %2376 = vmatpush1.msra.mxu0 %v2354
    %2377 = vmatprep.subr.mxu0 0.0
    %2378 = vmatpush1.msra.mxu0 %v2355
    %2379 = vmatprep.subr.mxu0 0.0
    %2380 = vmatpush1.msra.mxu0 0.0
    %2381 = vmatprep.subr.mxu0 0.0
    %2382 = vmatpush1.msra.mxu0 0.0
    %2383 = vmatprep.subr.mxu0 0.0
    %2384 = vmatpush1.msra.mxu0 0.0
    %2385 = vmatprep.subr.mxu0 0.0
    %2386 = vmatpush1.msra.mxu0 0.0
    %2387 = vmatprep.subr.mxu0 0.0
    %2388 = vmatpush1.msra.mxu0 0.0
    %2389 = vmatprep.subr.mxu0 0.0
    %2390 = vmatpush1.msra.mxu0 0.0
    %2391 = vmatprep.subr.mxu0 0.0
    %2392 = vmatpush1.msra.mxu0 0.0
    %2393 = vmatprep.subr.mxu0 0.0
    %2394 = vmatpush1.msra.mxu0 0.0
    %2395 = vmatprep.subr.mxu0 0.0
    %2396 = vmatpush1.msra.mxu0 0.0
    %2397 = vmatprep.subr.mxu0 0.0
    %2398 = vmatpush1.msra.mxu0 0.0
    %2399 = vmatprep.subr.mxu0 0.0
    %2400 = vmatpush1.msra.mxu0 0.0
    %2401 = vmatprep.subr.mxu0 0.0
    %2402 = vmatpush1.msra.mxu0 0.0
    %2403 = vmatprep.subr.mxu0 0.0
    %2404 = vmatpush1.msra.mxu0 0.0
    %2405 = vmatprep.subr.mxu0 0.0
    %2406 = vmatpush1.msra.mxu0 0.0
    %2407 = vmatprep.subr.mxu0 0.0
    %2408 = vmatpush1.msra.mxu0 0.0
    %2409 = vmatprep.subr.mxu0 0.0
    %2410 = vmatpush1.msra.mxu0 0.0
    %2411 = vmatprep.subr.mxu0 0.0
    %2412 = vmatpush1.msra.mxu0 0.0
    %2413 = vmatprep.subr.mxu0 0.0
    %2414 = vmatpush1.msra.mxu0 0.0
    %2415 = vmatprep.subr.mxu0 0.0
    %2416 = vmatpush1.msra.mxu0 0.0
    %2417 = vmatprep.subr.mxu0 0.0
    %2418 = vmatpush1.msra.mxu0 0.0
    %2419 = vmatprep.subr.mxu0 0.0
    %2420 = vmatpush1.msra.mxu0 0.0
    %2421 = vmatprep.subr.mxu0 0.0
    %2422 = vmatpush1.msra.mxu0 0.0
    %2423 = vmatprep.mubr.f32.mxu0 0.0
    %2424 = vmatmul.mubr.f32.gmra.mrb[0].mxu0 %v2357
    %v2425 = vpop.f32.mrb[0].mxu0
    %v2426 = vadd.f32 0.0, %v2425
    %v2427 = vpop.f32.mrb[0].mxu0
    %2428 = vdwg.mxu0
    %v2429 = vadd.f32 %v2344, %v2426
    %v2430 = vld [vmem:[%s6] sm:$0x1]
    %v2431 = vadd.f32 %v2429, %v2430
    %v2432 = vmax.f32 %v2431, 0.0
    %v2433 = vld [vmem:[%s15] sm:$0xff]
    %v2434 = vld [vmem:[%s15 + $0x8] sm:$0xff]
    %v2435 = vld [vmem:[%s15 + $0x10] sm:$0xff]
    %v2436 = vld [vmem:[%s15 + $0x18] sm:$0xff]
    %v2437 = vld [vmem:[%s15 + $0x20] sm:$0xff]
    %v2438 = vld [vmem:[%s15 + $0x28] sm:$0xff]
    %v2439 = vld [vmem:[%s15 + $0x30] sm:$0xff]
    %v2440 = vld [vmem:[%s15 + $0x38] sm:$0xff]
    %v2441 = vld [vmem:[%s15 + $0x40] sm:$0xff]
    %v2442 = vld [vmem:[%s15 + $0x48] sm:$0xff]
    %v2443 = vld [vmem:[%s15 + $0x50] sm:$0xff]
    %v2444 = vld [vmem:[%s15 + $0x58] sm:$0xff]
    %v2445 = vld [vmem:[%s15 + $0x60] sm:$0xff]
    %v2446 = vld [vmem:[%s15 + $0x68] sm:$0xff]
    %v2447 = vld [vmem:[%s15 + $0x70] sm:$0xff]
    %v2448 = vld [vmem:[%s16] sm:$0x1]
    %vm2449 = vcmask 982016
    %v2451 = vsel %vm2449, %v2432, 0
    %2453 = vmatprep.subr.mxu0 0.0
    %2454 = vmatpush1.msra.mxu0 %v2433
    %2455 = vmatprep.subr.mxu0 0.0
    %2456 = vmatpush1.msra.mxu0 %v2434
    %2457 = vmatprep.subr.mxu0 0.0
    %2458 = vmatpush1.msra.mxu0 %v2435
    %2459 = vmatprep.subr.mxu0 0.0
    %2460 = vmatpush1.msra.mxu0 %v2436
    %2461 = vmatprep.subr.mxu0 0.0
    %2462 = vmatpush1.msra.mxu0 %v2437
    %2463 = vmatprep.subr.mxu0 0.0
    %2464 = vmatpush1.msra.mxu0 %v2438
    %2465 = vmatprep.subr.mxu0 0.0
    %2466 = vmatpush1.msra.mxu0 %v2439
    %2467 = vmatprep.subr.mxu0 0.0
    %2468 = vmatpush1.msra.mxu0 %v2440
    %2469 = vmatprep.subr.mxu0 0.0
    %2470 = vmatpush1.msra.mxu0 %v2441
    %2471 = vmatprep.subr.mxu0 0.0
    %2472 = vmatpush1.msra.mxu0 %v2442
    %2473 = vmatprep.subr.mxu0 0.0
    %2474 = vmatpush1.msra.mxu0 %v2443
    %2475 = vmatprep.subr.mxu0 0.0
    %2476 = vmatpush1.msra.mxu0 %v2444
    %2477 = vmatprep.subr.mxu0 0.0
    %2478 = vmatpush1.msra.mxu0 %v2445
    %2479 = vmatprep.subr.mxu0 0.0
    %2480 = vmatpush1.msra.mxu0 %v2446
    %2481 = vmatprep.subr.mxu0 0.0
    %2482 = vmatpush1.msra.mxu0 %v2447
    %2483 = vmatprep.subr.mxu0 0.0
    %2484 = vmatpush1.msra.mxu0 0.0
    %2485 = vmatprep.subr.mxu0 0.0
    %2486 = vmatpush1.msra.mxu0 0.0
    %2487 = vmatprep.subr.mxu0 0.0
    %2488 = vmatpush1.msra.mxu0 0.0
    %2489 = vmatprep.subr.mxu0 0.0
    %2490 = vmatpush1.msra.mxu0 0.0
    %2491 = vmatprep.subr.mxu0 0.0
    %2492 = vmatpush1.msra.mxu0 0.0
    %2493 = vmatprep.subr.mxu0 0.0
    %2494 = vmatpush1.msra.mxu0 0.0
    %2495 = vmatprep.subr.mxu0 0.0
    %2496 = vmatpush1.msra.mxu0 0.0
    %2497 = vmatprep.subr.mxu0 0.0
    %2498 = vmatpush1.msra.mxu0 0.0
    %2499 = vmatprep.subr.mxu0 0.0
    %2500 = vmatpush1.msra.mxu0 0.0
    %2501 = vmatprep.subr.mxu0 0.0
    %2502 = vmatpush1.msra.mxu0 0.0
    %2503 = vmatprep.subr.mxu0 0.0
    %2504 = vmatpush1.msra.mxu0 0.0
    %2505 = vmatprep.subr.mxu0 0.0
    %2506 = vmatpush1.msra.mxu0 0.0
    %2507 = vmatprep.subr.mxu0 0.0
    %2508 = vmatpush1.msra.mxu0 0.0
    %2509 = vmatprep.subr.mxu0 0.0
    %2510 = vmatpush1.msra.mxu0 0.0
    %2511 = vmatprep.subr.mxu0 0.0
    %2512 = vmatpush1.msra.mxu0 0.0
    %2513 = vmatprep.subr.mxu0 0.0
    %2514 = vmatpush1.msra.mxu0 0.0
    %2515 = vmatprep.subr.mxu0 0.0
    %2516 = vmatpush1.msra.mxu0 0.0
    %2517 = vmatprep.mubr.f32.mxu0 0.0
    %2518 = vmatmul.mubr.f32.gmra.mrb[0].mxu0 %v2451
    %v2519 = vpop.f32.mrb[0].mxu0
    %v2520 = vadd.f32 %v2448, %v2519
    %v2521 = vpop.f32.mrb[0].mxu0
    %2522 = vdwg.mxu0
    %v2523 = vmax.f32 %v2520, 0.0
    %v2524 = vld [vmem:[%s17] sm:$0xff]
    %v2525 = vld [vmem:[%s17 + $0x8] sm:$0xff]
    %v2526 = vld [vmem:[%s17 + $0x10] sm:$0xff]
    %v2527 = vld [vmem:[%s17 + $0x18] sm:$0xff]
    %v2528 = vld [vmem:[%s17 + $0x20] sm:$0xff]
    %v2529 = vld [vmem:[%s17 + $0x28] sm:$0xff]
    %v2530 = vld [vmem:[%s17 + $0x30] sm:$0xff]
    %v2531 = vld [vmem:[%s17 + $0x38] sm:$0xff]
    %v2532 = vld [vmem:[%s17 + $0x40] sm:$0xff]
    %v2533 = vld [vmem:[%s17 + $0x48] sm:$0xff]
    %v2534 = vld [vmem:[%s17 + $0x50] sm:$0xf]
    %v2535 = vld [vmem:[%s18] sm:$0x1]
    %v2537 = vsel %vm1117, %v2523, 0
    %v2540 = vsel %vm544, %v2534, 0
    %2542 = vmatprep.subr.mxu0 0.0
    %2543 = vmatpush1.msra.mxu0 %v2524
    %2544 = vmatprep.subr.mxu0 0.0
    %2545 = vmatpush1.msra.mxu0 %v2525
    %2546 = vmatprep.subr.mxu0 0.0
    %2547 = vmatpush1.msra.mxu0 %v2526
    %2548 = vmatprep.subr.mxu0 0.0
    %2549 = vmatpush1.msra.mxu0 %v2527
    %2550 = vmatprep.subr.mxu0 0.0
    %2551 = vmatpush1.msra.mxu0 %v2528
    %2552 = vmatprep.subr.mxu0 0.0
    %2553 = vmatpush1.msra.mxu0 %v2529
    %2554 = vmatprep.subr.mxu0 0.0
    %2555 = vmatpush1.msra.mxu0 %v2530
    %2556 = vmatprep.subr.mxu0 0.0
    %2557 = vmatpush1.msra.mxu0 %v2531
    %2558 = vmatprep.subr.mxu0 0.0
    %2559 = vmatpush1.msra.mxu0 %v2532
    %2560 = vmatprep.subr.mxu0 0.0
    %2561 = vmatpush1.msra.mxu0 %v2533
    %2562 = vmatprep.subr.mxu0 0.0
    %2563 = vmatpush1.msra.mxu0 %v2540
    %2564 = vmatprep.subr.mxu0 0.0
    %2565 = vmatpush1.msra.mxu0 0.0
    %2566 = vmatprep.subr.mxu0 0.0
    %2567 = vmatpush1.msra.mxu0 0.0
    %2568 = vmatprep.subr.mxu0 0.0
    %2569 = vmatpush1.msra.mxu0 0.0
    %2570 = vmatprep.subr.mxu0 0.0
    %2571 = vmatpush1.msra.mxu0 0.0
    %2572 = vmatprep.subr.mxu0 0.0
    %2573 = vmatpush1.msra.mxu0 0.0
    %2574 = vmatprep.subr.mxu0 0.0
    %2575 = vmatpush1.msra.mxu0 0.0
    %2576 = vmatprep.subr.mxu0 0.0
    %2577 = vmatpush1.msra.mxu0 0.0
    %2578 = vmatprep.subr.mxu0 0.0
    %2579 = vmatpush1.msra.mxu0 0.0
    %2580 = vmatprep.subr.mxu0 0.0
    %2581 = vmatpush1.msra.mxu0 0.0
    %2582 = vmatprep.subr.mxu0 0.0
    %2583 = vmatpush1.msra.mxu0 0.0
    %2584 = vmatprep.subr.mxu0 0.0
    %2585 = vmatpush1.msra.mxu0 0.0
    %2586 = vmatprep.subr.mxu0 0.0
    %2587 = vmatpush1.msra.mxu0 0.0
    %2588 = vmatprep.subr.mxu0 0.0
    %2589 = vmatpush1.msra.mxu0 0.0
    %2590 = vmatprep.subr.mxu0 0.0
    %2591 = vmatpush1.msra.mxu0 0.0
    %2592 = vmatprep.subr.mxu0 0.0
    %2593 = vmatpush1.msra.mxu0 0.0
    %2594 = vmatprep.subr.mxu0 0.0
    %2595 = vmatpush1.msra.mxu0 0.0
    %2596 = vmatprep.subr.mxu0 0.0
    %2597 = vmatpush1.msra.mxu0 0.0
    %2598 = vmatprep.subr.mxu0 0.0
    %2599 = vmatpush1.msra.mxu0 0.0
    %2600 = vmatprep.subr.mxu0 0.0
    %2601 = vmatpush1.msra.mxu0 0.0
    %2602 = vmatprep.subr.mxu0 0.0
    %2603 = vmatpush1.msra.mxu0 0.0
    %2604 = vmatprep.subr.mxu0 0.0
    %2605 = vmatpush1.msra.mxu0 0.0
    %2606 = vmatprep.mubr.f32.mxu0 0.0
    %2607 = vmatmul.mubr.f32.gmra.mrb[0].mxu0 %v2537
    %v2608 = vpop.f32.mrb[0].mxu0
    %v2609 = vadd.f32 %v2535, %v2608
    %v2610 = vpop.f32.mrb[0].mxu0
    %2611 = vdwg.mxu0
    %2612 = vst [vmem:[#allocation2] sm:$0x1] %v2609
    %s2613 = scalar_lea.vmem %s0, 32
    %v2614 = vld [vmem:[%s2613] sm:$0xff]
    %v2615 = vld [vmem:[%s2613 + $0x8] sm:$0xff]
    %v2616 = vld [vmem:[%s2613 + $0x10] sm:$0xff]
    %v2617 = vld [vmem:[%s2613 + $0x18] sm:$0xff]
    %v2618 = vld [vmem:[%s1] sm:$0xff]
    %v2619 = vld [vmem:[%s1 + $0x8] sm:$0xff]
    %v2620 = vld [vmem:[%s1 + $0x10] sm:$0xff]
    %v2621 = vld [vmem:[%s1 + $0x18] sm:$0xff]
    %v2622 = vld [vmem:[%s1 + $0x20] sm:$0xff]
    %v2623 = vld [vmem:[%s1 + $0x28] sm:$0xff]
    %v2624 = vld [vmem:[%s1 + $0x30] sm:$0xff]
    %v2625 = vld [vmem:[%s1 + $0x38] sm:$0xff]
    %v2626 = vld [vmem:[%s75] sm:$0xff]
    %v2627 = vld [vmem:[%s75 + $0x8] sm:$0xff]
    %v2628 = vld [vmem:[%s75 + $0x10] sm:$0xff]
    %v2629 = vld [vmem:[%s75 + $0x18] sm:$0xff]
    %v2630 = vld [vmem:[%s75 + $0x20] sm:$0xff]
    %v2631 = vld [vmem:[%s75 + $0x28] sm:$0xff]
    %v2632 = vld [vmem:[%s75 + $0x30] sm:$0xff]
    %v2633 = vld [vmem:[%s75 + $0x38] sm:$0xff]
    %v2638 = vrot.slane %v2614, 1
    %v2639 = vrot.slane %v2615, 1
    %v2640 = vsel %vm88, %v2638, %v2639
    %v2641 = vrot.slane %v2616, 1
    %v2642 = vsel %vm88, %v2639, %v2641
    %v2643 = vrot.slane %v2617, 1
    %v2644 = vsel %vm88, %v2641, %v2643
    %v2645 = vsel %vm96, %v2640, 0
    %v2647 = vsel %vm96, %v2642, 0
    %v2649 = vsel %vm96, %v2644, 0
    %v2651 = vsel %vm96, %v2643, 0
    %2653 = vmatprep.subr.mxu0 %v2627
    %2654 = vmatpush1.msra.mxu0 %v2626
    %2655 = vmatprep.subr.mxu0 %v2629
    %2656 = vmatpush1.msra.mxu0 %v2628
    %2657 = vmatprep.subr.mxu0 %v2631
    %2658 = vmatpush1.msra.mxu0 %v2630
    %2659 = vmatprep.subr.mxu0 %v2633
    %2660 = vmatpush1.msra.mxu0 %v2632
    %2661 = vmatprep.subr.mxu0 0.0
    %2662 = vmatpush1.msra.mxu0 0.0
    %2663 = vmatprep.subr.mxu0 0.0
    %2664 = vmatpush1.msra.mxu0 0.0
    %2665 = vmatprep.subr.mxu0 0.0
    %2666 = vmatpush1.msra.mxu0 0.0
    %2667 = vmatprep.subr.mxu0 0.0
    %2668 = vmatpush1.msra.mxu0 0.0
    %2669 = vmatprep.subr.mxu0 0.0
    %2670 = vmatpush1.msra.mxu0 0.0
    %2671 = vmatprep.subr.mxu0 0.0
    %2672 = vmatpush1.msra.mxu0 0.0
    %2673 = vmatprep.subr.mxu0 0.0
    %2674 = vmatpush1.msra.mxu0 0.0
    %2675 = vmatprep.subr.mxu0 0.0
    %2676 = vmatpush1.msra.mxu0 0.0
    %2677 = vmatprep.subr.mxu0 0.0
    %2678 = vmatpush1.msra.mxu0 0.0
    %2679 = vmatprep.subr.mxu0 0.0
    %2680 = vmatpush1.msra.mxu0 0.0
    %2681 = vmatprep.subr.mxu0 0.0
    %2682 = vmatpush1.msra.mxu0 0.0
    %2683 = vmatprep.subr.mxu0 0.0
    %2684 = vmatpush1.msra.mxu0 0.0
    %2685 = vmatprep.subr.mxu0 0.0
    %2686 = vmatpush1.msra.mxu0 0.0
    %2687 = vmatprep.subr.mxu0 0.0
    %2688 = vmatpush1.msra.mxu0 0.0
    %2689 = vmatprep.subr.mxu0 0.0
    %2690 = vmatpush1.msra.mxu0 0.0
    %2691 = vmatprep.subr.mxu0 0.0
    %2692 = vmatpush1.msra.mxu0 0.0
    %2693 = vmatprep.subr.mxu0 0.0
    %2694 = vmatpush1.msra.mxu0 0.0
    %2695 = vmatprep.subr.mxu0 0.0
    %2696 = vmatpush1.msra.mxu0 0.0
    %2697 = vmatprep.subr.mxu0 0.0
    %2698 = vmatpush1.msra.mxu0 0.0
    %2699 = vmatprep.subr.mxu0 0.0
    %2700 = vmatpush1.msra.mxu0 0.0
    %2701 = vmatprep.subr.mxu0 0.0
    %2702 = vmatpush1.msra.mxu0 0.0
    %2703 = vmatprep.subr.mxu0 0.0
    %2704 = vmatpush1.msra.mxu0 0.0
    %2705 = vmatprep.subr.mxu0 0.0
    %2706 = vmatpush1.msra.mxu0 0.0
    %2707 = vmatprep.subr.mxu0 0.0
    %2708 = vmatpush1.msra.mxu0 0.0
    %2709 = vmatprep.subr.mxu0 0.0
    %2710 = vmatpush1.msra.mxu0 0.0
    %2711 = vmatprep.subr.mxu0 0.0
    %2712 = vmatpush1.msra.mxu0 0.0
    %2713 = vmatprep.subr.mxu0 0.0
    %2714 = vmatpush1.msra.mxu0 0.0
    %2715 = vmatprep.subr.mxu0 0.0
    %2716 = vmatpush1.msra.mxu0 0.0
    %2717 = vmatprep.mubr.f32.mxu0 0.0
    %2718 = vmatmul.mubr.f32.gmra.mrb[0].mxu0 %v2645
    %v2719 = vpop.f32.mrb[0].mxu0
    %v2720 = vadd.f32 0.0, %v2719
    %v2721 = vpop.f32.mrb[0].mxu0
    %v2722 = vadd.f32 0.0, %v2721
    %2723 = vmatprep.mubr.f32.mxu0 0.0
    %2724 = vmatmul.mubr.f32.gmra.mrb[0].mxu0 %v2647
    %v2725 = vpop.f32.mrb[0].mxu0
    %v2726 = vadd.f32 0.0, %v2725
    %v2727 = vpop.f32.mrb[0].mxu0
    %v2728 = vadd.f32 0.0, %v2727
    %2729 = vmatprep.mubr.f32.mxu0 0.0
    %2730 = vmatmul.mubr.f32.gmra.mrb[0].mxu0 %v2649
    %v2731 = vpop.f32.mrb[0].mxu0
    %v2732 = vadd.f32 0.0, %v2731
    %v2733 = vpop.f32.mrb[0].mxu0
    %v2734 = vadd.f32 0.0, %v2733
    %2735 = vmatprep.mubr.f32.mxu0 0.0
    %2736 = vmatmul.mubr.f32.gmra.mrb[0].mxu0 %v2651
    %v2737 = vpop.f32.mrb[0].mxu0
    %v2738 = vadd.f32 0.0, %v2737
    %v2739 = vpop.f32.mrb[0].mxu0
    %v2740 = vadd.f32 0.0, %v2739
    %2741 = vdwg.mxu0
    %v2742 = vsel %vm96, %v2614, 0
    %v2744 = vsel %vm96, %v2615, 0
    %v2746 = vsel %vm96, %v2616, 0
    %v2748 = vsel %vm96, %v2617, 0
    %2750 = vmatprep.subr.mxu0 %v2619
    %2751 = vmatpush1.msra.mxu0 %v2618
    %2752 = vmatprep.subr.mxu0 %v2621
    %2753 = vmatpush1.msra.mxu0 %v2620
    %2754 = vmatprep.subr.mxu0 %v2623
    %2755 = vmatpush1.msra.mxu0 %v2622
    %2756 = vmatprep.subr.mxu0 %v2625
    %2757 = vmatpush1.msra.mxu0 %v2624
    %2758 = vmatprep.subr.mxu0 0.0
    %2759 = vmatpush1.msra.mxu0 0.0
    %2760 = vmatprep.subr.mxu0 0.0
    %2761 = vmatpush1.msra.mxu0 0.0
    %2762 = vmatprep.subr.mxu0 0.0
    %2763 = vmatpush1.msra.mxu0 0.0
    %2764 = vmatprep.subr.mxu0 0.0
    %2765 = vmatpush1.msra.mxu0 0.0
    %2766 = vmatprep.subr.mxu0 0.0
    %2767 = vmatpush1.msra.mxu0 0.0
    %2768 = vmatprep.subr.mxu0 0.0
    %2769 = vmatpush1.msra.mxu0 0.0
    %2770 = vmatprep.subr.mxu0 0.0
    %2771 = vmatpush1.msra.mxu0 0.0
    %2772 = vmatprep.subr.mxu0 0.0
    %2773 = vmatpush1.msra.mxu0 0.0
    %2774 = vmatprep.subr.mxu0 0.0
    %2775 = vmatpush1.msra.mxu0 0.0
    %2776 = vmatprep.subr.mxu0 0.0
    %2777 = vmatpush1.msra.mxu0 0.0
    %2778 = vmatprep.subr.mxu0 0.0
    %2779 = vmatpush1.msra.mxu0 0.0
    %2780 = vmatprep.subr.mxu0 0.0
    %2781 = vmatpush1.msra.mxu0 0.0
    %2782 = vmatprep.subr.mxu0 0.0
    %2783 = vmatpush1.msra.mxu0 0.0
    %2784 = vmatprep.subr.mxu0 0.0
    %2785 = vmatpush1.msra.mxu0 0.0
    %2786 = vmatprep.subr.mxu0 0.0
    %2787 = vmatpush1.msra.mxu0 0.0
    %2788 = vmatprep.subr.mxu0 0.0
    %2789 = vmatpush1.msra.mxu0 0.0
    %2790 = vmatprep.subr.mxu0 0.0
    %2791 = vmatpush1.msra.mxu0 0.0
    %2792 = vmatprep.subr.mxu0 0.0
    %2793 = vmatpush1.msra.mxu0 0.0
    %2794 = vmatprep.subr.mxu0 0.0
    %2795 = vmatpush1.msra.mxu0 0.0
    %2796 = vmatprep.subr.mxu0 0.0
    %2797 = vmatpush1.msra.mxu0 0.0
    %2798 = vmatprep.subr.mxu0 0.0
    %2799 = vmatpush1.msra.mxu0 0.0
    %2800 = vmatprep.subr.mxu0 0.0
    %2801 = vmatpush1.msra.mxu0 0.0
    %2802 = vmatprep.subr.mxu0 0.0
    %2803 = vmatpush1.msra.mxu0 0.0
    %2804 = vmatprep.subr.mxu0 0.0
    %2805 = vmatpush1.msra.mxu0 0.0
    %2806 = vmatprep.subr.mxu0 0.0
    %2807 = vmatpush1.msra.mxu0 0.0
    %2808 = vmatprep.subr.mxu0 0.0
    %2809 = vmatpush1.msra.mxu0 0.0
    %2810 = vmatprep.subr.mxu0 0.0
    %2811 = vmatpush1.msra.mxu0 0.0
    %2812 = vmatprep.subr.mxu0 0.0
    %2813 = vmatpush1.msra.mxu0 0.0
    %2814 = vmatprep.mubr.f32.mxu0 0.0
    %2815 = vmatmul.mubr.f32.gmra.mrb[0].mxu0 %v2742
    %v2816 = vpop.f32.mrb[0].mxu0
    %v2817 = vadd.f32 %v2720, %v2816
    %v2818 = vpop.f32.mrb[0].mxu0
    %v2819 = vadd.f32 %v2722, %v2818
    %2820 = vmatprep.mubr.f32.mxu0 0.0
    %2821 = vmatmul.mubr.f32.gmra.mrb[0].mxu0 %v2744
    %v2822 = vpop.f32.mrb[0].mxu0
    %v2823 = vadd.f32 %v2726, %v2822
    %v2824 = vpop.f32.mrb[0].mxu0
    %v2825 = vadd.f32 %v2728, %v2824
    %2826 = vmatprep.mubr.f32.mxu0 0.0
    %2827 = vmatmul.mubr.f32.gmra.mrb[0].mxu0 %v2746
    %v2828 = vpop.f32.mrb[0].mxu0
    %v2829 = vadd.f32 %v2732, %v2828
    %v2830 = vpop.f32.mrb[0].mxu0
    %v2831 = vadd.f32 %v2734, %v2830
    %2832 = vmatprep.mubr.f32.mxu0 0.0
    %2833 = vmatmul.mubr.f32.gmra.mrb[0].mxu0 %v2748
    %v2834 = vpop.f32.mrb[0].mxu0
    %v2835 = vadd.f32 %v2738, %v2834
    %v2836 = vpop.f32.mrb[0].mxu0
    %v2837 = vadd.f32 %v2740, %v2836
    %2838 = vdwg.mxu0
    %v2839 = vld [vmem:[%s291] sm:$0xff]
    %v2840 = vld [vmem:[%s291 + $0x8] sm:$0xff]
    %v2841 = vld [vmem:[%s291 + $0x10] sm:$0xff]
    %v2842 = vld [vmem:[%s291 + $0x18] sm:$0xff]
    %v2843 = vld [vmem:[%s291 + $0x20] sm:$0xff]
    %v2844 = vld [vmem:[%s291 + $0x28] sm:$0xff]
    %v2845 = vld [vmem:[%s291 + $0x30] sm:$0xff]
    %v2846 = vld [vmem:[%s291 + $0x38] sm:$0xff]
    %v2847 = vrot.slane %v2614, 2
    %v2848 = vrot.slane %v2615, 2
    %v2849 = vsel %vm300, %v2847, %v2848
    %v2850 = vrot.slane %v2616, 2
    %v2851 = vsel %vm300, %v2848, %v2850
    %v2852 = vrot.slane %v2617, 2
    %v2853 = vsel %vm300, %v2850, %v2852
    %v2854 = vsel %vm96, %v2849, 0
    %v2856 = vsel %vm96, %v2851, 0
    %v2858 = vsel %vm96, %v2853, 0
    %v2860 = vsel %vm96, %v2852, 0
    %2862 = vmatprep.subr.mxu0 %v2840
    %2863 = vmatpush1.msra.mxu0 %v2839
    %2864 = vmatprep.subr.mxu0 %v2842
    %2865 = vmatpush1.msra.mxu0 %v2841
    %2866 = vmatprep.subr.mxu0 %v2844
    %2867 = vmatpush1.msra.mxu0 %v2843
    %2868 = vmatprep.subr.mxu0 %v2846
    %2869 = vmatpush1.msra.mxu0 %v2845
    %2870 = vmatprep.subr.mxu0 0.0
    %2871 = vmatpush1.msra.mxu0 0.0
    %2872 = vmatprep.subr.mxu0 0.0
    %2873 = vmatpush1.msra.mxu0 0.0
    %2874 = vmatprep.subr.mxu0 0.0
    %2875 = vmatpush1.msra.mxu0 0.0
    %2876 = vmatprep.subr.mxu0 0.0
    %2877 = vmatpush1.msra.mxu0 0.0
    %2878 = vmatprep.subr.mxu0 0.0
    %2879 = vmatpush1.msra.mxu0 0.0
    %2880 = vmatprep.subr.mxu0 0.0
    %2881 = vmatpush1.msra.mxu0 0.0
    %2882 = vmatprep.subr.mxu0 0.0
    %2883 = vmatpush1.msra.mxu0 0.0
    %2884 = vmatprep.subr.mxu0 0.0
    %2885 = vmatpush1.msra.mxu0 0.0
    %2886 = vmatprep.subr.mxu0 0.0
    %2887 = vmatpush1.msra.mxu0 0.0
    %2888 = vmatprep.subr.mxu0 0.0
    %2889 = vmatpush1.msra.mxu0 0.0
    %2890 = vmatprep.subr.mxu0 0.0
    %2891 = vmatpush1.msra.mxu0 0.0
    %2892 = vmatprep.subr.mxu0 0.0
    %2893 = vmatpush1.msra.mxu0 0.0
    %2894 = vmatprep.subr.mxu0 0.0
    %2895 = vmatpush1.msra.mxu0 0.0
    %2896 = vmatprep.subr.mxu0 0.0
    %2897 = vmatpush1.msra.mxu0 0.0
    %2898 = vmatprep.subr.mxu0 0.0
    %2899 = vmatpush1.msra.mxu0 0.0
    %2900 = vmatprep.subr.mxu0 0.0
    %2901 = vmatpush1.msra.mxu0 0.0
    %2902 = vmatprep.subr.mxu0 0.0
    %2903 = vmatpush1.msra.mxu0 0.0
    %2904 = vmatprep.subr.mxu0 0.0
    %2905 = vmatpush1.msra.mxu0 0.0
    %2906 = vmatprep.subr.mxu0 0.0
    %2907 = vmatpush1.msra.mxu0 0.0
    %2908 = vmatprep.subr.mxu0 0.0
    %2909 = vmatpush1.msra.mxu0 0.0
    %2910 = vmatprep.subr.mxu0 0.0
    %2911 = vmatpush1.msra.mxu0 0.0
    %2912 = vmatprep.subr.mxu0 0.0
    %2913 = vmatpush1.msra.mxu0 0.0
    %2914 = vmatprep.subr.mxu0 0.0
    %2915 = vmatpush1.msra.mxu0 0.0
    %2916 = vmatprep.subr.mxu0 0.0
    %2917 = vmatpush1.msra.mxu0 0.0
    %2918 = vmatprep.subr.mxu0 0.0
    %2919 = vmatpush1.msra.mxu0 0.0
    %2920 = vmatprep.subr.mxu0 0.0
    %2921 = vmatpush1.msra.mxu0 0.0
    %2922 = vmatprep.subr.mxu0 0.0
    %2923 = vmatpush1.msra.mxu0 0.0
    %2924 = vmatprep.subr.mxu0 0.0
    %2925 = vmatpush1.msra.mxu0 0.0
    %2926 = vmatprep.mubr.f32.mxu0 0.0
    %2927 = vmatmul.mubr.f32.gmra.mrb[0].mxu0 %v2854
    %v2928 = vpop.f32.mrb[0].mxu0
    %v2929 = vadd.f32 0.0, %v2928
    %v2930 = vpop.f32.mrb[0].mxu0
    %v2931 = vadd.f32 0.0, %v2930
    %2932 = vmatprep.mubr.f32.mxu0 0.0
    %2933 = vmatmul.mubr.f32.gmra.mrb[0].mxu0 %v2856
    %v2934 = vpop.f32.mrb[0].mxu0
    %v2935 = vadd.f32 0.0, %v2934
    %v2936 = vpop.f32.mrb[0].mxu0
    %v2937 = vadd.f32 0.0, %v2936
    %2938 = vmatprep.mubr.f32.mxu0 0.0
    %2939 = vmatmul.mubr.f32.gmra.mrb[0].mxu0 %v2858
    %v2940 = vpop.f32.mrb[0].mxu0
    %v2941 = vadd.f32 0.0, %v2940
    %v2942 = vpop.f32.mrb[0].mxu0
    %v2943 = vadd.f32 0.0, %v2942
    %2944 = vmatprep.mubr.f32.mxu0 0.0
    %2945 = vmatmul.mubr.f32.gmra.mrb[0].mxu0 %v2860
    %v2946 = vpop.f32.mrb[0].mxu0
    %v2947 = vadd.f32 0.0, %v2946
    %v2948 = vpop.f32.mrb[0].mxu0
    %v2949 = vadd.f32 0.0, %v2948
    %2950 = vdwg.mxu0
    %v2951 = vadd.f32 %v2817, %v2929
    %v2952 = vadd.f32 %v2819, %v2931
    %v2953 = vadd.f32 %v2823, %v2935
    %v2954 = vadd.f32 %v2825, %v2937
    %v2955 = vadd.f32 %v2829, %v2941
    %v2956 = vadd.f32 %v2831, %v2943
    %v2957 = vadd.f32 %v2835, %v2947
    %v2958 = vadd.f32 %v2837, %v2949
    %v2959 = vld [vmem:[%s413] sm:$0xff]
    %v2960 = vld [vmem:[%s413 + $0x8] sm:$0xff]
    %v2961 = vld [vmem:[%s413 + $0x10] sm:$0xff]
    %v2962 = vld [vmem:[%s413 + $0x18] sm:$0xff]
    %v2963 = vld [vmem:[%s413 + $0x20] sm:$0xff]
    %v2964 = vld [vmem:[%s413 + $0x28] sm:$0xff]
    %v2965 = vld [vmem:[%s413 + $0x30] sm:$0xff]
    %v2966 = vld [vmem:[%s413 + $0x38] sm:$0xff]
    %v2967 = vrot.slane %v2614, 3
    %v2968 = vrot.slane %v2615, 3
    %v2969 = vsel %vm422, %v2967, %v2968
    %v2970 = vrot.slane %v2616, 3
    %v2971 = vsel %vm422, %v2968, %v2970
    %v2972 = vrot.slane %v2617, 3
    %v2973 = vsel %vm422, %v2970, %v2972
    %v2974 = vsel %vm96, %v2969, 0
    %v2976 = vsel %vm96, %v2971, 0
    %v2978 = vsel %vm96, %v2973, 0
    %v2980 = vsel %vm96, %v2972, 0
    %2982 = vmatprep.subr.mxu0 %v2960
    %2983 = vmatpush1.msra.mxu0 %v2959
    %2984 = vmatprep.subr.mxu0 %v2962
    %2985 = vmatpush1.msra.mxu0 %v2961
    %2986 = vmatprep.subr.mxu0 %v2964
    %2987 = vmatpush1.msra.mxu0 %v2963
    %2988 = vmatprep.subr.mxu0 %v2966
    %2989 = vmatpush1.msra.mxu0 %v2965
    %2990 = vmatprep.subr.mxu0 0.0
    %2991 = vmatpush1.msra.mxu0 0.0
    %2992 = vmatprep.subr.mxu0 0.0
    %2993 = vmatpush1.msra.mxu0 0.0
    %2994 = vmatprep.subr.mxu0 0.0
    %2995 = vmatpush1.msra.mxu0 0.0
    %2996 = vmatprep.subr.mxu0 0.0
    %2997 = vmatpush1.msra.mxu0 0.0
    %2998 = vmatprep.subr.mxu0 0.0
    %2999 = vmatpush1.msra.mxu0 0.0
    %3000 = vmatprep.subr.mxu0 0.0
    %3001 = vmatpush1.msra.mxu0 0.0
    %3002 = vmatprep.subr.mxu0 0.0
    %3003 = vmatpush1.msra.mxu0 0.0
    %3004 = vmatprep.subr.mxu0 0.0
    %3005 = vmatpush1.msra.mxu0 0.0
    %3006 = vmatprep.subr.mxu0 0.0
    %3007 = vmatpush1.msra.mxu0 0.0
    %3008 = vmatprep.subr.mxu0 0.0
    %3009 = vmatpush1.msra.mxu0 0.0
    %3010 = vmatprep.subr.mxu0 0.0
    %3011 = vmatpush1.msra.mxu0 0.0
    %3012 = vmatprep.subr.mxu0 0.0
    %3013 = vmatpush1.msra.mxu0 0.0
    %3014 = vmatprep.subr.mxu0 0.0
    %3015 = vmatpush1.msra.mxu0 0.0
    %3016 = vmatprep.subr.mxu0 0.0
    %3017 = vmatpush1.msra.mxu0 0.0
    %3018 = vmatprep.subr.mxu0 0.0
    %3019 = vmatpush1.msra.mxu0 0.0
    %3020 = vmatprep.subr.mxu0 0.0
    %3021 = vmatpush1.msra.mxu0 0.0
    %3022 = vmatprep.subr.mxu0 0.0
    %3023 = vmatpush1.msra.mxu0 0.0
    %3024 = vmatprep.subr.mxu0 0.0
    %3025 = vmatpush1.msra.mxu0 0.0
    %3026 = vmatprep.subr.mxu0 0.0
    %3027 = vmatpush1.msra.mxu0 0.0
    %3028 = vmatprep.subr.mxu0 0.0
    %3029 = vmatpush1.msra.mxu0 0.0
    %3030 = vmatprep.subr.mxu0 0.0
    %3031 = vmatpush1.msra.mxu0 0.0
    %3032 = vmatprep.subr.mxu0 0.0
    %3033 = vmatpush1.msra.mxu0 0.0
    %3034 = vmatprep.subr.mxu0 0.0
    %3035 = vmatpush1.msra.mxu0 0.0
    %3036 = vmatprep.subr.mxu0 0.0
    %3037 = vmatpush1.msra.mxu0 0.0
    %3038 = vmatprep.subr.mxu0 0.0
    %3039 = vmatpush1.msra.mxu0 0.0
    %3040 = vmatprep.subr.mxu0 0.0
    %3041 = vmatpush1.msra.mxu0 0.0
    %3042 = vmatprep.subr.mxu0 0.0
    %3043 = vmatpush1.msra.mxu0 0.0
    %3044 = vmatprep.subr.mxu0 0.0
    %3045 = vmatpush1.msra.mxu0 0.0
    %3046 = vmatprep.mubr.f32.mxu0 0.0
    %3047 = vmatmul.mubr.f32.gmra.mrb[0].mxu0 %v2974
    %v3048 = vpop.f32.mrb[0].mxu0
    %v3049 = vadd.f32 0.0, %v3048
    %v3050 = vpop.f32.mrb[0].mxu0
    %v3051 = vadd.f32 0.0, %v3050
    %3052 = vmatprep.mubr.f32.mxu0 0.0
    %3053 = vmatmul.mubr.f32.gmra.mrb[0].mxu0 %v2976
    %v3054 = vpop.f32.mrb[0].mxu0
    %v3055 = vadd.f32 0.0, %v3054
    %v3056 = vpop.f32.mrb[0].mxu0
    %v3057 = vadd.f32 0.0, %v3056
    %3058 = vmatprep.mubr.f32.mxu0 0.0
    %3059 = vmatmul.mubr.f32.gmra.mrb[0].mxu0 %v2978
    %v3060 = vpop.f32.mrb[0].mxu0
    %v3061 = vadd.f32 0.0, %v3060
    %v3062 = vpop.f32.mrb[0].mxu0
    %v3063 = vadd.f32 0.0, %v3062
    %3064 = vmatprep.mubr.f32.mxu0 0.0
    %3065 = vmatmul.mubr.f32.gmra.mrb[0].mxu0 %v2980
    %v3066 = vpop.f32.mrb[0].mxu0
    %v3067 = vadd.f32 0.0, %v3066
    %v3068 = vpop.f32.mrb[0].mxu0
    %v3069 = vadd.f32 0.0, %v3068
    %3070 = vdwg.mxu0
    %v3071 = vadd.f32 %v2951, %v3049
    %v3072 = vadd.f32 %v2952, %v3051
    %v3073 = vadd.f32 %v2953, %v3055
    %v3074 = vadd.f32 %v2954, %v3057
    %v3075 = vadd.f32 %v2955, %v3061
    %v3076 = vadd.f32 %v2956, %v3063
    %v3077 = vadd.f32 %v2957, %v3067
    %v3078 = vadd.f32 %v2958, %v3069
    %v3079 = vld [vmem:[%s535] sm:$0xff]
    %v3080 = vld [vmem:[%s535 + $0x8] sm:$0xff]
    %v3081 = vld [vmem:[%s535 + $0x10] sm:$0xff]
    %v3082 = vld [vmem:[%s535 + $0x18] sm:$0xff]
    %v3083 = vld [vmem:[%s535 + $0x20] sm:$0xff]
    %v3084 = vld [vmem:[%s535 + $0x28] sm:$0xff]
    %v3085 = vld [vmem:[%s535 + $0x30] sm:$0xff]
    %v3086 = vld [vmem:[%s535 + $0x38] sm:$0xff]
    %v3087 = vrot.slane %v2614, 4
    %v3088 = vrot.slane %v2615, 4
    %v3089 = vsel %vm544, %v3087, %v3088
    %v3090 = vrot.slane %v2616, 4
    %v3091 = vsel %vm544, %v3088, %v3090
    %v3092 = vrot.slane %v2617, 4
    %v3093 = vsel %vm544, %v3090, %v3092
    %v3094 = vsel %vm96, %v3089, 0
    %v3096 = vsel %vm96, %v3091, 0
    %v3098 = vsel %vm96, %v3093, 0
    %v3100 = vsel %vm96, %v3092, 0
    %3102 = vmatprep.subr.mxu0 %v3080
    %3103 = vmatpush1.msra.mxu0 %v3079
    %3104 = vmatprep.subr.mxu0 %v3082
    %3105 = vmatpush1.msra.mxu0 %v3081
    %3106 = vmatprep.subr.mxu0 %v3084
    %3107 = vmatpush1.msra.mxu0 %v3083
    %3108 = vmatprep.subr.mxu0 %v3086
    %3109 = vmatpush1.msra.mxu0 %v3085
    %3110 = vmatprep.subr.mxu0 0.0
    %3111 = vmatpush1.msra.mxu0 0.0
    %3112 = vmatprep.subr.mxu0 0.0
    %3113 = vmatpush1.msra.mxu0 0.0
    %3114 = vmatprep.subr.mxu0 0.0
    %3115 = vmatpush1.msra.mxu0 0.0
    %3116 = vmatprep.subr.mxu0 0.0
    %3117 = vmatpush1.msra.mxu0 0.0
    %3118 = vmatprep.subr.mxu0 0.0
    %3119 = vmatpush1.msra.mxu0 0.0
    %3120 = vmatprep.subr.mxu0 0.0
    %3121 = vmatpush1.msra.mxu0 0.0
    %3122 = vmatprep.subr.mxu0 0.0
    %3123 = vmatpush1.msra.mxu0 0.0
    %3124 = vmatprep.subr.mxu0 0.0
    %3125 = vmatpush1.msra.mxu0 0.0
    %3126 = vmatprep.subr.mxu0 0.0
    %3127 = vmatpush1.msra.mxu0 0.0
    %3128 = vmatprep.subr.mxu0 0.0
    %3129 = vmatpush1.msra.mxu0 0.0
    %3130 = vmatprep.subr.mxu0 0.0
    %3131 = vmatpush1.msra.mxu0 0.0
    %3132 = vmatprep.subr.mxu0 0.0
    %3133 = vmatpush1.msra.mxu0 0.0
    %3134 = vmatprep.subr.mxu0 0.0
    %3135 = vmatpush1.msra.mxu0 0.0
    %3136 = vmatprep.subr.mxu0 0.0
    %3137 = vmatpush1.msra.mxu0 0.0
    %3138 = vmatprep.subr.mxu0 0.0
    %3139 = vmatpush1.msra.mxu0 0.0
    %3140 = vmatprep.subr.mxu0 0.0
    %3141 = vmatpush1.msra.mxu0 0.0
    %3142 = vmatprep.subr.mxu0 0.0
    %3143 = vmatpush1.msra.mxu0 0.0
    %3144 = vmatprep.subr.mxu0 0.0
    %3145 = vmatpush1.msra.mxu0 0.0
    %3146 = vmatprep.subr.mxu0 0.0
    %3147 = vmatpush1.msra.mxu0 0.0
    %3148 = vmatprep.subr.mxu0 0.0
    %3149 = vmatpush1.msra.mxu0 0.0
    %3150 = vmatprep.subr.mxu0 0.0
    %3151 = vmatpush1.msra.mxu0 0.0
    %3152 = vmatprep.subr.mxu0 0.0
    %3153 = vmatpush1.msra.mxu0 0.0
    %3154 = vmatprep.subr.mxu0 0.0
    %3155 = vmatpush1.msra.mxu0 0.0
    %3156 = vmatprep.subr.mxu0 0.0
    %3157 = vmatpush1.msra.mxu0 0.0
    %3158 = vmatprep.subr.mxu0 0.0
    %3159 = vmatpush1.msra.mxu0 0.0
    %3160 = vmatprep.subr.mxu0 0.0
    %3161 = vmatpush1.msra.mxu0 0.0
    %3162 = vmatprep.subr.mxu0 0.0
    %3163 = vmatpush1.msra.mxu0 0.0
    %3164 = vmatprep.subr.mxu0 0.0
    %3165 = vmatpush1.msra.mxu0 0.0
    %3166 = vmatprep.mubr.f32.mxu0 0.0
    %3167 = vmatmul.mubr.f32.gmra.mrb[0].mxu0 %v3094
    %v3168 = vpop.f32.mrb[0].mxu0
    %v3169 = vadd.f32 0.0, %v3168
    %v3170 = vpop.f32.mrb[0].mxu0
    %v3171 = vadd.f32 0.0, %v3170
    %3172 = vmatprep.mubr.f32.mxu0 0.0
    %3173 = vmatmul.mubr.f32.gmra.mrb[0].mxu0 %v3096
    %v3174 = vpop.f32.mrb[0].mxu0
    %v3175 = vadd.f32 0.0, %v3174
    %v3176 = vpop.f32.mrb[0].mxu0
    %v3177 = vadd.f32 0.0, %v3176
    %3178 = vmatprep.mubr.f32.mxu0 0.0
    %3179 = vmatmul.mubr.f32.gmra.mrb[0].mxu0 %v3098
    %v3180 = vpop.f32.mrb[0].mxu0
    %v3181 = vadd.f32 0.0, %v3180
    %v3182 = vpop.f32.mrb[0].mxu0
    %v3183 = vadd.f32 0.0, %v3182
    %3184 = vmatprep.mubr.f32.mxu0 0.0
    %3185 = vmatmul.mubr.f32.gmra.mrb[0].mxu0 %v3100
    %v3186 = vpop.f32.mrb[0].mxu0
    %v3187 = vadd.f32 0.0, %v3186
    %v3188 = vpop.f32.mrb[0].mxu0
    %v3189 = vadd.f32 0.0, %v3188
    %3190 = vdwg.mxu0
    %v3191 = vadd.f32 %v3071, %v3169
    %v3192 = vadd.f32 %v3072, %v3171
    %v3193 = vadd.f32 %v3073, %v3175
    %v3194 = vadd.f32 %v3074, %v3177
    %v3195 = vadd.f32 %v3075, %v3181
    %v3196 = vadd.f32 %v3076, %v3183
    %v3197 = vadd.f32 %v3077, %v3187
    %v3198 = vadd.f32 %v3078, %v3189
    %v3199 = vld [vmem:[%s2] sm:$0x3]
    %v3201 = vlaneseq
    %v3202 = vshrl.u32 %v3201, 7
    %v3203 = vsub.s32 0, %v3202
    %v3204 = vrot.slane %v3199, %v3203
    %v3205 = vlaneseq
    %v3206 = vshrl.u32 %v3205, 7
    %v3207 = vsub.s32 1, %v3206
    %v3208 = vrot.slane %v3199, %v3207
    %v3211 = vadd.f32 %v3191, %v3204
    %v3212 = vadd.f32 %v3192, %v3208
    %v3213 = vadd.f32 %v3193, %v3204
    %v3214 = vadd.f32 %v3194, %v3208
    %v3215 = vadd.f32 %v3195, %v3204
    %v3216 = vadd.f32 %v3196, %v3208
    %v3217 = vadd.f32 %v3197, %v3204
    %v3218 = vadd.f32 %v3198, %v3208
    %v3219 = vmax.f32 %v3211, 0.0
    %v3220 = vmax.f32 %v3212, 0.0
    %v3221 = vmax.f32 %v3213, 0.0
    %v3222 = vmax.f32 %v3214, 0.0
    %v3223 = vmax.f32 %v3215, 0.0
    %v3224 = vmax.f32 %v3216, 0.0
    %v3225 = vmax.f32 %v3217, 0.0
    %v3226 = vmax.f32 %v3218, 0.0
    %v3227 = vld [vmem:[%s7] sm:$0xff]
    %v3228 = vld [vmem:[%s7 + $0x8] sm:$0x3f]
    %v3230 = vsel %vm687, %v3227, 0
    %v3233 = vsel %vm687, %v3228, 0
    %v3236 = vsel %vm544, %v3225, 0
    %v3239 = vsel %vm544, %v3226, 0
    %3241 = vmatprep.subr.mxu0 %v3220
    %3242 = vmatpush1.msra.mxu0 %v3219
    %3243 = vmatprep.subr.mxu0 %v3222
    %3244 = vmatpush1.msra.mxu0 %v3221
    %3245 = vmatprep.subr.mxu0 %v3224
    %3246 = vmatpush1.msra.mxu0 %v3223
    %3247 = vmatprep.subr.mxu0 %v3239
    %3248 = vmatpush1.msra.mxu0 %v3236
    %3249 = vmatprep.subr.mxu0 0.0
    %3250 = vmatpush1.msra.mxu0 0.0
    %3251 = vmatprep.subr.mxu0 0.0
    %3252 = vmatpush1.msra.mxu0 0.0
    %3253 = vmatprep.subr.mxu0 0.0
    %3254 = vmatpush1.msra.mxu0 0.0
    %3255 = vmatprep.subr.mxu0 0.0
    %3256 = vmatpush1.msra.mxu0 0.0
    %3257 = vmatprep.subr.mxu0 0.0
    %3258 = vmatpush1.msra.mxu0 0.0
    %3259 = vmatprep.subr.mxu0 0.0
    %3260 = vmatpush1.msra.mxu0 0.0
    %3261 = vmatprep.subr.mxu0 0.0
    %3262 = vmatpush1.msra.mxu0 0.0
    %3263 = vmatprep.subr.mxu0 0.0
    %3264 = vmatpush1.msra.mxu0 0.0
    %3265 = vmatprep.subr.mxu0 0.0
    %3266 = vmatpush1.msra.mxu0 0.0
    %3267 = vmatprep.subr.mxu0 0.0
    %3268 = vmatpush1.msra.mxu0 0.0
    %3269 = vmatprep.subr.mxu0 0.0
    %3270 = vmatpush1.msra.mxu0 0.0
    %3271 = vmatprep.subr.mxu0 0.0
    %3272 = vmatpush1.msra.mxu0 0.0
    %3273 = vmatprep.subr.mxu0 0.0
    %3274 = vmatpush1.msra.mxu0 0.0
    %3275 = vmatprep.subr.mxu0 0.0
    %3276 = vmatpush1.msra.mxu0 0.0
    %3277 = vmatprep.subr.mxu0 0.0
    %3278 = vmatpush1.msra.mxu0 0.0
    %3279 = vmatprep.subr.mxu0 0.0
    %3280 = vmatpush1.msra.mxu0 0.0
    %3281 = vmatprep.subr.mxu0 0.0
    %3282 = vmatpush1.msra.mxu0 0.0
    %3283 = vmatprep.subr.mxu0 0.0
    %3284 = vmatpush1.msra.mxu0 0.0
    %3285 = vmatprep.subr.mxu0 0.0
    %3286 = vmatpush1.msra.mxu0 0.0
    %3287 = vmatprep.subr.mxu0 0.0
    %3288 = vmatpush1.msra.mxu0 0.0
    %3289 = vmatprep.subr.mxu0 0.0
    %3290 = vmatpush1.msra.mxu0 0.0
    %3291 = vmatprep.subr.mxu0 0.0
    %3292 = vmatpush1.msra.mxu0 0.0
    %3293 = vmatprep.subr.mxu0 0.0
    %3294 = vmatpush1.msra.mxu0 0.0
    %3295 = vmatprep.subr.mxu0 0.0
    %3296 = vmatpush1.msra.mxu0 0.0
    %3297 = vmatprep.subr.mxu0 0.0
    %3298 = vmatpush1.msra.mxu0 0.0
    %3299 = vmatprep.subr.mxu0 0.0
    %3300 = vmatpush1.msra.mxu0 0.0
    %3301 = vmatprep.subr.mxu0 0.0
    %3302 = vmatpush1.msra.mxu0 0.0
    %3303 = vmatprep.subr.mxu0 0.0
    %3304 = vmatpush1.msra.mxu0 0.0
    %3305 = vmatprep.mubr.f32.mxu0 0.0
    %3306 = vmatmul.mubr.f32.gmra.mrb[0].mxu0 %v3230
    %v3307 = vpop.f32.mrb[0].mxu0
    %v3308 = vadd.f32 0.0, %v3307
    %v3309 = vpop.f32.mrb[0].mxu0
    %v3310 = vadd.f32 0.0, %v3309
    %3311 = vmatprep.mubr.f32.mxu0 0.0
    %3312 = vmatmul.mubr.f32.gmra.mrb[0].mxu0 %v3233
    %v3313 = vpop.f32.mrb[0].mxu0
    %v3314 = vadd.f32 0.0, %v3313
    %v3315 = vpop.f32.mrb[0].mxu0
    %v3316 = vadd.f32 0.0, %v3315
    %3317 = vdwg.mxu0
    %v3318 = vld [vmem:[%s8] sm:$0xff]
    %v3319 = vld [vmem:[%s8 + $0x8] sm:$0x3f]
    %v3321 = vsel %vm687, %v3318, 0
    %v3324 = vsel %vm687, %v3319, 0
    %3326 = vmatprep.subr.mxu0 %v3220
    %3327 = vmatpush1.msra.mxu0 %v3219
    %3328 = vmatprep.subr.mxu0 %v3222
    %3329 = vmatpush1.msra.mxu0 %v3221
    %3330 = vmatprep.subr.mxu0 %v3224
    %3331 = vmatpush1.msra.mxu0 %v3223
    %3332 = vmatprep.subr.mxu0 %v3239
    %3333 = vmatpush1.msra.mxu0 %v3236
    %3334 = vmatprep.subr.mxu0 0.0
    %3335 = vmatpush1.msra.mxu0 0.0
    %3336 = vmatprep.subr.mxu0 0.0
    %3337 = vmatpush1.msra.mxu0 0.0
    %3338 = vmatprep.subr.mxu0 0.0
    %3339 = vmatpush1.msra.mxu0 0.0
    %3340 = vmatprep.subr.mxu0 0.0
    %3341 = vmatpush1.msra.mxu0 0.0
    %3342 = vmatprep.subr.mxu0 0.0
    %3343 = vmatpush1.msra.mxu0 0.0
    %3344 = vmatprep.subr.mxu0 0.0
    %3345 = vmatpush1.msra.mxu0 0.0
    %3346 = vmatprep.subr.mxu0 0.0
    %3347 = vmatpush1.msra.mxu0 0.0
    %3348 = vmatprep.subr.mxu0 0.0
    %3349 = vmatpush1.msra.mxu0 0.0
    %3350 = vmatprep.subr.mxu0 0.0
    %3351 = vmatpush1.msra.mxu0 0.0
    %3352 = vmatprep.subr.mxu0 0.0
    %3353 = vmatpush1.msra.mxu0 0.0
    %3354 = vmatprep.subr.mxu0 0.0
    %3355 = vmatpush1.msra.mxu0 0.0
    %3356 = vmatprep.subr.mxu0 0.0
    %3357 = vmatpush1.msra.mxu0 0.0
    %3358 = vmatprep.subr.mxu0 0.0
    %3359 = vmatpush1.msra.mxu0 0.0
    %3360 = vmatprep.subr.mxu0 0.0
    %3361 = vmatpush1.msra.mxu0 0.0
    %3362 = vmatprep.subr.mxu0 0.0
    %3363 = vmatpush1.msra.mxu0 0.0
    %3364 = vmatprep.subr.mxu0 0.0
    %3365 = vmatpush1.msra.mxu0 0.0
    %3366 = vmatprep.subr.mxu0 0.0
    %3367 = vmatpush1.msra.mxu0 0.0
    %3368 = vmatprep.subr.mxu0 0.0
    %3369 = vmatpush1.msra.mxu0 0.0
    %3370 = vmatprep.subr.mxu0 0.0
    %3371 = vmatpush1.msra.mxu0 0.0
    %3372 = vmatprep.subr.mxu0 0.0
    %3373 = vmatpush1.msra.mxu0 0.0
    %3374 = vmatprep.subr.mxu0 0.0
    %3375 = vmatpush1.msra.mxu0 0.0
    %3376 = vmatprep.subr.mxu0 0.0
    %3377 = vmatpush1.msra.mxu0 0.0
    %3378 = vmatprep.subr.mxu0 0.0
    %3379 = vmatpush1.msra.mxu0 0.0
    %3380 = vmatprep.subr.mxu0 0.0
    %3381 = vmatpush1.msra.mxu0 0.0
    %3382 = vmatprep.subr.mxu0 0.0
    %3383 = vmatpush1.msra.mxu0 0.0
    %3384 = vmatprep.subr.mxu0 0.0
    %3385 = vmatpush1.msra.mxu0 0.0
    %3386 = vmatprep.subr.mxu0 0.0
    %3387 = vmatpush1.msra.mxu0 0.0
    %3388 = vmatprep.subr.mxu0 0.0
    %3389 = vmatpush1.msra.mxu0 0.0
    %3390 = vmatprep.mubr.f32.mxu0 0.0
    %3391 = vmatmul.mubr.f32.gmra.mrb[0].mxu0 %v3321
    %v3392 = vpop.f32.mrb[0].mxu0
    %v3393 = vadd.f32 0.0, %v3392
    %v3394 = vpop.f32.mrb[0].mxu0
    %v3395 = vadd.f32 0.0, %v3394
    %3396 = vmatprep.mubr.f32.mxu0 0.0
    %3397 = vmatmul.mubr.f32.gmra.mrb[0].mxu0 %v3324
    %v3398 = vpop.f32.mrb[0].mxu0
    %v3399 = vadd.f32 0.0, %v3398
    %v3400 = vpop.f32.mrb[0].mxu0
    %v3401 = vadd.f32 0.0, %v3400
    %3402 = vdwg.mxu0
    %v3403 = vmax.f32 %v3308, %v3393
    %v3404 = vmax.f32 %v3310, %v3395
    %v3405 = vmax.f32 %v3314, %v3399
    %v3406 = vmax.f32 %v3316, %v3401
    %v3407 = vld [vmem:[%s9] sm:$0xff]
    %v3408 = vld [vmem:[%s9 + $0x8] sm:$0xff]
    %v3409 = vld [vmem:[%s9 + $0x10] sm:$0xff]
    %v3410 = vld [vmem:[%s9 + $0x18] sm:$0xff]
    %v3411 = vld [vmem:[%s9 + $0x20] sm:$0xff]
    %v3412 = vld [vmem:[%s9 + $0x28] sm:$0xff]
    %v3413 = vld [vmem:[%s9 + $0x30] sm:$0xff]
    %v3414 = vld [vmem:[%s9 + $0x38] sm:$0xff]
    %v3415 = vld [vmem:[%s9 + $0x40] sm:$0xff]
    %v3416 = vld [vmem:[%s9 + $0x48] sm:$0xff]
    %v3417 = vld [vmem:[%s9 + $0x50] sm:$0xff]
    %v3418 = vld [vmem:[%s9 + $0x58] sm:$0xff]
    %v3419 = vld [vmem:[%s9 + $0x60] sm:$0xff]
    %v3420 = vld [vmem:[%s9 + $0x68] sm:$0xff]
    %v3421 = vld [vmem:[%s9 + $0x70] sm:$0xff]
    %v3422 = vld [vmem:[%s9 + $0x78] sm:$0xff]
    %v3423 = vld [vmem:[%s9 + $0x80] sm:$0xff]
    %v3424 = vld [vmem:[%s9 + $0x88] sm:$0xff]
    %v3425 = vld [vmem:[%s9 + $0x90] sm:$0xff]
    %v3426 = vld [vmem:[%s9 + $0x98] sm:$0xff]
    %v3427 = vld [vmem:[%s9 + $0xa0] sm:$0xff]
    %v3429 = vsel %vm887, %v3404, 0
    %v3432 = vsel %vm887, %v3406, 0
    %3434 = vmatprep.subr.mxu0 0.0
    %3435 = vmatpush1.msra.mxu0 %v3407
    %3436 = vmatprep.subr.mxu0 0.0
    %3437 = vmatpush1.msra.mxu0 %v3408
    %3438 = vmatprep.subr.mxu0 0.0
    %3439 = vmatpush1.msra.mxu0 %v3409
    %3440 = vmatprep.subr.mxu0 0.0
    %3441 = vmatpush1.msra.mxu0 %v3410
    %3442 = vmatprep.subr.mxu0 0.0
    %3443 = vmatpush1.msra.mxu0 %v3411
    %3444 = vmatprep.subr.mxu0 0.0
    %3445 = vmatpush1.msra.mxu0 %v3412
    %3446 = vmatprep.subr.mxu0 0.0
    %3447 = vmatpush1.msra.mxu0 %v3413
    %3448 = vmatprep.subr.mxu0 0.0
    %3449 = vmatpush1.msra.mxu0 %v3414
    %3450 = vmatprep.subr.mxu0 0.0
    %3451 = vmatpush1.msra.mxu0 %v3415
    %3452 = vmatprep.subr.mxu0 0.0
    %3453 = vmatpush1.msra.mxu0 %v3416
    %3454 = vmatprep.subr.mxu0 0.0
    %3455 = vmatpush1.msra.mxu0 %v3417
    %3456 = vmatprep.subr.mxu0 0.0
    %3457 = vmatpush1.msra.mxu0 %v3418
    %3458 = vmatprep.subr.mxu0 0.0
    %3459 = vmatpush1.msra.mxu0 %v3419
    %3460 = vmatprep.subr.mxu0 0.0
    %3461 = vmatpush1.msra.mxu0 %v3420
    %3462 = vmatprep.subr.mxu0 0.0
    %3463 = vmatpush1.msra.mxu0 %v3421
    %3464 = vmatprep.subr.mxu0 0.0
    %3465 = vmatpush1.msra.mxu0 %v3422
    %3466 = vmatprep.subr.mxu0 0.0
    %3467 = vmatpush1.msra.mxu0 %v3423
    %3468 = vmatprep.subr.mxu0 0.0
    %3469 = vmatpush1.msra.mxu0 %v3424
    %3470 = vmatprep.subr.mxu0 0.0
    %3471 = vmatpush1.msra.mxu0 %v3425
    %3472 = vmatprep.subr.mxu0 0.0
    %3473 = vmatpush1.msra.mxu0 %v3426
    %3474 = vmatprep.subr.mxu0 0.0
    %3475 = vmatpush1.msra.mxu0 %v3427
    %3476 = vmatprep.subr.mxu0 0.0
    %3477 = vmatpush1.msra.mxu0 0.0
    %3478 = vmatprep.subr.mxu0 0.0
    %3479 = vmatpush1.msra.mxu0 0.0
    %3480 = vmatprep.subr.mxu0 0.0
    %3481 = vmatpush1.msra.mxu0 0.0
    %3482 = vmatprep.subr.mxu0 0.0
    %3483 = vmatpush1.msra.mxu0 0.0
    %3484 = vmatprep.subr.mxu0 0.0
    %3485 = vmatpush1.msra.mxu0 0.0
    %3486 = vmatprep.subr.mxu0 0.0
    %3487 = vmatpush1.msra.mxu0 0.0
    %3488 = vmatprep.subr.mxu0 0.0
    %3489 = vmatpush1.msra.mxu0 0.0
    %3490 = vmatprep.subr.mxu0 0.0
    %3491 = vmatpush1.msra.mxu0 0.0
    %3492 = vmatprep.subr.mxu0 0.0
    %3493 = vmatpush1.msra.mxu0 0.0
    %3494 = vmatprep.subr.mxu0 0.0
    %3495 = vmatpush1.msra.mxu0 0.0
    %3496 = vmatprep.subr.mxu0 0.0
    %3497 = vmatpush1.msra.mxu0 0.0
    %3498 = vmatprep.mubr.f32.mxu0 %v3429
    %3499 = vmatmul.mubr.f32.gmra.mrb[0].mxu0 %v3403
    %v3500 = vpop.f32.mrb[0].mxu0
    %v3501 = vadd.f32 0.0, %v3500
    %v3502 = vpop.f32.mrb[0].mxu0
    %3503 = vmatprep.mubr.f32.mxu0 %v3432
    %3504 = vmatmul.mubr.f32.gmra.mrb[0].mxu0 %v3405
    %v3505 = vpop.f32.mrb[0].mxu0
    %v3506 = vadd.f32 0.0, %v3505
    %v3507 = vpop.f32.mrb[0].mxu0
    %3508 = vdwg.mxu0
    %v3509 = vld [vmem:[%s10] sm:$0xff]
    %v3510 = vld [vmem:[%s10 + $0x8] sm:$0xff]
    %v3511 = vld [vmem:[%s10 + $0x10] sm:$0xff]
    %v3512 = vld [vmem:[%s10 + $0x18] sm:$0xff]
    %v3513 = vld [vmem:[%s10 + $0x20] sm:$0xff]
    %v3514 = vld [vmem:[%s10 + $0x28] sm:$0xff]
    %v3515 = vld [vmem:[%s10 + $0x30] sm:$0xff]
    %v3516 = vld [vmem:[%s10 + $0x38] sm:$0xff]
    %v3517 = vld [vmem:[%s10 + $0x40] sm:$0xff]
    %v3518 = vld [vmem:[%s10 + $0x48] sm:$0xff]
    %v3519 = vld [vmem:[%s10 + $0x50] sm:$0xff]
    %v3520 = vld [vmem:[%s10 + $0x58] sm:$0xff]
    %v3521 = vld [vmem:[%s10 + $0x60] sm:$0xff]
    %v3522 = vld [vmem:[%s10 + $0x68] sm:$0xff]
    %v3523 = vld [vmem:[%s10 + $0x70] sm:$0xff]
    %v3524 = vld [vmem:[%s10 + $0x78] sm:$0xff]
    %v3525 = vld [vmem:[%s10 + $0x80] sm:$0xff]
    %v3526 = vld [vmem:[%s10 + $0x88] sm:$0xff]
    %v3527 = vld [vmem:[%s10 + $0x90] sm:$0xff]
    %v3528 = vld [vmem:[%s10 + $0x98] sm:$0xff]
    %v3529 = vld [vmem:[%s10 + $0xa0] sm:$0xff]
    %3530 = vmatprep.subr.mxu0 0.0
    %3531 = vmatpush1.msra.mxu0 %v3509
    %3532 = vmatprep.subr.mxu0 0.0
    %3533 = vmatpush1.msra.mxu0 %v3510
    %3534 = vmatprep.subr.mxu0 0.0
    %3535 = vmatpush1.msra.mxu0 %v3511
    %3536 = vmatprep.subr.mxu0 0.0
    %3537 = vmatpush1.msra.mxu0 %v3512
    %3538 = vmatprep.subr.mxu0 0.0
    %3539 = vmatpush1.msra.mxu0 %v3513
    %3540 = vmatprep.subr.mxu0 0.0
    %3541 = vmatpush1.msra.mxu0 %v3514
    %3542 = vmatprep.subr.mxu0 0.0
    %3543 = vmatpush1.msra.mxu0 %v3515
    %3544 = vmatprep.subr.mxu0 0.0
    %3545 = vmatpush1.msra.mxu0 %v3516
    %3546 = vmatprep.subr.mxu0 0.0
    %3547 = vmatpush1.msra.mxu0 %v3517
    %3548 = vmatprep.subr.mxu0 0.0
    %3549 = vmatpush1.msra.mxu0 %v3518
    %3550 = vmatprep.subr.mxu0 0.0
    %3551 = vmatpush1.msra.mxu0 %v3519
    %3552 = vmatprep.subr.mxu0 0.0
    %3553 = vmatpush1.msra.mxu0 %v3520
    %3554 = vmatprep.subr.mxu0 0.0
    %3555 = vmatpush1.msra.mxu0 %v3521
    %3556 = vmatprep.subr.mxu0 0.0
    %3557 = vmatpush1.msra.mxu0 %v3522
    %3558 = vmatprep.subr.mxu0 0.0
    %3559 = vmatpush1.msra.mxu0 %v3523
    %3560 = vmatprep.subr.mxu0 0.0
    %3561 = vmatpush1.msra.mxu0 %v3524
    %3562 = vmatprep.subr.mxu0 0.0
    %3563 = vmatpush1.msra.mxu0 %v3525
    %3564 = vmatprep.subr.mxu0 0.0
    %3565 = vmatpush1.msra.mxu0 %v3526
    %3566 = vmatprep.subr.mxu0 0.0
    %3567 = vmatpush1.msra.mxu0 %v3527
    %3568 = vmatprep.subr.mxu0 0.0
    %3569 = vmatpush1.msra.mxu0 %v3528
    %3570 = vmatprep.subr.mxu0 0.0
    %3571 = vmatpush1.msra.mxu0 %v3529
    %3572 = vmatprep.subr.mxu0 0.0
    %3573 = vmatpush1.msra.mxu0 0.0
    %3574 = vmatprep.subr.mxu0 0.0
    %3575 = vmatpush1.msra.mxu0 0.0
    %3576 = vmatprep.subr.mxu0 0.0
    %3577 = vmatpush1.msra.mxu0 0.0
    %3578 = vmatprep.subr.mxu0 0.0
    %3579 = vmatpush1.msra.mxu0 0.0
    %3580 = vmatprep.subr.mxu0 0.0
    %3581 = vmatpush1.msra.mxu0 0.0
    %3582 = vmatprep.subr.mxu0 0.0
    %3583 = vmatpush1.msra.mxu0 0.0
    %3584 = vmatprep.subr.mxu0 0.0
    %3585 = vmatpush1.msra.mxu0 0.0
    %3586 = vmatprep.subr.mxu0 0.0
    %3587 = vmatpush1.msra.mxu0 0.0
    %3588 = vmatprep.subr.mxu0 0.0
    %3589 = vmatpush1.msra.mxu0 0.0
    %3590 = vmatprep.subr.mxu0 0.0
    %3591 = vmatpush1.msra.mxu0 0.0
    %3592 = vmatprep.subr.mxu0 0.0
    %3593 = vmatpush1.msra.mxu0 0.0
    %3594 = vmatprep.mubr.f32.mxu0 %v3429
    %3595 = vmatmul.mubr.f32.gmra.mrb[0].mxu0 %v3403
    %v3596 = vpop.f32.mrb[0].mxu0
    %v3597 = vadd.f32 0.0, %v3596
    %v3598 = vpop.f32.mrb[0].mxu0
    %3599 = vmatprep.mubr.f32.mxu0 %v3432
    %3600 = vmatmul.mubr.f32.gmra.mrb[0].mxu0 %v3405
    %v3601 = vpop.f32.mrb[0].mxu0
    %v3602 = vadd.f32 0.0, %v3601
    %v3603 = vpop.f32.mrb[0].mxu0
    %3604 = vdwg.mxu0
    %v3605 = vmax.f32 %v3501, %v3597
    %v3606 = vmax.f32 %v3506, %v3602
    %v3607 = vld [vmem:[%s3] sm:$0xff]
    %v3608 = vld [vmem:[%s3 + $0x8] sm:$0xff]
    %v3609 = vld [vmem:[%s3 + $0x10] sm:$0xff]
    %v3610 = vld [vmem:[%s3 + $0x18] sm:$0xff]
    %v3611 = vld [vmem:[%s3 + $0x20] sm:$0xff]
    %v3612 = vld [vmem:[%s3 + $0x28] sm:$0xff]
    %v3613 = vld [vmem:[%s3 + $0x30] sm:$0xff]
    %v3614 = vld [vmem:[%s3 + $0x38] sm:$0xff]
    %v3615 = vld [vmem:[%s3 + $0x40] sm:$0xff]
    %v3616 = vld [vmem:[%s3 + $0x48] sm:$0xff]
    %v3617 = vld [vmem:[%s3 + $0x50] sm:$0xff]
    %v3618 = vld [vmem:[%s3 + $0x58] sm:$0xff]
    %v3619 = vld [vmem:[%s3 + $0x60] sm:$0xff]
    %v3620 = vld [vmem:[%s3 + $0x68] sm:$0xff]
    %v3621 = vld [vmem:[%s3 + $0x70] sm:$0xff]
    %v3622 = vld [vmem:[%s3 + $0x78] sm:$0xff]
    %v3623 = vld [vmem:[%s3 + $0x80] sm:$0xff]
    %v3624 = vld [vmem:[%s3 + $0x88] sm:$0xff]
    %v3625 = vld [vmem:[%s3 + $0x90] sm:$0xff]
    %v3626 = vld [vmem:[%s3 + $0x98] sm:$0xff]
    %v3627 = vld [vmem:[%s3 + $0xa0] sm:$0xf]
    %v3628 = vld [vmem:[%s3 + $0xa8] sm:$0xf]
    %v3629 = vld [vmem:[%s1089] sm:$0xff]
    %v3630 = vld [vmem:[%s1089 + $0x8] sm:$0xff]
    %v3631 = vld [vmem:[%s1089 + $0x10] sm:$0xff]
    %v3632 = vld [vmem:[%s1089 + $0x18] sm:$0xff]
    %v3633 = vld [vmem:[%s1089 + $0x20] sm:$0xff]
    %v3634 = vld [vmem:[%s1089 + $0x28] sm:$0xff]
    %v3635 = vld [vmem:[%s1089 + $0x30] sm:$0xff]
    %v3636 = vld [vmem:[%s1089 + $0x38] sm:$0xff]
    %v3637 = vld [vmem:[%s1089 + $0x40] sm:$0xff]
    %v3638 = vld [vmem:[%s1089 + $0x48] sm:$0xff]
    %v3639 = vld [vmem:[%s1089 + $0x50] sm:$0xff]
    %v3640 = vld [vmem:[%s1089 + $0x58] sm:$0xff]
    %v3641 = vld [vmem:[%s1089 + $0x60] sm:$0xff]
    %v3642 = vld [vmem:[%s1089 + $0x68] sm:$0xff]
    %v3643 = vld [vmem:[%s1089 + $0x70] sm:$0xff]
    %v3644 = vld [vmem:[%s1089 + $0x78] sm:$0xff]
    %v3645 = vld [vmem:[%s1089 + $0x80] sm:$0xff]
    %v3646 = vld [vmem:[%s1089 + $0x88] sm:$0xff]
    %v3647 = vld [vmem:[%s1089 + $0x90] sm:$0xff]
    %v3648 = vld [vmem:[%s1089 + $0x98] sm:$0xff]
    %v3649 = vld [vmem:[%s1089 + $0xa0] sm:$0xf]
    %v3650 = vld [vmem:[%s1089 + $0xa8] sm:$0xf]
    %v3653 = vrot.slane %v3605, 1
    %v3654 = vrot.slane %v3606, 1
    %v3655 = vsel %vm88, %v3653, %v3654
    %v3656 = vsel %vm1117, %v3655, 0
    %v3658 = vsel %vm1117, %v3654, 0
    %v3661 = vsel %vm544, %v3649, 0
    %v3664 = vsel %vm544, %v3650, 0
    %3666 = vmatprep.subr.mxu0 %v3630
    %3667 = vmatpush1.msra.mxu0 %v3629
    %3668 = vmatprep.subr.mxu0 %v3632
    %3669 = vmatpush1.msra.mxu0 %v3631
    %3670 = vmatprep.subr.mxu0 %v3634
    %3671 = vmatpush1.msra.mxu0 %v3633
    %3672 = vmatprep.subr.mxu0 %v3636
    %3673 = vmatpush1.msra.mxu0 %v3635
    %3674 = vmatprep.subr.mxu0 %v3638
    %3675 = vmatpush1.msra.mxu0 %v3637
    %3676 = vmatprep.subr.mxu0 %v3640
    %3677 = vmatpush1.msra.mxu0 %v3639
    %3678 = vmatprep.subr.mxu0 %v3642
    %3679 = vmatpush1.msra.mxu0 %v3641
    %3680 = vmatprep.subr.mxu0 %v3644
    %3681 = vmatpush1.msra.mxu0 %v3643
    %3682 = vmatprep.subr.mxu0 %v3646
    %3683 = vmatpush1.msra.mxu0 %v3645
    %3684 = vmatprep.subr.mxu0 %v3648
    %3685 = vmatpush1.msra.mxu0 %v3647
    %3686 = vmatprep.subr.mxu0 %v3664
    %3687 = vmatpush1.msra.mxu0 %v3661
    %3688 = vmatprep.subr.mxu0 0.0
    %3689 = vmatpush1.msra.mxu0 0.0
    %3690 = vmatprep.subr.mxu0 0.0
    %3691 = vmatpush1.msra.mxu0 0.0
    %3692 = vmatprep.subr.mxu0 0.0
    %3693 = vmatpush1.msra.mxu0 0.0
    %3694 = vmatprep.subr.mxu0 0.0
    %3695 = vmatpush1.msra.mxu0 0.0
    %3696 = vmatprep.subr.mxu0 0.0
    %3697 = vmatpush1.msra.mxu0 0.0
    %3698 = vmatprep.subr.mxu0 0.0
    %3699 = vmatpush1.msra.mxu0 0.0
    %3700 = vmatprep.subr.mxu0 0.0
    %3701 = vmatpush1.msra.mxu0 0.0
    %3702 = vmatprep.subr.mxu0 0.0
    %3703 = vmatpush1.msra.mxu0 0.0
    %3704 = vmatprep.subr.mxu0 0.0
    %3705 = vmatpush1.msra.mxu0 0.0
    %3706 = vmatprep.subr.mxu0 0.0
    %3707 = vmatpush1.msra.mxu0 0.0
    %3708 = vmatprep.subr.mxu0 0.0
    %3709 = vmatpush1.msra.mxu0 0.0
    %3710 = vmatprep.subr.mxu0 0.0
    %3711 = vmatpush1.msra.mxu0 0.0
    %3712 = vmatprep.subr.mxu0 0.0
    %3713 = vmatpush1.msra.mxu0 0.0
    %3714 = vmatprep.subr.mxu0 0.0
    %3715 = vmatpush1.msra.mxu0 0.0
    %3716 = vmatprep.subr.mxu0 0.0
    %3717 = vmatpush1.msra.mxu0 0.0
    %3718 = vmatprep.subr.mxu0 0.0
    %3719 = vmatpush1.msra.mxu0 0.0
    %3720 = vmatprep.subr.mxu0 0.0
    %3721 = vmatpush1.msra.mxu0 0.0
    %3722 = vmatprep.subr.mxu0 0.0
    %3723 = vmatpush1.msra.mxu0 0.0
    %3724 = vmatprep.subr.mxu0 0.0
    %3725 = vmatpush1.msra.mxu0 0.0
    %3726 = vmatprep.subr.mxu0 0.0
    %3727 = vmatpush1.msra.mxu0 0.0
    %3728 = vmatprep.subr.mxu0 0.0
    %3729 = vmatpush1.msra.mxu0 0.0
    %3730 = vmatprep.mubr.f32.mxu0 0.0
    %3731 = vmatmul.mubr.f32.gmra.mrb[0].mxu0 %v3656
    %v3732 = vpop.f32.mrb[0].mxu0
    %v3733 = vadd.f32 0.0, %v3732
    %v3734 = vpop.f32.mrb[0].mxu0
    %v3735 = vadd.f32 0.0, %v3734
    %3736 = vmatprep.mubr.f32.mxu0 0.0
    %3737 = vmatmul.mubr.f32.gmra.mrb[0].mxu0 %v3658
    %v3738 = vpop.f32.mrb[0].mxu0
    %v3739 = vadd.f32 0.0, %v3738
    %v3740 = vpop.f32.mrb[0].mxu0
    %v3741 = vadd.f32 0.0, %v3740
    %3742 = vdwg.mxu0
    %v3743 = vsel %vm1117, %v3605, 0
    %v3745 = vsel %vm1117, %v3606, 0
    %v3748 = vsel %vm544, %v3627, 0
    %v3751 = vsel %vm544, %v3628, 0
    %3753 = vmatprep.subr.mxu0 %v3608
    %3754 = vmatpush1.msra.mxu0 %v3607
    %3755 = vmatprep.subr.mxu0 %v3610
    %3756 = vmatpush1.msra.mxu0 %v3609
    %3757 = vmatprep.subr.mxu0 %v3612
    %3758 = vmatpush1.msra.mxu0 %v3611
    %3759 = vmatprep.subr.mxu0 %v3614
    %3760 = vmatpush1.msra.mxu0 %v3613
    %3761 = vmatprep.subr.mxu0 %v3616
    %3762 = vmatpush1.msra.mxu0 %v3615
    %3763 = vmatprep.subr.mxu0 %v3618
    %3764 = vmatpush1.msra.mxu0 %v3617
    %3765 = vmatprep.subr.mxu0 %v3620
    %3766 = vmatpush1.msra.mxu0 %v3619
    %3767 = vmatprep.subr.mxu0 %v3622
    %3768 = vmatpush1.msra.mxu0 %v3621
    %3769 = vmatprep.subr.mxu0 %v3624
    %3770 = vmatpush1.msra.mxu0 %v3623
    %3771 = vmatprep.subr.mxu0 %v3626
    %3772 = vmatpush1.msra.mxu0 %v3625
    %3773 = vmatprep.subr.mxu0 %v3751
    %3774 = vmatpush1.msra.mxu0 %v3748
    %3775 = vmatprep.subr.mxu0 0.0
    %3776 = vmatpush1.msra.mxu0 0.0
    %3777 = vmatprep.subr.mxu0 0.0
    %3778 = vmatpush1.msra.mxu0 0.0
    %3779 = vmatprep.subr.mxu0 0.0
    %3780 = vmatpush1.msra.mxu0 0.0
    %3781 = vmatprep.subr.mxu0 0.0
    %3782 = vmatpush1.msra.mxu0 0.0
    %3783 = vmatprep.subr.mxu0 0.0
    %3784 = vmatpush1.msra.mxu0 0.0
    %3785 = vmatprep.subr.mxu0 0.0
    %3786 = vmatpush1.msra.mxu0 0.0
    %3787 = vmatprep.subr.mxu0 0.0
    %3788 = vmatpush1.msra.mxu0 0.0
    %3789 = vmatprep.subr.mxu0 0.0
    %3790 = vmatpush1.msra.mxu0 0.0
    %3791 = vmatprep.subr.mxu0 0.0
    %3792 = vmatpush1.msra.mxu0 0.0
    %3793 = vmatprep.subr.mxu0 0.0
    %3794 = vmatpush1.msra.mxu0 0.0
    %3795 = vmatprep.subr.mxu0 0.0
    %3796 = vmatpush1.msra.mxu0 0.0
    %3797 = vmatprep.subr.mxu0 0.0
    %3798 = vmatpush1.msra.mxu0 0.0
    %3799 = vmatprep.subr.mxu0 0.0
    %3800 = vmatpush1.msra.mxu0 0.0
    %3801 = vmatprep.subr.mxu0 0.0
    %3802 = vmatpush1.msra.mxu0 0.0
    %3803 = vmatprep.subr.mxu0 0.0
    %3804 = vmatpush1.msra.mxu0 0.0
    %3805 = vmatprep.subr.mxu0 0.0
    %3806 = vmatpush1.msra.mxu0 0.0
    %3807 = vmatprep.subr.mxu0 0.0
    %3808 = vmatpush1.msra.mxu0 0.0
    %3809 = vmatprep.subr.mxu0 0.0
    %3810 = vmatpush1.msra.mxu0 0.0
    %3811 = vmatprep.subr.mxu0 0.0
    %3812 = vmatpush1.msra.mxu0 0.0
    %3813 = vmatprep.subr.mxu0 0.0
    %3814 = vmatpush1.msra.mxu0 0.0
    %3815 = vmatprep.subr.mxu0 0.0
    %3816 = vmatpush1.msra.mxu0 0.0
    %3817 = vmatprep.mubr.f32.mxu0 0.0
    %3818 = vmatmul.mubr.f32.gmra.mrb[0].mxu0 %v3743
    %v3819 = vpop.f32.mrb[0].mxu0
    %v3820 = vadd.f32 %v3733, %v3819
    %v3821 = vpop.f32.mrb[0].mxu0
    %v3822 = vadd.f32 %v3735, %v3821
    %3823 = vmatprep.mubr.f32.mxu0 0.0
    %3824 = vmatmul.mubr.f32.gmra.mrb[0].mxu0 %v3745
    %v3825 = vpop.f32.mrb[0].mxu0
    %v3826 = vadd.f32 %v3739, %v3825
    %v3827 = vpop.f32.mrb[0].mxu0
    %v3828 = vadd.f32 %v3741, %v3827
    %3829 = vdwg.mxu0
    %v3830 = vld [vmem:[%s1292] sm:$0xff]
    %v3831 = vld [vmem:[%s1292 + $0x8] sm:$0xff]
    %v3832 = vld [vmem:[%s1292 + $0x10] sm:$0xff]
    %v3833 = vld [vmem:[%s1292 + $0x18] sm:$0xff]
    %v3834 = vld [vmem:[%s1292 + $0x20] sm:$0xff]
    %v3835 = vld [vmem:[%s1292 + $0x28] sm:$0xff]
    %v3836 = vld [vmem:[%s1292 + $0x30] sm:$0xff]
    %v3837 = vld [vmem:[%s1292 + $0x38] sm:$0xff]
    %v3838 = vld [vmem:[%s1292 + $0x40] sm:$0xff]
    %v3839 = vld [vmem:[%s1292 + $0x48] sm:$0xff]
    %v3840 = vld [vmem:[%s1292 + $0x50] sm:$0xff]
    %v3841 = vld [vmem:[%s1292 + $0x58] sm:$0xff]
    %v3842 = vld [vmem:[%s1292 + $0x60] sm:$0xff]
    %v3843 = vld [vmem:[%s1292 + $0x68] sm:$0xff]
    %v3844 = vld [vmem:[%s1292 + $0x70] sm:$0xff]
    %v3845 = vld [vmem:[%s1292 + $0x78] sm:$0xff]
    %v3846 = vld [vmem:[%s1292 + $0x80] sm:$0xff]
    %v3847 = vld [vmem:[%s1292 + $0x88] sm:$0xff]
    %v3848 = vld [vmem:[%s1292 + $0x90] sm:$0xff]
    %v3849 = vld [vmem:[%s1292 + $0x98] sm:$0xff]
    %v3850 = vld [vmem:[%s1292 + $0xa0] sm:$0xf]
    %v3851 = vld [vmem:[%s1292 + $0xa8] sm:$0xf]
    %v3852 = vrot.slane %v3605, 2
    %v3853 = vrot.slane %v3606, 2
    %v3854 = vsel %vm300, %v3852, %v3853
    %v3855 = vsel %vm1117, %v3854, 0
    %v3857 = vsel %vm1117, %v3853, 0
    %v3860 = vsel %vm544, %v3850, 0
    %v3863 = vsel %vm544, %v3851, 0
    %3865 = vmatprep.subr.mxu0 %v3831
    %3866 = vmatpush1.msra.mxu0 %v3830
    %3867 = vmatprep.subr.mxu0 %v3833
    %3868 = vmatpush1.msra.mxu0 %v3832
    %3869 = vmatprep.subr.mxu0 %v3835
    %3870 = vmatpush1.msra.mxu0 %v3834
    %3871 = vmatprep.subr.mxu0 %v3837
    %3872 = vmatpush1.msra.mxu0 %v3836
    %3873 = vmatprep.subr.mxu0 %v3839
    %3874 = vmatpush1.msra.mxu0 %v3838
    %3875 = vmatprep.subr.mxu0 %v3841
    %3876 = vmatpush1.msra.mxu0 %v3840
    %3877 = vmatprep.subr.mxu0 %v3843
    %3878 = vmatpush1.msra.mxu0 %v3842
    %3879 = vmatprep.subr.mxu0 %v3845
    %3880 = vmatpush1.msra.mxu0 %v3844
    %3881 = vmatprep.subr.mxu0 %v3847
    %3882 = vmatpush1.msra.mxu0 %v3846
    %3883 = vmatprep.subr.mxu0 %v3849
    %3884 = vmatpush1.msra.mxu0 %v3848
    %3885 = vmatprep.subr.mxu0 %v3863
    %3886 = vmatpush1.msra.mxu0 %v3860
    %3887 = vmatprep.subr.mxu0 0.0
    %3888 = vmatpush1.msra.mxu0 0.0
    %3889 = vmatprep.subr.mxu0 0.0
    %3890 = vmatpush1.msra.mxu0 0.0
    %3891 = vmatprep.subr.mxu0 0.0
    %3892 = vmatpush1.msra.mxu0 0.0
    %3893 = vmatprep.subr.mxu0 0.0
    %3894 = vmatpush1.msra.mxu0 0.0
    %3895 = vmatprep.subr.mxu0 0.0
    %3896 = vmatpush1.msra.mxu0 0.0
    %3897 = vmatprep.subr.mxu0 0.0
    %3898 = vmatpush1.msra.mxu0 0.0
    %3899 = vmatprep.subr.mxu0 0.0
    %3900 = vmatpush1.msra.mxu0 0.0
    %3901 = vmatprep.subr.mxu0 0.0
    %3902 = vmatpush1.msra.mxu0 0.0
    %3903 = vmatprep.subr.mxu0 0.0
    %3904 = vmatpush1.msra.mxu0 0.0
    %3905 = vmatprep.subr.mxu0 0.0
    %3906 = vmatpush1.msra.mxu0 0.0
    %3907 = vmatprep.subr.mxu0 0.0
    %3908 = vmatpush1.msra.mxu0 0.0
    %3909 = vmatprep.subr.mxu0 0.0
    %3910 = vmatpush1.msra.mxu0 0.0
    %3911 = vmatprep.subr.mxu0 0.0
    %3912 = vmatpush1.msra.mxu0 0.0
    %3913 = vmatprep.subr.mxu0 0.0
    %3914 = vmatpush1.msra.mxu0 0.0
    %3915 = vmatprep.subr.mxu0 0.0
    %3916 = vmatpush1.msra.mxu0 0.0
    %3917 = vmatprep.subr.mxu0 0.0
    %3918 = vmatpush1.msra.mxu0 0.0
    %3919 = vmatprep.subr.mxu0 0.0
    %3920 = vmatpush1.msra.mxu0 0.0
    %3921 = vmatprep.subr.mxu0 0.0
    %3922 = vmatpush1.msra.mxu0 0.0
    %3923 = vmatprep.subr.mxu0 0.0
    %3924 = vmatpush1.msra.mxu0 0.0
    %3925 = vmatprep.subr.mxu0 0.0
    %3926 = vmatpush1.msra.mxu0 0.0
    %3927 = vmatprep.subr.mxu0 0.0
    %3928 = vmatpush1.msra.mxu0 0.0
    %3929 = vmatprep.mubr.f32.mxu0 0.0
    %3930 = vmatmul.mubr.f32.gmra.mrb[0].mxu0 %v3855
    %v3931 = vpop.f32.mrb[0].mxu0
    %v3932 = vadd.f32 0.0, %v3931
    %v3933 = vpop.f32.mrb[0].mxu0
    %v3934 = vadd.f32 0.0, %v3933
    %3935 = vmatprep.mubr.f32.mxu0 0.0
    %3936 = vmatmul.mubr.f32.gmra.mrb[0].mxu0 %v3857
    %v3937 = vpop.f32.mrb[0].mxu0
    %v3938 = vadd.f32 0.0, %v3937
    %v3939 = vpop.f32.mrb[0].mxu0
    %v3940 = vadd.f32 0.0, %v3939
    %3941 = vdwg.mxu0
    %v3942 = vadd.f32 %v3820, %v3932
    %v3943 = vadd.f32 %v3822, %v3934
    %v3944 = vadd.f32 %v3826, %v3938
    %v3945 = vadd.f32 %v3828, %v3940
    %v3946 = vld [vmem:[%s1409] sm:$0xff]
    %v3947 = vld [vmem:[%s1409 + $0x8] sm:$0xff]
    %v3948 = vld [vmem:[%s1409 + $0x10] sm:$0xff]
    %v3949 = vld [vmem:[%s1409 + $0x18] sm:$0xff]
    %v3950 = vld [vmem:[%s1409 + $0x20] sm:$0xff]
    %v3951 = vld [vmem:[%s1409 + $0x28] sm:$0xff]
    %v3952 = vld [vmem:[%s1409 + $0x30] sm:$0xff]
    %v3953 = vld [vmem:[%s1409 + $0x38] sm:$0xff]
    %v3954 = vld [vmem:[%s1409 + $0x40] sm:$0xff]
    %v3955 = vld [vmem:[%s1409 + $0x48] sm:$0xff]
    %v3956 = vld [vmem:[%s1409 + $0x50] sm:$0xff]
    %v3957 = vld [vmem:[%s1409 + $0x58] sm:$0xff]
    %v3958 = vld [vmem:[%s1409 + $0x60] sm:$0xff]
    %v3959 = vld [vmem:[%s1409 + $0x68] sm:$0xff]
    %v3960 = vld [vmem:[%s1409 + $0x70] sm:$0xff]
    %v3961 = vld [vmem:[%s1409 + $0x78] sm:$0xff]
    %v3962 = vld [vmem:[%s1409 + $0x80] sm:$0xff]
    %v3963 = vld [vmem:[%s1409 + $0x88] sm:$0xff]
    %v3964 = vld [vmem:[%s1409 + $0x90] sm:$0xff]
    %v3965 = vld [vmem:[%s1409 + $0x98] sm:$0xff]
    %v3966 = vld [vmem:[%s1409 + $0xa0] sm:$0xf]
    %v3967 = vld [vmem:[%s1409 + $0xa8] sm:$0xf]
    %v3968 = vrot.slane %v3605, 3
    %v3969 = vrot.slane %v3606, 3
    %v3970 = vsel %vm422, %v3968, %v3969
    %v3971 = vsel %vm1117, %v3970, 0
    %v3973 = vsel %vm1117, %v3969, 0
    %v3976 = vsel %vm544, %v3966, 0
    %v3979 = vsel %vm544, %v3967, 0
    %3981 = vmatprep.subr.mxu0 %v3947
    %3982 = vmatpush1.msra.mxu0 %v3946
    %3983 = vmatprep.subr.mxu0 %v3949
    %3984 = vmatpush1.msra.mxu0 %v3948
    %3985 = vmatprep.subr.mxu0 %v3951
    %3986 = vmatpush1.msra.mxu0 %v3950
    %3987 = vmatprep.subr.mxu0 %v3953
    %3988 = vmatpush1.msra.mxu0 %v3952
    %3989 = vmatprep.subr.mxu0 %v3955
    %3990 = vmatpush1.msra.mxu0 %v3954
    %3991 = vmatprep.subr.mxu0 %v3957
    %3992 = vmatpush1.msra.mxu0 %v3956
    %3993 = vmatprep.subr.mxu0 %v3959
    %3994 = vmatpush1.msra.mxu0 %v3958
    %3995 = vmatprep.subr.mxu0 %v3961
    %3996 = vmatpush1.msra.mxu0 %v3960
    %3997 = vmatprep.subr.mxu0 %v3963
    %3998 = vmatpush1.msra.mxu0 %v3962
    %3999 = vmatprep.subr.mxu0 %v3965
    %4000 = vmatpush1.msra.mxu0 %v3964
    %4001 = vmatprep.subr.mxu0 %v3979
    %4002 = vmatpush1.msra.mxu0 %v3976
    %4003 = vmatprep.subr.mxu0 0.0
    %4004 = vmatpush1.msra.mxu0 0.0
    %4005 = vmatprep.subr.mxu0 0.0
    %4006 = vmatpush1.msra.mxu0 0.0
    %4007 = vmatprep.subr.mxu0 0.0
    %4008 = vmatpush1.msra.mxu0 0.0
    %4009 = vmatprep.subr.mxu0 0.0
    %4010 = vmatpush1.msra.mxu0 0.0
    %4011 = vmatprep.subr.mxu0 0.0
    %4012 = vmatpush1.msra.mxu0 0.0
    %4013 = vmatprep.subr.mxu0 0.0
    %4014 = vmatpush1.msra.mxu0 0.0
    %4015 = vmatprep.subr.mxu0 0.0
    %4016 = vmatpush1.msra.mxu0 0.0
    %4017 = vmatprep.subr.mxu0 0.0
    %4018 = vmatpush1.msra.mxu0 0.0
    %4019 = vmatprep.subr.mxu0 0.0
    %4020 = vmatpush1.msra.mxu0 0.0
    %4021 = vmatprep.subr.mxu0 0.0
    %4022 = vmatpush1.msra.mxu0 0.0
    %4023 = vmatprep.subr.mxu0 0.0
    %4024 = vmatpush1.msra.mxu0 0.0
    %4025 = vmatprep.subr.mxu0 0.0
    %4026 = vmatpush1.msra.mxu0 0.0
    %4027 = vmatprep.subr.mxu0 0.0
    %4028 = vmatpush1.msra.mxu0 0.0
    %4029 = vmatprep.subr.mxu0 0.0
    %4030 = vmatpush1.msra.mxu0 0.0
    %4031 = vmatprep.subr.mxu0 0.0
    %4032 = vmatpush1.msra.mxu0 0.0
    %4033 = vmatprep.subr.mxu0 0.0
    %4034 = vmatpush1.msra.mxu0 0.0
    %4035 = vmatprep.subr.mxu0 0.0
    %4036 = vmatpush1.msra.mxu0 0.0
    %4037 = vmatprep.subr.mxu0 0.0
    %4038 = vmatpush1.msra.mxu0 0.0
    %4039 = vmatprep.subr.mxu0 0.0
    %4040 = vmatpush1.msra.mxu0 0.0
    %4041 = vmatprep.subr.mxu0 0.0
    %4042 = vmatpush1.msra.mxu0 0.0
    %4043 = vmatprep.subr.mxu0 0.0
    %4044 = vmatpush1.msra.mxu0 0.0
    %4045 = vmatprep.mubr.f32.mxu0 0.0
    %4046 = vmatmul.mubr.f32.gmra.mrb[0].mxu0 %v3971
    %v4047 = vpop.f32.mrb[0].mxu0
    %v4048 = vadd.f32 0.0, %v4047
    %v4049 = vpop.f32.mrb[0].mxu0
    %v4050 = vadd.f32 0.0, %v4049
    %4051 = vmatprep.mubr.f32.mxu0 0.0
    %4052 = vmatmul.mubr.f32.gmra.mrb[0].mxu0 %v3973
    %v4053 = vpop.f32.mrb[0].mxu0
    %v4054 = vadd.f32 0.0, %v4053
    %v4055 = vpop.f32.mrb[0].mxu0
    %v4056 = vadd.f32 0.0, %v4055
    %4057 = vdwg.mxu0
    %v4058 = vadd.f32 %v3942, %v4048
    %v4059 = vadd.f32 %v3943, %v4050
    %v4060 = vadd.f32 %v3944, %v4054
    %v4061 = vadd.f32 %v3945, %v4056
    %v4062 = vld [vmem:[%s1526] sm:$0xff]
    %v4063 = vld [vmem:[%s1526 + $0x8] sm:$0xff]
    %v4064 = vld [vmem:[%s1526 + $0x10] sm:$0xff]
    %v4065 = vld [vmem:[%s1526 + $0x18] sm:$0xff]
    %v4066 = vld [vmem:[%s1526 + $0x20] sm:$0xff]
    %v4067 = vld [vmem:[%s1526 + $0x28] sm:$0xff]
    %v4068 = vld [vmem:[%s1526 + $0x30] sm:$0xff]
    %v4069 = vld [vmem:[%s1526 + $0x38] sm:$0xff]
    %v4070 = vld [vmem:[%s1526 + $0x40] sm:$0xff]
    %v4071 = vld [vmem:[%s1526 + $0x48] sm:$0xff]
    %v4072 = vld [vmem:[%s1526 + $0x50] sm:$0xff]
    %v4073 = vld [vmem:[%s1526 + $0x58] sm:$0xff]
    %v4074 = vld [vmem:[%s1526 + $0x60] sm:$0xff]
    %v4075 = vld [vmem:[%s1526 + $0x68] sm:$0xff]
    %v4076 = vld [vmem:[%s1526 + $0x70] sm:$0xff]
    %v4077 = vld [vmem:[%s1526 + $0x78] sm:$0xff]
    %v4078 = vld [vmem:[%s1526 + $0x80] sm:$0xff]
    %v4079 = vld [vmem:[%s1526 + $0x88] sm:$0xff]
    %v4080 = vld [vmem:[%s1526 + $0x90] sm:$0xff]
    %v4081 = vld [vmem:[%s1526 + $0x98] sm:$0xff]
    %v4082 = vld [vmem:[%s1526 + $0xa0] sm:$0xf]
    %v4083 = vld [vmem:[%s1526 + $0xa8] sm:$0xf]
    %v4084 = vrot.slane %v3605, 4
    %v4085 = vrot.slane %v3606, 4
    %v4086 = vsel %vm544, %v4084, %v4085
    %v4087 = vsel %vm1117, %v4086, 0
    %v4089 = vsel %vm1117, %v4085, 0
    %v4092 = vsel %vm544, %v4082, 0
    %v4095 = vsel %vm544, %v4083, 0
    %4097 = vmatprep.subr.mxu0 %v4063
    %4098 = vmatpush1.msra.mxu0 %v4062
    %4099 = vmatprep.subr.mxu0 %v4065
    %4100 = vmatpush1.msra.mxu0 %v4064
    %4101 = vmatprep.subr.mxu0 %v4067
    %4102 = vmatpush1.msra.mxu0 %v4066
    %4103 = vmatprep.subr.mxu0 %v4069
    %4104 = vmatpush1.msra.mxu0 %v4068
    %4105 = vmatprep.subr.mxu0 %v4071
    %4106 = vmatpush1.msra.mxu0 %v4070
    %4107 = vmatprep.subr.mxu0 %v4073
    %4108 = vmatpush1.msra.mxu0 %v4072
    %4109 = vmatprep.subr.mxu0 %v4075
    %4110 = vmatpush1.msra.mxu0 %v4074
    %4111 = vmatprep.subr.mxu0 %v4077
    %4112 = vmatpush1.msra.mxu0 %v4076
    %4113 = vmatprep.subr.mxu0 %v4079
    %4114 = vmatpush1.msra.mxu0 %v4078
    %4115 = vmatprep.subr.mxu0 %v4081
    %4116 = vmatpush1.msra.mxu0 %v4080
    %4117 = vmatprep.subr.mxu0 %v4095
    %4118 = vmatpush1.msra.mxu0 %v4092
    %4119 = vmatprep.subr.mxu0 0.0
    %4120 = vmatpush1.msra.mxu0 0.0
    %4121 = vmatprep.subr.mxu0 0.0
    %4122 = vmatpush1.msra.mxu0 0.0
    %4123 = vmatprep.subr.mxu0 0.0
    %4124 = vmatpush1.msra.mxu0 0.0
    %4125 = vmatprep.subr.mxu0 0.0
    %4126 = vmatpush1.msra.mxu0 0.0
    %4127 = vmatprep.subr.mxu0 0.0
    %4128 = vmatpush1.msra.mxu0 0.0
    %4129 = vmatprep.subr.mxu0 0.0
    %4130 = vmatpush1.msra.mxu0 0.0
    %4131 = vmatprep.subr.mxu0 0.0
    %4132 = vmatpush1.msra.mxu0 0.0
    %4133 = vmatprep.subr.mxu0 0.0
    %4134 = vmatpush1.msra.mxu0 0.0
    %4135 = vmatprep.subr.mxu0 0.0
    %4136 = vmatpush1.msra.mxu0 0.0
    %4137 = vmatprep.subr.mxu0 0.0
    %4138 = vmatpush1.msra.mxu0 0.0
    %4139 = vmatprep.subr.mxu0 0.0
    %4140 = vmatpush1.msra.mxu0 0.0
    %4141 = vmatprep.subr.mxu0 0.0
    %4142 = vmatpush1.msra.mxu0 0.0
    %4143 = vmatprep.subr.mxu0 0.0
    %4144 = vmatpush1.msra.mxu0 0.0
    %4145 = vmatprep.subr.mxu0 0.0
    %4146 = vmatpush1.msra.mxu0 0.0
    %4147 = vmatprep.subr.mxu0 0.0
    %4148 = vmatpush1.msra.mxu0 0.0
    %4149 = vmatprep.subr.mxu0 0.0
    %4150 = vmatpush1.msra.mxu0 0.0
    %4151 = vmatprep.subr.mxu0 0.0
    %4152 = vmatpush1.msra.mxu0 0.0
    %4153 = vmatprep.subr.mxu0 0.0
    %4154 = vmatpush1.msra.mxu0 0.0
    %4155 = vmatprep.subr.mxu0 0.0
    %4156 = vmatpush1.msra.mxu0 0.0
    %4157 = vmatprep.subr.mxu0 0.0
    %4158 = vmatpush1.msra.mxu0 0.0
    %4159 = vmatprep.subr.mxu0 0.0
    %4160 = vmatpush1.msra.mxu0 0.0
    %4161 = vmatprep.mubr.f32.mxu0 0.0
    %4162 = vmatmul.mubr.f32.gmra.mrb[0].mxu0 %v4087
    %v4163 = vpop.f32.mrb[0].mxu0
    %v4164 = vadd.f32 0.0, %v4163
    %v4165 = vpop.f32.mrb[0].mxu0
    %v4166 = vadd.f32 0.0, %v4165
    %4167 = vmatprep.mubr.f32.mxu0 0.0
    %4168 = vmatmul.mubr.f32.gmra.mrb[0].mxu0 %v4089
    %v4169 = vpop.f32.mrb[0].mxu0
    %v4170 = vadd.f32 0.0, %v4169
    %v4171 = vpop.f32.mrb[0].mxu0
    %v4172 = vadd.f32 0.0, %v4171
    %4173 = vdwg.mxu0
    %v4174 = vadd.f32 %v4058, %v4164
    %v4175 = vadd.f32 %v4059, %v4166
    %v4176 = vadd.f32 %v4060, %v4170
    %v4177 = vadd.f32 %v4061, %v4172
    %v4178 = vld [vmem:[%s4] sm:$0x3]
    %v4180 = vlaneseq
    %v4181 = vshrl.u32 %v4180, 7
    %v4182 = vsub.s32 0, %v4181
    %v4183 = vrot.slane %v4178, %v4182
    %v4184 = vlaneseq
    %v4185 = vshrl.u32 %v4184, 7
    %v4186 = vsub.s32 1, %v4185
    %v4187 = vrot.slane %v4178, %v4186
    %v4190 = vadd.f32 %v4174, %v4183
    %v4191 = vadd.f32 %v4175, %v4187
    %v4192 = vadd.f32 %v4176, %v4183
    %v4193 = vadd.f32 %v4177, %v4187
    %v4194 = vmax.f32 %v4190, 0.0
    %v4195 = vmax.f32 %v4191, 0.0
    %v4196 = vmax.f32 %v4192, 0.0
    %v4197 = vmax.f32 %v4193, 0.0
    %v4198 = vld [vmem:[%s11] sm:$0x1f]
    %v4200 = vsel %vm1664, %v4198, 0
    %v4203 = vsel %vm1668, %v4196, 0
    %v4206 = vsel %vm1668, %v4197, 0
    %4208 = vmatprep.subr.mxu0 %v4195
    %4209 = vmatpush1.msra.mxu0 %v4194
    %4210 = vmatprep.subr.mxu0 %v4206
    %4211 = vmatpush1.msra.mxu0 %v4203
    %4212 = vmatprep.subr.mxu0 0.0
    %4213 = vmatpush1.msra.mxu0 0.0
    %4214 = vmatprep.subr.mxu0 0.0
    %4215 = vmatpush1.msra.mxu0 0.0
    %4216 = vmatprep.subr.mxu0 0.0
    %4217 = vmatpush1.msra.mxu0 0.0
    %4218 = vmatprep.subr.mxu0 0.0
    %4219 = vmatpush1.msra.mxu0 0.0
    %4220 = vmatprep.subr.mxu0 0.0
    %4221 = vmatpush1.msra.mxu0 0.0
    %4222 = vmatprep.subr.mxu0 0.0
    %4223 = vmatpush1.msra.mxu0 0.0
    %4224 = vmatprep.subr.mxu0 0.0
    %4225 = vmatpush1.msra.mxu0 0.0
    %4226 = vmatprep.subr.mxu0 0.0
    %4227 = vmatpush1.msra.mxu0 0.0
    %4228 = vmatprep.subr.mxu0 0.0
    %4229 = vmatpush1.msra.mxu0 0.0
    %4230 = vmatprep.subr.mxu0 0.0
    %4231 = vmatpush1.msra.mxu0 0.0
    %4232 = vmatprep.subr.mxu0 0.0
    %4233 = vmatpush1.msra.mxu0 0.0
    %4234 = vmatprep.subr.mxu0 0.0
    %4235 = vmatpush1.msra.mxu0 0.0
    %4236 = vmatprep.subr.mxu0 0.0
    %4237 = vmatpush1.msra.mxu0 0.0
    %4238 = vmatprep.subr.mxu0 0.0
    %4239 = vmatpush1.msra.mxu0 0.0
    %4240 = vmatprep.subr.mxu0 0.0
    %4241 = vmatpush1.msra.mxu0 0.0
    %4242 = vmatprep.subr.mxu0 0.0
    %4243 = vmatpush1.msra.mxu0 0.0
    %4244 = vmatprep.subr.mxu0 0.0
    %4245 = vmatpush1.msra.mxu0 0.0
    %4246 = vmatprep.subr.mxu0 0.0
    %4247 = vmatpush1.msra.mxu0 0.0
    %4248 = vmatprep.subr.mxu0 0.0
    %4249 = vmatpush1.msra.mxu0 0.0
    %4250 = vmatprep.subr.mxu0 0.0
    %4251 = vmatpush1.msra.mxu0 0.0
    %4252 = vmatprep.subr.mxu0 0.0
    %4253 = vmatpush1.msra.mxu0 0.0
    %4254 = vmatprep.subr.mxu0 0.0
    %4255 = vmatpush1.msra.mxu0 0.0
    %4256 = vmatprep.subr.mxu0 0.0
    %4257 = vmatpush1.msra.mxu0 0.0
    %4258 = vmatprep.subr.mxu0 0.0
    %4259 = vmatpush1.msra.mxu0 0.0
    %4260 = vmatprep.subr.mxu0 0.0
    %4261 = vmatpush1.msra.mxu0 0.0
    %4262 = vmatprep.subr.mxu0 0.0
    %4263 = vmatpush1.msra.mxu0 0.0
    %4264 = vmatprep.subr.mxu0 0.0
    %4265 = vmatpush1.msra.mxu0 0.0
    %4266 = vmatprep.subr.mxu0 0.0
    %4267 = vmatpush1.msra.mxu0 0.0
    %4268 = vmatprep.subr.mxu0 0.0
    %4269 = vmatpush1.msra.mxu0 0.0
    %4270 = vmatprep.subr.mxu0 0.0
    %4271 = vmatpush1.msra.mxu0 0.0
    %4272 = vmatprep.mubr.f32.mxu0 0.0
    %4273 = vmatmul.mubr.f32.gmra.mrb[0].mxu0 %v4200
    %v4274 = vpop.f32.mrb[0].mxu0
    %v4275 = vadd.f32 0.0, %v4274
    %v4276 = vpop.f32.mrb[0].mxu0
    %v4277 = vadd.f32 0.0, %v4276
    %4278 = vdwg.mxu0
    %v4279 = vld [vmem:[%s12] sm:$0x1f]
    %v4281 = vsel %vm1664, %v4279, 0
    %4283 = vmatprep.subr.mxu0 %v4195
    %4284 = vmatpush1.msra.mxu0 %v4194
    %4285 = vmatprep.subr.mxu0 %v4206
    %4286 = vmatpush1.msra.mxu0 %v4203
    %4287 = vmatprep.subr.mxu0 0.0
    %4288 = vmatpush1.msra.mxu0 0.0
    %4289 = vmatprep.subr.mxu0 0.0
    %4290 = vmatpush1.msra.mxu0 0.0
    %4291 = vmatprep.subr.mxu0 0.0
    %4292 = vmatpush1.msra.mxu0 0.0
    %4293 = vmatprep.subr.mxu0 0.0
    %4294 = vmatpush1.msra.mxu0 0.0
    %4295 = vmatprep.subr.mxu0 0.0
    %4296 = vmatpush1.msra.mxu0 0.0
    %4297 = vmatprep.subr.mxu0 0.0
    %4298 = vmatpush1.msra.mxu0 0.0
    %4299 = vmatprep.subr.mxu0 0.0
    %4300 = vmatpush1.msra.mxu0 0.0
    %4301 = vmatprep.subr.mxu0 0.0
    %4302 = vmatpush1.msra.mxu0 0.0
    %4303 = vmatprep.subr.mxu0 0.0
    %4304 = vmatpush1.msra.mxu0 0.0
    %4305 = vmatprep.subr.mxu0 0.0
    %4306 = vmatpush1.msra.mxu0 0.0
    %4307 = vmatprep.subr.mxu0 0.0
    %4308 = vmatpush1.msra.mxu0 0.0
    %4309 = vmatprep.subr.mxu0 0.0
    %4310 = vmatpush1.msra.mxu0 0.0
    %4311 = vmatprep.subr.mxu0 0.0
    %4312 = vmatpush1.msra.mxu0 0.0
    %4313 = vmatprep.subr.mxu0 0.0
    %4314 = vmatpush1.msra.mxu0 0.0
    %4315 = vmatprep.subr.mxu0 0.0
    %4316 = vmatpush1.msra.mxu0 0.0
    %4317 = vmatprep.subr.mxu0 0.0
    %4318 = vmatpush1.msra.mxu0 0.0
    %4319 = vmatprep.subr.mxu0 0.0
    %4320 = vmatpush1.msra.mxu0 0.0
    %4321 = vmatprep.subr.mxu0 0.0
    %4322 = vmatpush1.msra.mxu0 0.0
    %4323 = vmatprep.subr.mxu0 0.0
    %4324 = vmatpush1.msra.mxu0 0.0
    %4325 = vmatprep.subr.mxu0 0.0
    %4326 = vmatpush1.msra.mxu0 0.0
    %4327 = vmatprep.subr.mxu0 0.0
    %4328 = vmatpush1.msra.mxu0 0.0
    %4329 = vmatprep.subr.mxu0 0.0
    %4330 = vmatpush1.msra.mxu0 0.0
    %4331 = vmatprep.subr.mxu0 0.0
    %4332 = vmatpush1.msra.mxu0 0.0
    %4333 = vmatprep.subr.mxu0 0.0
    %4334 = vmatpush1.msra.mxu0 0.0
    %4335 = vmatprep.subr.mxu0 0.0
    %4336 = vmatpush1.msra.mxu0 0.0
    %4337 = vmatprep.subr.mxu0 0.0
    %4338 = vmatpush1.msra.mxu0 0.0
    %4339 = vmatprep.subr.mxu0 0.0
    %4340 = vmatpush1.msra.mxu0 0.0
    %4341 = vmatprep.subr.mxu0 0.0
    %4342 = vmatpush1.msra.mxu0 0.0
    %4343 = vmatprep.subr.mxu0 0.0
    %4344 = vmatpush1.msra.mxu0 0.0
    %4345 = vmatprep.subr.mxu0 0.0
    %4346 = vmatpush1.msra.mxu0 0.0
    %4347 = vmatprep.mubr.f32.mxu0 0.0
    %4348 = vmatmul.mubr.f32.gmra.mrb[0].mxu0 %v4281
    %v4349 = vpop.f32.mrb[0].mxu0
    %v4350 = vadd.f32 0.0, %v4349
    %v4351 = vpop.f32.mrb[0].mxu0
    %v4352 = vadd.f32 0.0, %v4351
    %4353 = vdwg.mxu0
    %v4354 = vmax.f32 %v4275, %v4350
    %v4355 = vmax.f32 %v4277, %v4352
    %v4356 = vld [vmem:[%s13] sm:$0xff]
    %v4357 = vld [vmem:[%s13 + $0x8] sm:$0xff]
    %v4358 = vld [vmem:[%s13 + $0x10] sm:$0xff]
    %v4359 = vld [vmem:[%s13 + $0x18] sm:$0xff]
    %v4360 = vld [vmem:[%s13 + $0x20] sm:$0xff]
    %v4361 = vld [vmem:[%s13 + $0x28] sm:$0xff]
    %v4362 = vld [vmem:[%s13 + $0x30] sm:$0xff]
    %v4363 = vld [vmem:[%s13 + $0x38] sm:$0xff]
    %v4364 = vld [vmem:[%s13 + $0x40] sm:$0xff]
    %v4365 = vld [vmem:[%s13 + $0x48] sm:$0xff]
    %v4366 = vld [vmem:[%s13 + $0x50] sm:$0xff]
    %v4367 = vld [vmem:[%s13 + $0x58] sm:$0xff]
    %v4368 = vld [vmem:[%s13 + $0x60] sm:$0xff]
    %v4369 = vld [vmem:[%s13 + $0x68] sm:$0xff]
    %v4370 = vld [vmem:[%s13 + $0x70] sm:$0xff]
    %v4371 = vld [vmem:[%s13 + $0x78] sm:$0xff]
    %v4372 = vld [vmem:[%s13 + $0x80] sm:$0xff]
    %v4373 = vld [vmem:[%s13 + $0x88] sm:$0xff]
    %v4374 = vld [vmem:[%s13 + $0x90] sm:$0xff]
    %v4375 = vld [vmem:[%s13 + $0x98] sm:$0xff]
    %v4377 = vsel %vm96, %v4355, 0
    %4379 = vmatprep.subr.mxu0 0.0
    %4380 = vmatpush1.msra.mxu0 %v4356
    %4381 = vmatprep.subr.mxu0 0.0
    %4382 = vmatpush1.msra.mxu0 %v4357
    %4383 = vmatprep.subr.mxu0 0.0
    %4384 = vmatpush1.msra.mxu0 %v4358
    %4385 = vmatprep.subr.mxu0 0.0
    %4386 = vmatpush1.msra.mxu0 %v4359
    %4387 = vmatprep.subr.mxu0 0.0
    %4388 = vmatpush1.msra.mxu0 %v4360
    %4389 = vmatprep.subr.mxu0 0.0
    %4390 = vmatpush1.msra.mxu0 %v4361
    %4391 = vmatprep.subr.mxu0 0.0
    %4392 = vmatpush1.msra.mxu0 %v4362
    %4393 = vmatprep.subr.mxu0 0.0
    %4394 = vmatpush1.msra.mxu0 %v4363
    %4395 = vmatprep.subr.mxu0 0.0
    %4396 = vmatpush1.msra.mxu0 %v4364
    %4397 = vmatprep.subr.mxu0 0.0
    %4398 = vmatpush1.msra.mxu0 %v4365
    %4399 = vmatprep.subr.mxu0 0.0
    %4400 = vmatpush1.msra.mxu0 %v4366
    %4401 = vmatprep.subr.mxu0 0.0
    %4402 = vmatpush1.msra.mxu0 %v4367
    %4403 = vmatprep.subr.mxu0 0.0
    %4404 = vmatpush1.msra.mxu0 %v4368
    %4405 = vmatprep.subr.mxu0 0.0
    %4406 = vmatpush1.msra.mxu0 %v4369
    %4407 = vmatprep.subr.mxu0 0.0
    %4408 = vmatpush1.msra.mxu0 %v4370
    %4409 = vmatprep.subr.mxu0 0.0
    %4410 = vmatpush1.msra.mxu0 %v4371
    %4411 = vmatprep.subr.mxu0 0.0
    %4412 = vmatpush1.msra.mxu0 %v4372
    %4413 = vmatprep.subr.mxu0 0.0
    %4414 = vmatpush1.msra.mxu0 %v4373
    %4415 = vmatprep.subr.mxu0 0.0
    %4416 = vmatpush1.msra.mxu0 %v4374
    %4417 = vmatprep.subr.mxu0 0.0
    %4418 = vmatpush1.msra.mxu0 %v4375
    %4419 = vmatprep.subr.mxu0 0.0
    %4420 = vmatpush1.msra.mxu0 0.0
    %4421 = vmatprep.subr.mxu0 0.0
    %4422 = vmatpush1.msra.mxu0 0.0
    %4423 = vmatprep.subr.mxu0 0.0
    %4424 = vmatpush1.msra.mxu0 0.0
    %4425 = vmatprep.subr.mxu0 0.0
    %4426 = vmatpush1.msra.mxu0 0.0
    %4427 = vmatprep.subr.mxu0 0.0
    %4428 = vmatpush1.msra.mxu0 0.0
    %4429 = vmatprep.subr.mxu0 0.0
    %4430 = vmatpush1.msra.mxu0 0.0
    %4431 = vmatprep.subr.mxu0 0.0
    %4432 = vmatpush1.msra.mxu0 0.0
    %4433 = vmatprep.subr.mxu0 0.0
    %4434 = vmatpush1.msra.mxu0 0.0
    %4435 = vmatprep.subr.mxu0 0.0
    %4436 = vmatpush1.msra.mxu0 0.0
    %4437 = vmatprep.subr.mxu0 0.0
    %4438 = vmatpush1.msra.mxu0 0.0
    %4439 = vmatprep.subr.mxu0 0.0
    %4440 = vmatpush1.msra.mxu0 0.0
    %4441 = vmatprep.subr.mxu0 0.0
    %4442 = vmatpush1.msra.mxu0 0.0
    %4443 = vmatprep.mubr.f32.mxu0 %v4377
    %4444 = vmatmul.mubr.f32.gmra.mrb[0].mxu0 %v4354
    %v4445 = vpop.f32.mrb[0].mxu0
    %v4446 = vadd.f32 0.0, %v4445
    %v4447 = vpop.f32.mrb[0].mxu0
    %4448 = vdwg.mxu0
    %v4449 = vld [vmem:[%s14] sm:$0xff]
    %v4450 = vld [vmem:[%s14 + $0x8] sm:$0xff]
    %v4451 = vld [vmem:[%s14 + $0x10] sm:$0xff]
    %v4452 = vld [vmem:[%s14 + $0x18] sm:$0xff]
    %v4453 = vld [vmem:[%s14 + $0x20] sm:$0xff]
    %v4454 = vld [vmem:[%s14 + $0x28] sm:$0xff]
    %v4455 = vld [vmem:[%s14 + $0x30] sm:$0xff]
    %v4456 = vld [vmem:[%s14 + $0x38] sm:$0xff]
    %v4457 = vld [vmem:[%s14 + $0x40] sm:$0xff]
    %v4458 = vld [vmem:[%s14 + $0x48] sm:$0xff]
    %v4459 = vld [vmem:[%s14 + $0x50] sm:$0xff]
    %v4460 = vld [vmem:[%s14 + $0x58] sm:$0xff]
    %v4461 = vld [vmem:[%s14 + $0x60] sm:$0xff]
    %v4462 = vld [vmem:[%s14 + $0x68] sm:$0xff]
    %v4463 = vld [vmem:[%s14 + $0x70] sm:$0xff]
    %v4464 = vld [vmem:[%s14 + $0x78] sm:$0xff]
    %v4465 = vld [vmem:[%s14 + $0x80] sm:$0xff]
    %v4466 = vld [vmem:[%s14 + $0x88] sm:$0xff]
    %v4467 = vld [vmem:[%s14 + $0x90] sm:$0xff]
    %v4468 = vld [vmem:[%s14 + $0x98] sm:$0xff]
    %4469 = vmatprep.subr.mxu0 0.0
    %4470 = vmatpush1.msra.mxu0 %v4449
    %4471 = vmatprep.subr.mxu0 0.0
    %4472 = vmatpush1.msra.mxu0 %v4450
    %4473 = vmatprep.subr.mxu0 0.0
    %4474 = vmatpush1.msra.mxu0 %v4451
    %4475 = vmatprep.subr.mxu0 0.0
    %4476 = vmatpush1.msra.mxu0 %v4452
    %4477 = vmatprep.subr.mxu0 0.0
    %4478 = vmatpush1.msra.mxu0 %v4453
    %4479 = vmatprep.subr.mxu0 0.0
    %4480 = vmatpush1.msra.mxu0 %v4454
    %4481 = vmatprep.subr.mxu0 0.0
    %4482 = vmatpush1.msra.mxu0 %v4455
    %4483 = vmatprep.subr.mxu0 0.0
    %4484 = vmatpush1.msra.mxu0 %v4456
    %4485 = vmatprep.subr.mxu0 0.0
    %4486 = vmatpush1.msra.mxu0 %v4457
    %4487 = vmatprep.subr.mxu0 0.0
    %4488 = vmatpush1.msra.mxu0 %v4458
    %4489 = vmatprep.subr.mxu0 0.0
    %4490 = vmatpush1.msra.mxu0 %v4459
    %4491 = vmatprep.subr.mxu0 0.0
    %4492 = vmatpush1.msra.mxu0 %v4460
    %4493 = vmatprep.subr.mxu0 0.0
    %4494 = vmatpush1.msra.mxu0 %v4461
    %4495 = vmatprep.subr.mxu0 0.0
    %4496 = vmatpush1.msra.mxu0 %v4462
    %4497 = vmatprep.subr.mxu0 0.0
    %4498 = vmatpush1.msra.mxu0 %v4463
    %4499 = vmatprep.subr.mxu0 0.0
    %4500 = vmatpush1.msra.mxu0 %v4464
    %4501 = vmatprep.subr.mxu0 0.0
    %4502 = vmatpush1.msra.mxu0 %v4465
    %4503 = vmatprep.subr.mxu0 0.0
    %4504 = vmatpush1.msra.mxu0 %v4466
    %4505 = vmatprep.subr.mxu0 0.0
    %4506 = vmatpush1.msra.mxu0 %v4467
    %4507 = vmatprep.subr.mxu0 0.0
    %4508 = vmatpush1.msra.mxu0 %v4468
    %4509 = vmatprep.subr.mxu0 0.0
    %4510 = vmatpush1.msra.mxu0 0.0
    %4511 = vmatprep.subr.mxu0 0.0
    %4512 = vmatpush1.msra.mxu0 0.0
    %4513 = vmatprep.subr.mxu0 0.0
    %4514 = vmatpush1.msra.mxu0 0.0
    %4515 = vmatprep.subr.mxu0 0.0
    %4516 = vmatpush1.msra.mxu0 0.0
    %4517 = vmatprep.subr.mxu0 0.0
    %4518 = vmatpush1.msra.mxu0 0.0
    %4519 = vmatprep.subr.mxu0 0.0
    %4520 = vmatpush1.msra.mxu0 0.0
    %4521 = vmatprep.subr.mxu0 0.0
    %4522 = vmatpush1.msra.mxu0 0.0
    %4523 = vmatprep.subr.mxu0 0.0
    %4524 = vmatpush1.msra.mxu0 0.0
    %4525 = vmatprep.subr.mxu0 0.0
    %4526 = vmatpush1.msra.mxu0 0.0
    %4527 = vmatprep.subr.mxu0 0.0
    %4528 = vmatpush1.msra.mxu0 0.0
    %4529 = vmatprep.subr.mxu0 0.0
    %4530 = vmatpush1.msra.mxu0 0.0
    %4531 = vmatprep.subr.mxu0 0.0
    %4532 = vmatpush1.msra.mxu0 0.0
    %4533 = vmatprep.mubr.f32.mxu0 %v4377
    %4534 = vmatmul.mubr.f32.gmra.mrb[0].mxu0 %v4354
    %v4535 = vpop.f32.mrb[0].mxu0
    %v4536 = vadd.f32 0.0, %v4535
    %v4537 = vpop.f32.mrb[0].mxu0
    %4538 = vdwg.mxu0
    %v4539 = vmax.f32 %v4446, %v4536
    %v4540 = vld [vmem:[%s5] sm:$0xff]
    %v4541 = vld [vmem:[%s5 + $0x8] sm:$0xff]
    %v4542 = vld [vmem:[%s5 + $0x10] sm:$0xff]
    %v4543 = vld [vmem:[%s5 + $0x18] sm:$0xff]
    %v4544 = vld [vmem:[%s5 + $0x20] sm:$0xff]
    %v4545 = vld [vmem:[%s5 + $0x28] sm:$0xff]
    %v4546 = vld [vmem:[%s5 + $0x30] sm:$0xff]
    %v4547 = vld [vmem:[%s5 + $0x38] sm:$0xff]
    %v4548 = vld [vmem:[%s5 + $0x40] sm:$0xff]
    %v4549 = vld [vmem:[%s5 + $0x48] sm:$0xff]
    %v4550 = vld [vmem:[%s2017] sm:$0xff]
    %v4551 = vld [vmem:[%s2017 + $0x8] sm:$0xff]
    %v4552 = vld [vmem:[%s2017 + $0x10] sm:$0xff]
    %v4553 = vld [vmem:[%s2017 + $0x18] sm:$0xff]
    %v4554 = vld [vmem:[%s2017 + $0x20] sm:$0xff]
    %v4555 = vld [vmem:[%s2017 + $0x28] sm:$0xff]
    %v4556 = vld [vmem:[%s2017 + $0x30] sm:$0xff]
    %v4557 = vld [vmem:[%s2017 + $0x38] sm:$0xff]
    %v4558 = vld [vmem:[%s2017 + $0x40] sm:$0xff]
    %v4559 = vld [vmem:[%s2017 + $0x48] sm:$0xff]
    %v4561 = vrot.slane %v4539, 1
    %v4562 = vsel %vm2030, %v4561, 0
    %4564 = vmatprep.subr.mxu0 0.0
    %4565 = vmatpush1.msra.mxu0 %v4550
    %4566 = vmatprep.subr.mxu0 0.0
    %4567 = vmatpush1.msra.mxu0 %v4551
    %4568 = vmatprep.subr.mxu0 0.0
    %4569 = vmatpush1.msra.mxu0 %v4552
    %4570 = vmatprep.subr.mxu0 0.0
    %4571 = vmatpush1.msra.mxu0 %v4553
    %4572 = vmatprep.subr.mxu0 0.0
    %4573 = vmatpush1.msra.mxu0 %v4554
    %4574 = vmatprep.subr.mxu0 0.0
    %4575 = vmatpush1.msra.mxu0 %v4555
    %4576 = vmatprep.subr.mxu0 0.0
    %4577 = vmatpush1.msra.mxu0 %v4556
    %4578 = vmatprep.subr.mxu0 0.0
    %4579 = vmatpush1.msra.mxu0 %v4557
    %4580 = vmatprep.subr.mxu0 0.0
    %4581 = vmatpush1.msra.mxu0 %v4558
    %4582 = vmatprep.subr.mxu0 0.0
    %4583 = vmatpush1.msra.mxu0 %v4559
    %4584 = vmatprep.subr.mxu0 0.0
    %4585 = vmatpush1.msra.mxu0 0.0
    %4586 = vmatprep.subr.mxu0 0.0
    %4587 = vmatpush1.msra.mxu0 0.0
    %4588 = vmatprep.subr.mxu0 0.0
    %4589 = vmatpush1.msra.mxu0 0.0
    %4590 = vmatprep.subr.mxu0 0.0
    %4591 = vmatpush1.msra.mxu0 0.0
    %4592 = vmatprep.subr.mxu0 0.0
    %4593 = vmatpush1.msra.mxu0 0.0
    %4594 = vmatprep.subr.mxu0 0.0
    %4595 = vmatpush1.msra.mxu0 0.0
    %4596 = vmatprep.subr.mxu0 0.0
    %4597 = vmatpush1.msra.mxu0 0.0
    %4598 = vmatprep.subr.mxu0 0.0
    %4599 = vmatpush1.msra.mxu0 0.0
    %4600 = vmatprep.subr.mxu0 0.0
    %4601 = vmatpush1.msra.mxu0 0.0
    %4602 = vmatprep.subr.mxu0 0.0
    %4603 = vmatpush1.msra.mxu0 0.0
    %4604 = vmatprep.subr.mxu0 0.0
    %4605 = vmatpush1.msra.mxu0 0.0
    %4606 = vmatprep.subr.mxu0 0.0
    %4607 = vmatpush1.msra.mxu0 0.0
    %4608 = vmatprep.subr.mxu0 0.0
    %4609 = vmatpush1.msra.mxu0 0.0
    %4610 = vmatprep.subr.mxu0 0.0
    %4611 = vmatpush1.msra.mxu0 0.0
    %4612 = vmatprep.subr.mxu0 0.0
    %4613 = vmatpush1.msra.mxu0 0.0
    %4614 = vmatprep.subr.mxu0 0.0
    %4615 = vmatpush1.msra.mxu0 0.0
    %4616 = vmatprep.subr.mxu0 0.0
    %4617 = vmatpush1.msra.mxu0 0.0
    %4618 = vmatprep.subr.mxu0 0.0
    %4619 = vmatpush1.msra.mxu0 0.0
    %4620 = vmatprep.subr.mxu0 0.0
    %4621 = vmatpush1.msra.mxu0 0.0
    %4622 = vmatprep.subr.mxu0 0.0
    %4623 = vmatpush1.msra.mxu0 0.0
    %4624 = vmatprep.subr.mxu0 0.0
    %4625 = vmatpush1.msra.mxu0 0.0
    %4626 = vmatprep.subr.mxu0 0.0
    %4627 = vmatpush1.msra.mxu0 0.0
    %4628 = vmatprep.mubr.f32.mxu0 0.0
    %4629 = vmatmul.mubr.f32.gmra.mrb[0].mxu0 %v4562
    %v4630 = vpop.f32.mrb[0].mxu0
    %v4631 = vadd.f32 0.0, %v4630
    %v4632 = vpop.f32.mrb[0].mxu0
    %4633 = vdwg.mxu0
    %v4634 = vsel %vm2030, %v4539, 0
    %4636 = vmatprep.subr.mxu0 0.0
    %4637 = vmatpush1.msra.mxu0 %v4540
    %4638 = vmatprep.subr.mxu0 0.0
    %4639 = vmatpush1.msra.mxu0 %v4541
    %4640 = vmatprep.subr.mxu0 0.0
    %4641 = vmatpush1.msra.mxu0 %v4542
    %4642 = vmatprep.subr.mxu0 0.0
    %4643 = vmatpush1.msra.mxu0 %v4543
    %4644 = vmatprep.subr.mxu0 0.0
    %4645 = vmatpush1.msra.mxu0 %v4544
    %4646 = vmatprep.subr.mxu0 0.0
    %4647 = vmatpush1.msra.mxu0 %v4545
    %4648 = vmatprep.subr.mxu0 0.0
    %4649 = vmatpush1.msra.mxu0 %v4546
    %4650 = vmatprep.subr.mxu0 0.0
    %4651 = vmatpush1.msra.mxu0 %v4547
    %4652 = vmatprep.subr.mxu0 0.0
    %4653 = vmatpush1.msra.mxu0 %v4548
    %4654 = vmatprep.subr.mxu0 0.0
    %4655 = vmatpush1.msra.mxu0 %v4549
    %4656 = vmatprep.subr.mxu0 0.0
    %4657 = vmatpush1.msra.mxu0 0.0
    %4658 = vmatprep.subr.mxu0 0.0
    %4659 = vmatpush1.msra.mxu0 0.0
    %4660 = vmatprep.subr.mxu0 0.0
    %4661 = vmatpush1.msra.mxu0 0.0
    %4662 = vmatprep.subr.mxu0 0.0
    %4663 = vmatpush1.msra.mxu0 0.0
    %4664 = vmatprep.subr.mxu0 0.0
    %4665 = vmatpush1.msra.mxu0 0.0
    %4666 = vmatprep.subr.mxu0 0.0
    %4667 = vmatpush1.msra.mxu0 0.0
    %4668 = vmatprep.subr.mxu0 0.0
    %4669 = vmatpush1.msra.mxu0 0.0
    %4670 = vmatprep.subr.mxu0 0.0
    %4671 = vmatpush1.msra.mxu0 0.0
    %4672 = vmatprep.subr.mxu0 0.0
    %4673 = vmatpush1.msra.mxu0 0.0
    %4674 = vmatprep.subr.mxu0 0.0
    %4675 = vmatpush1.msra.mxu0 0.0
    %4676 = vmatprep.subr.mxu0 0.0
    %4677 = vmatpush1.msra.mxu0 0.0
    %4678 = vmatprep.subr.mxu0 0.0
    %4679 = vmatpush1.msra.mxu0 0.0
    %4680 = vmatprep.subr.mxu0 0.0
    %4681 = vmatpush1.msra.mxu0 0.0
    %4682 = vmatprep.subr.mxu0 0.0
    %4683 = vmatpush1.msra.mxu0 0.0
    %4684 = vmatprep.subr.mxu0 0.0
    %4685 = vmatpush1.msra.mxu0 0.0
    %4686 = vmatprep.subr.mxu0 0.0
    %4687 = vmatpush1.msra.mxu0 0.0
    %4688 = vmatprep.subr.mxu0 0.0
    %4689 = vmatpush1.msra.mxu0 0.0
    %4690 = vmatprep.subr.mxu0 0.0
    %4691 = vmatpush1.msra.mxu0 0.0
    %4692 = vmatprep.subr.mxu0 0.0
    %4693 = vmatpush1.msra.mxu0 0.0
    %4694 = vmatprep.subr.mxu0 0.0
    %4695 = vmatpush1.msra.mxu0 0.0
    %4696 = vmatprep.subr.mxu0 0.0
    %4697 = vmatpush1.msra.mxu0 0.0
    %4698 = vmatprep.subr.mxu0 0.0
    %4699 = vmatpush1.msra.mxu0 0.0
    %4700 = vmatprep.mubr.f32.mxu0 0.0
    %4701 = vmatmul.mubr.f32.gmra.mrb[0].mxu0 %v4634
    %v4702 = vpop.f32.mrb[0].mxu0
    %v4703 = vadd.f32 %v4631, %v4702
    %v4704 = vpop.f32.mrb[0].mxu0
    %4705 = vdwg.mxu0
    %v4706 = vld [vmem:[%s2175] sm:$0xff]
    %v4707 = vld [vmem:[%s2175 + $0x8] sm:$0xff]
    %v4708 = vld [vmem:[%s2175 + $0x10] sm:$0xff]
    %v4709 = vld [vmem:[%s2175 + $0x18] sm:$0xff]
    %v4710 = vld [vmem:[%s2175 + $0x20] sm:$0xff]
    %v4711 = vld [vmem:[%s2175 + $0x28] sm:$0xff]
    %v4712 = vld [vmem:[%s2175 + $0x30] sm:$0xff]
    %v4713 = vld [vmem:[%s2175 + $0x38] sm:$0xff]
    %v4714 = vld [vmem:[%s2175 + $0x40] sm:$0xff]
    %v4715 = vld [vmem:[%s2175 + $0x48] sm:$0xff]
    %v4716 = vrot.slane %v4539, 2
    %v4717 = vsel %vm2030, %v4716, 0
    %4719 = vmatprep.subr.mxu0 0.0
    %4720 = vmatpush1.msra.mxu0 %v4706
    %4721 = vmatprep.subr.mxu0 0.0
    %4722 = vmatpush1.msra.mxu0 %v4707
    %4723 = vmatprep.subr.mxu0 0.0
    %4724 = vmatpush1.msra.mxu0 %v4708
    %4725 = vmatprep.subr.mxu0 0.0
    %4726 = vmatpush1.msra.mxu0 %v4709
    %4727 = vmatprep.subr.mxu0 0.0
    %4728 = vmatpush1.msra.mxu0 %v4710
    %4729 = vmatprep.subr.mxu0 0.0
    %4730 = vmatpush1.msra.mxu0 %v4711
    %4731 = vmatprep.subr.mxu0 0.0
    %4732 = vmatpush1.msra.mxu0 %v4712
    %4733 = vmatprep.subr.mxu0 0.0
    %4734 = vmatpush1.msra.mxu0 %v4713
    %4735 = vmatprep.subr.mxu0 0.0
    %4736 = vmatpush1.msra.mxu0 %v4714
    %4737 = vmatprep.subr.mxu0 0.0
    %4738 = vmatpush1.msra.mxu0 %v4715
    %4739 = vmatprep.subr.mxu0 0.0
    %4740 = vmatpush1.msra.mxu0 0.0
    %4741 = vmatprep.subr.mxu0 0.0
    %4742 = vmatpush1.msra.mxu0 0.0
    %4743 = vmatprep.subr.mxu0 0.0
    %4744 = vmatpush1.msra.mxu0 0.0
    %4745 = vmatprep.subr.mxu0 0.0
    %4746 = vmatpush1.msra.mxu0 0.0
    %4747 = vmatprep.subr.mxu0 0.0
    %4748 = vmatpush1.msra.mxu0 0.0
    %4749 = vmatprep.subr.mxu0 0.0
    %4750 = vmatpush1.msra.mxu0 0.0
    %4751 = vmatprep.subr.mxu0 0.0
    %4752 = vmatpush1.msra.mxu0 0.0
    %4753 = vmatprep.subr.mxu0 0.0
    %4754 = vmatpush1.msra.mxu0 0.0
    %4755 = vmatprep.subr.mxu0 0.0
    %4756 = vmatpush1.msra.mxu0 0.0
    %4757 = vmatprep.subr.mxu0 0.0
    %4758 = vmatpush1.msra.mxu0 0.0
    %4759 = vmatprep.subr.mxu0 0.0
    %4760 = vmatpush1.msra.mxu0 0.0
    %4761 = vmatprep.subr.mxu0 0.0
    %4762 = vmatpush1.msra.mxu0 0.0
    %4763 = vmatprep.subr.mxu0 0.0
    %4764 = vmatpush1.msra.mxu0 0.0
    %4765 = vmatprep.subr.mxu0 0.0
    %4766 = vmatpush1.msra.mxu0 0.0
    %4767 = vmatprep.subr.mxu0 0.0
    %4768 = vmatpush1.msra.mxu0 0.0
    %4769 = vmatprep.subr.mxu0 0.0
    %4770 = vmatpush1.msra.mxu0 0.0
    %4771 = vmatprep.subr.mxu0 0.0
    %4772 = vmatpush1.msra.mxu0 0.0
    %4773 = vmatprep.subr.mxu0 0.0
    %4774 = vmatpush1.msra.mxu0 0.0
    %4775 = vmatprep.subr.mxu0 0.0
    %4776 = vmatpush1.msra.mxu0 0.0
    %4777 = vmatprep.subr.mxu0 0.0
    %4778 = vmatpush1.msra.mxu0 0.0
    %4779 = vmatprep.subr.mxu0 0.0
    %4780 = vmatpush1.msra.mxu0 0.0
    %4781 = vmatprep.subr.mxu0 0.0
    %4782 = vmatpush1.msra.mxu0 0.0
    %4783 = vmatprep.mubr.f32.mxu0 0.0
    %4784 = vmatmul.mubr.f32.gmra.mrb[0].mxu0 %v4717
    %v4785 = vpop.f32.mrb[0].mxu0
    %v4786 = vadd.f32 0.0, %v4785
    %v4787 = vpop.f32.mrb[0].mxu0
    %4788 = vdwg.mxu0
    %v4789 = vadd.f32 %v4703, %v4786
    %v4790 = vld [vmem:[%s2260] sm:$0xff]
    %v4791 = vld [vmem:[%s2260 + $0x8] sm:$0xff]
    %v4792 = vld [vmem:[%s2260 + $0x10] sm:$0xff]
    %v4793 = vld [vmem:[%s2260 + $0x18] sm:$0xff]
    %v4794 = vld [vmem:[%s2260 + $0x20] sm:$0xff]
    %v4795 = vld [vmem:[%s2260 + $0x28] sm:$0xff]
    %v4796 = vld [vmem:[%s2260 + $0x30] sm:$0xff]
    %v4797 = vld [vmem:[%s2260 + $0x38] sm:$0xff]
    %v4798 = vld [vmem:[%s2260 + $0x40] sm:$0xff]
    %v4799 = vld [vmem:[%s2260 + $0x48] sm:$0xff]
    %v4800 = vrot.slane %v4539, 3
    %v4801 = vsel %vm2030, %v4800, 0
    %4803 = vmatprep.subr.mxu0 0.0
    %4804 = vmatpush1.msra.mxu0 %v4790
    %4805 = vmatprep.subr.mxu0 0.0
    %4806 = vmatpush1.msra.mxu0 %v4791
    %4807 = vmatprep.subr.mxu0 0.0
    %4808 = vmatpush1.msra.mxu0 %v4792
    %4809 = vmatprep.subr.mxu0 0.0
    %4810 = vmatpush1.msra.mxu0 %v4793
    %4811 = vmatprep.subr.mxu0 0.0
    %4812 = vmatpush1.msra.mxu0 %v4794
    %4813 = vmatprep.subr.mxu0 0.0
    %4814 = vmatpush1.msra.mxu0 %v4795
    %4815 = vmatprep.subr.mxu0 0.0
    %4816 = vmatpush1.msra.mxu0 %v4796
    %4817 = vmatprep.subr.mxu0 0.0
    %4818 = vmatpush1.msra.mxu0 %v4797
    %4819 = vmatprep.subr.mxu0 0.0
    %4820 = vmatpush1.msra.mxu0 %v4798
    %4821 = vmatprep.subr.mxu0 0.0
    %4822 = vmatpush1.msra.mxu0 %v4799
    %4823 = vmatprep.subr.mxu0 0.0
    %4824 = vmatpush1.msra.mxu0 0.0
    %4825 = vmatprep.subr.mxu0 0.0
    %4826 = vmatpush1.msra.mxu0 0.0
    %4827 = vmatprep.subr.mxu0 0.0
    %4828 = vmatpush1.msra.mxu0 0.0
    %4829 = vmatprep.subr.mxu0 0.0
    %4830 = vmatpush1.msra.mxu0 0.0
    %4831 = vmatprep.subr.mxu0 0.0
    %4832 = vmatpush1.msra.mxu0 0.0
    %4833 = vmatprep.subr.mxu0 0.0
    %4834 = vmatpush1.msra.mxu0 0.0
    %4835 = vmatprep.subr.mxu0 0.0
    %4836 = vmatpush1.msra.mxu0 0.0
    %4837 = vmatprep.subr.mxu0 0.0
    %4838 = vmatpush1.msra.mxu0 0.0
    %4839 = vmatprep.subr.mxu0 0.0
    %4840 = vmatpush1.msra.mxu0 0.0
    %4841 = vmatprep.subr.mxu0 0.0
    %4842 = vmatpush1.msra.mxu0 0.0
    %4843 = vmatprep.subr.mxu0 0.0
    %4844 = vmatpush1.msra.mxu0 0.0
    %4845 = vmatprep.subr.mxu0 0.0
    %4846 = vmatpush1.msra.mxu0 0.0
    %4847 = vmatprep.subr.mxu0 0.0
    %4848 = vmatpush1.msra.mxu0 0.0
    %4849 = vmatprep.subr.mxu0 0.0
    %4850 = vmatpush1.msra.mxu0 0.0
    %4851 = vmatprep.subr.mxu0 0.0
    %4852 = vmatpush1.msra.mxu0 0.0
    %4853 = vmatprep.subr.mxu0 0.0
    %4854 = vmatpush1.msra.mxu0 0.0
    %4855 = vmatprep.subr.mxu0 0.0
    %4856 = vmatpush1.msra.mxu0 0.0
    %4857 = vmatprep.subr.mxu0 0.0
    %4858 = vmatpush1.msra.mxu0 0.0
    %4859 = vmatprep.subr.mxu0 0.0
    %4860 = vmatpush1.msra.mxu0 0.0
    %4861 = vmatprep.subr.mxu0 0.0
    %4862 = vmatpush1.msra.mxu0 0.0
    %4863 = vmatprep.subr.mxu0 0.0
    %4864 = vmatpush1.msra.mxu0 0.0
    %4865 = vmatprep.subr.mxu0 0.0
    %4866 = vmatpush1.msra.mxu0 0.0
    %4867 = vmatprep.mubr.f32.mxu0 0.0
    %4868 = vmatmul.mubr.f32.gmra.mrb[0].mxu0 %v4801
    %v4869 = vpop.f32.mrb[0].mxu0
    %v4870 = vadd.f32 0.0, %v4869
    %v4871 = vpop.f32.mrb[0].mxu0
    %4872 = vdwg.mxu0
    %v4873 = vadd.f32 %v4789, %v4870
    %v4874 = vld [vmem:[%s2345] sm:$0xff]
    %v4875 = vld [vmem:[%s2345 + $0x8] sm:$0xff]
    %v4876 = vld [vmem:[%s2345 + $0x10] sm:$0xff]
    %v4877 = vld [vmem:[%s2345 + $0x18] sm:$0xff]
    %v4878 = vld [vmem:[%s2345 + $0x20] sm:$0xff]
    %v4879 = vld [vmem:[%s2345 + $0x28] sm:$0xff]
    %v4880 = vld [vmem:[%s2345 + $0x30] sm:$0xff]
    %v4881 = vld [vmem:[%s2345 + $0x38] sm:$0xff]
    %v4882 = vld [vmem:[%s2345 + $0x40] sm:$0xff]
    %v4883 = vld [vmem:[%s2345 + $0x48] sm:$0xff]
    %v4884 = vrot.slane %v4539, 4
    %v4885 = vsel %vm2030, %v4884, 0
    %4887 = vmatprep.subr.mxu0 0.0
    %4888 = vmatpush1.msra.mxu0 %v4874
    %4889 = vmatprep.subr.mxu0 0.0
    %4890 = vmatpush1.msra.mxu0 %v4875
    %4891 = vmatprep.subr.mxu0 0.0
    %4892 = vmatpush1.msra.mxu0 %v4876
    %4893 = vmatprep.subr.mxu0 0.0
    %4894 = vmatpush1.msra.mxu0 %v4877
    %4895 = vmatprep.subr.mxu0 0.0
    %4896 = vmatpush1.msra.mxu0 %v4878
    %4897 = vmatprep.subr.mxu0 0.0
    %4898 = vmatpush1.msra.mxu0 %v4879
    %4899 = vmatprep.subr.mxu0 0.0
    %4900 = vmatpush1.msra.mxu0 %v4880
    %4901 = vmatprep.subr.mxu0 0.0
    %4902 = vmatpush1.msra.mxu0 %v4881
    %4903 = vmatprep.subr.mxu0 0.0
    %4904 = vmatpush1.msra.mxu0 %v4882
    %4905 = vmatprep.subr.mxu0 0.0
    %4906 = vmatpush1.msra.mxu0 %v4883
    %4907 = vmatprep.subr.mxu0 0.0
    %4908 = vmatpush1.msra.mxu0 0.0
    %4909 = vmatprep.subr.mxu0 0.0
    %4910 = vmatpush1.msra.mxu0 0.0
    %4911 = vmatprep.subr.mxu0 0.0
    %4912 = vmatpush1.msra.mxu0 0.0
    %4913 = vmatprep.subr.mxu0 0.0
    %4914 = vmatpush1.msra.mxu0 0.0
    %4915 = vmatprep.subr.mxu0 0.0
    %4916 = vmatpush1.msra.mxu0 0.0
    %4917 = vmatprep.subr.mxu0 0.0
    %4918 = vmatpush1.msra.mxu0 0.0
    %4919 = vmatprep.subr.mxu0 0.0
    %4920 = vmatpush1.msra.mxu0 0.0
    %4921 = vmatprep.subr.mxu0 0.0
    %4922 = vmatpush1.msra.mxu0 0.0
    %4923 = vmatprep.subr.mxu0 0.0
    %4924 = vmatpush1.msra.mxu0 0.0
    %4925 = vmatprep.subr.mxu0 0.0
    %4926 = vmatpush1.msra.mxu0 0.0
    %4927 = vmatprep.subr.mxu0 0.0
    %4928 = vmatpush1.msra.mxu0 0.0
    %4929 = vmatprep.subr.mxu0 0.0
    %4930 = vmatpush1.msra.mxu0 0.0
    %4931 = vmatprep.subr.mxu0 0.0
    %4932 = vmatpush1.msra.mxu0 0.0
    %4933 = vmatprep.subr.mxu0 0.0
    %4934 = vmatpush1.msra.mxu0 0.0
    %4935 = vmatprep.subr.mxu0 0.0
    %4936 = vmatpush1.msra.mxu0 0.0
    %4937 = vmatprep.subr.mxu0 0.0
    %4938 = vmatpush1.msra.mxu0 0.0
    %4939 = vmatprep.subr.mxu0 0.0
    %4940 = vmatpush1.msra.mxu0 0.0
    %4941 = vmatprep.subr.mxu0 0.0
    %4942 = vmatpush1.msra.mxu0 0.0
    %4943 = vmatprep.subr.mxu0 0.0
    %4944 = vmatpush1.msra.mxu0 0.0
    %4945 = vmatprep.subr.mxu0 0.0
    %4946 = vmatpush1.msra.mxu0 0.0
    %4947 = vmatprep.subr.mxu0 0.0
    %4948 = vmatpush1.msra.mxu0 0.0
    %4949 = vmatprep.subr.mxu0 0.0
    %4950 = vmatpush1.msra.mxu0 0.0
    %4951 = vmatprep.mubr.f32.mxu0 0.0
    %4952 = vmatmul.mubr.f32.gmra.mrb[0].mxu0 %v4885
    %v4953 = vpop.f32.mrb[0].mxu0
    %v4954 = vadd.f32 0.0, %v4953
    %v4955 = vpop.f32.mrb[0].mxu0
    %4956 = vdwg.mxu0
    %v4957 = vadd.f32 %v4873, %v4954
    %v4958 = vld [vmem:[%s6] sm:$0x1]
    %v4959 = vadd.f32 %v4957, %v4958
    %v4960 = vmax.f32 %v4959, 0.0
    %v4961 = vld [vmem:[%s15] sm:$0xff]
    %v4962 = vld [vmem:[%s15 + $0x8] sm:$0xff]
    %v4963 = vld [vmem:[%s15 + $0x10] sm:$0xff]
    %v4964 = vld [vmem:[%s15 + $0x18] sm:$0xff]
    %v4965 = vld [vmem:[%s15 + $0x20] sm:$0xff]
    %v4966 = vld [vmem:[%s15 + $0x28] sm:$0xff]
    %v4967 = vld [vmem:[%s15 + $0x30] sm:$0xff]
    %v4968 = vld [vmem:[%s15 + $0x38] sm:$0xff]
    %v4969 = vld [vmem:[%s15 + $0x40] sm:$0xff]
    %v4970 = vld [vmem:[%s15 + $0x48] sm:$0xff]
    %v4971 = vld [vmem:[%s15 + $0x50] sm:$0xff]
    %v4972 = vld [vmem:[%s15 + $0x58] sm:$0xff]
    %v4973 = vld [vmem:[%s15 + $0x60] sm:$0xff]
    %v4974 = vld [vmem:[%s15 + $0x68] sm:$0xff]
    %v4975 = vld [vmem:[%s15 + $0x70] sm:$0xff]
    %v4976 = vld [vmem:[%s16] sm:$0x1]
    %v4978 = vsel %vm2449, %v4960, 0
    %4980 = vmatprep.subr.mxu0 0.0
    %4981 = vmatpush1.msra.mxu0 %v4961
    %4982 = vmatprep.subr.mxu0 0.0
    %4983 = vmatpush1.msra.mxu0 %v4962
    %4984 = vmatprep.subr.mxu0 0.0
    %4985 = vmatpush1.msra.mxu0 %v4963
    %4986 = vmatprep.subr.mxu0 0.0
    %4987 = vmatpush1.msra.mxu0 %v4964
    %4988 = vmatprep.subr.mxu0 0.0
    %4989 = vmatpush1.msra.mxu0 %v4965
    %4990 = vmatprep.subr.mxu0 0.0
    %4991 = vmatpush1.msra.mxu0 %v4966
    %4992 = vmatprep.subr.mxu0 0.0
    %4993 = vmatpush1.msra.mxu0 %v4967
    %4994 = vmatprep.subr.mxu0 0.0
    %4995 = vmatpush1.msra.mxu0 %v4968
    %4996 = vmatprep.subr.mxu0 0.0
    %4997 = vmatpush1.msra.mxu0 %v4969
    %4998 = vmatprep.subr.mxu0 0.0
    %4999 = vmatpush1.msra.mxu0 %v4970
    %5000 = vmatprep.subr.mxu0 0.0
    %5001 = vmatpush1.msra.mxu0 %v4971
    %5002 = vmatprep.subr.mxu0 0.0
    %5003 = vmatpush1.msra.mxu0 %v4972
    %5004 = vmatprep.subr.mxu0 0.0
    %5005 = vmatpush1.msra.mxu0 %v4973
    %5006 = vmatprep.subr.mxu0 0.0
    %5007 = vmatpush1.msra.mxu0 %v4974
    %5008 = vmatprep.subr.mxu0 0.0
    %5009 = vmatpush1.msra.mxu0 %v4975
    %5010 = vmatprep.subr.mxu0 0.0
    %5011 = vmatpush1.msra.mxu0 0.0
    %5012 = vmatprep.subr.mxu0 0.0
    %5013 = vmatpush1.msra.mxu0 0.0
    %5014 = vmatprep.subr.mxu0 0.0
    %5015 = vmatpush1.msra.mxu0 0.0
    %5016 = vmatprep.subr.mxu0 0.0
    %5017 = vmatpush1.msra.mxu0 0.0
    %5018 = vmatprep.subr.mxu0 0.0
    %5019 = vmatpush1.msra.mxu0 0.0
    %5020 = vmatprep.subr.mxu0 0.0
    %5021 = vmatpush1.msra.mxu0 0.0
    %5022 = vmatprep.subr.mxu0 0.0
    %5023 = vmatpush1.msra.mxu0 0.0
    %5024 = vmatprep.subr.mxu0 0.0
    %5025 = vmatpush1.msra.mxu0 0.0
    %5026 = vmatprep.subr.mxu0 0.0
    %5027 = vmatpush1.msra.mxu0 0.0
    %5028 = vmatprep.subr.mxu0 0.0
    %5029 = vmatpush1.msra.mxu0 0.0
    %5030 = vmatprep.subr.mxu0 0.0
    %5031 = vmatpush1.msra.mxu0 0.0
    %5032 = vmatprep.subr.mxu0 0.0
    %5033 = vmatpush1.msra.mxu0 0.0
    %5034 = vmatprep.subr.mxu0 0.0
    %5035 = vmatpush1.msra.mxu0 0.0
    %5036 = vmatprep.subr.mxu0 0.0
    %5037 = vmatpush1.msra.mxu0 0.0
    %5038 = vmatprep.subr.mxu0 0.0
    %5039 = vmatpush1.msra.mxu0 0.0
    %5040 = vmatprep.subr.mxu0 0.0
    %5041 = vmatpush1.msra.mxu0 0.0
    %5042 = vmatprep.subr.mxu0 0.0
    %5043 = vmatpush1.msra.mxu0 0.0
    %5044 = vmatprep.mubr.f32.mxu0 0.0
    %5045 = vmatmul.mubr.f32.gmra.mrb[0].mxu0 %v4978
    %v5046 = vpop.f32.mrb[0].mxu0
    %v5047 = vadd.f32 %v4976, %v5046
    %v5048 = vpop.f32.mrb[0].mxu0
    %5049 = vdwg.mxu0
    %v5050 = vmax.f32 %v5047, 0.0
    %v5051 = vld [vmem:[%s17] sm:$0xff]
    %v5052 = vld [vmem:[%s17 + $0x8] sm:$0xff]
    %v5053 = vld [vmem:[%s17 + $0x10] sm:$0xff]
    %v5054 = vld [vmem:[%s17 + $0x18] sm:$0xff]
    %v5055 = vld [vmem:[%s17 + $0x20] sm:$0xff]
    %v5056 = vld [vmem:[%s17 + $0x28] sm:$0xff]
    %v5057 = vld [vmem:[%s17 + $0x30] sm:$0xff]
    %v5058 = vld [vmem:[%s17 + $0x38] sm:$0xff]
    %v5059 = vld [vmem:[%s17 + $0x40] sm:$0xff]
    %v5060 = vld [vmem:[%s17 + $0x48] sm:$0xff]
    %v5061 = vld [vmem:[%s17 + $0x50] sm:$0xf]
    %v5062 = vld [vmem:[%s18] sm:$0x1]
    %v5064 = vsel %vm1117, %v5050, 0
    %v5067 = vsel %vm544, %v5061, 0
    %5069 = vmatprep.subr.mxu0 0.0
    %5070 = vmatpush1.msra.mxu0 %v5051
    %5071 = vmatprep.subr.mxu0 0.0
    %5072 = vmatpush1.msra.mxu0 %v5052
    %5073 = vmatprep.subr.mxu0 0.0
    %5074 = vmatpush1.msra.mxu0 %v5053
    %5075 = vmatprep.subr.mxu0 0.0
    %5076 = vmatpush1.msra.mxu0 %v5054
    %5077 = vmatprep.subr.mxu0 0.0
    %5078 = vmatpush1.msra.mxu0 %v5055
    %5079 = vmatprep.subr.mxu0 0.0
    %5080 = vmatpush1.msra.mxu0 %v5056
    %5081 = vmatprep.subr.mxu0 0.0
    %5082 = vmatpush1.msra.mxu0 %v5057
    %5083 = vmatprep.subr.mxu0 0.0
    %5084 = vmatpush1.msra.mxu0 %v5058
    %5085 = vmatprep.subr.mxu0 0.0
    %5086 = vmatpush1.msra.mxu0 %v5059
    %5087 = vmatprep.subr.mxu0 0.0
    %5088 = vmatpush1.msra.mxu0 %v5060
    %5089 = vmatprep.subr.mxu0 0.0
    %5090 = vmatpush1.msra.mxu0 %v5067
    %5091 = vmatprep.subr.mxu0 0.0
    %5092 = vmatpush1.msra.mxu0 0.0
    %5093 = vmatprep.subr.mxu0 0.0
    %5094 = vmatpush1.msra.mxu0 0.0
    %5095 = vmatprep.subr.mxu0 0.0
    %5096 = vmatpush1.msra.mxu0 0.0
    %5097 = vmatprep.subr.mxu0 0.0
    %5098 = vmatpush1.msra.mxu0 0.0
    %5099 = vmatprep.subr.mxu0 0.0
    %5100 = vmatpush1.msra.mxu0 0.0
    %5101 = vmatprep.subr.mxu0 0.0
    %5102 = vmatpush1.msra.mxu0 0.0
    %5103 = vmatprep.subr.mxu0 0.0
    %5104 = vmatpush1.msra.mxu0 0.0
    %5105 = vmatprep.subr.mxu0 0.0
    %5106 = vmatpush1.msra.mxu0 0.0
    %5107 = vmatprep.subr.mxu0 0.0
    %5108 = vmatpush1.msra.mxu0 0.0
    %5109 = vmatprep.subr.mxu0 0.0
    %5110 = vmatpush1.msra.mxu0 0.0
    %5111 = vmatprep.subr.mxu0 0.0
    %5112 = vmatpush1.msra.mxu0 0.0
    %5113 = vmatprep.subr.mxu0 0.0
    %5114 = vmatpush1.msra.mxu0 0.0
    %5115 = vmatprep.subr.mxu0 0.0
    %5116 = vmatpush1.msra.mxu0 0.0
    %5117 = vmatprep.subr.mxu0 0.0
    %5118 = vmatpush1.msra.mxu0 0.0
    %5119 = vmatprep.subr.mxu0 0.0
    %5120 = vmatpush1.msra.mxu0 0.0
    %5121 = vmatprep.subr.mxu0 0.0
    %5122 = vmatpush1.msra.mxu0 0.0
    %5123 = vmatprep.subr.mxu0 0.0
    %5124 = vmatpush1.msra.mxu0 0.0
    %5125 = vmatprep.subr.mxu0 0.0
    %5126 = vmatpush1.msra.mxu0 0.0
    %5127 = vmatprep.subr.mxu0 0.0
    %5128 = vmatpush1.msra.mxu0 0.0
    %5129 = vmatprep.subr.mxu0 0.0
    %5130 = vmatpush1.msra.mxu0 0.0
    %5131 = vmatprep.subr.mxu0 0.0
    %5132 = vmatpush1.msra.mxu0 0.0
    %5133 = vmatprep.mubr.f32.mxu0 0.0
    %5134 = vmatmul.mubr.f32.gmra.mrb[0].mxu0 %v5064
    %v5135 = vpop.f32.mrb[0].mxu0
    %v5136 = vadd.f32 %v5062, %v5135
    %v5137 = vpop.f32.mrb[0].mxu0
    %5138 = vdwg.mxu0
    %s5139 = scalar_lea.vmem [#allocation2], 1
    %5140 = vst [vmem:[%s5139] sm:$0x1] %v5136
    // Predicated region
    $region78: #{lenet5_forward.1} parent=1 // pred_check
      _
    $region79: #{lenet5_forward.1} parent=1 // pred_check_branch
      %5142 = sbr.rel (0) target = $region81
    $region80: #{lenet5_forward.1} parent=1 // pred_region
      %s5144 = ssub.s32 32, 32
      %5145 = vsyncadd [#allocation3], %s5144
      %s5146 = sshll.u32 [#allocation2], 4
      %s5147 = int_to_ptr.vmem [resolvable:$true] %s5146
      %5152 = dma.vmem_to_hbm [thread:$0]  %s5147, 32, %s19, [#allocation3], 16, 16, 1
    $region81: #{lenet5_forward.1} parent=1 // pred_fallthru
      _
    // Predicated region
    $region82: #{lenet5_forward.1} parent=1 // pred_check
      _
    $region83: #{lenet5_forward.1} parent=1 // pred_check_branch
      %5154 = sbr.rel (0) target = $region85
    $region84: #{lenet5_forward.1} parent=1 // pred_region
      %5155 = dma.done [#allocation3], 32
    $region85: #{lenet5_forward.1} parent=1 // pred_fallthru
      _
    %5156 = vsyncpa [#allocation3], 1

</llo_original>
